<compile_context>
chip_gen: v6e
topology: v6e:2x2x1
jax: 0.10.0
libtpu: 0.0.40
codegen_flags: <defaults>
</compile_context>

<pallas_src>
import functools

import jax
import jax.numpy as jnp
from jax import lax
from jax.experimental import pallas as pl
from jax.experimental.pallas import tpu as pltpu

# ----------------------------- configuration -------------------------------
D_ENC = 32          # encoder feature dim
D_SPEC = 16         # spectrogram frame dim
D_PRE = 32          # pre-net hidden  (module: 256)
D_LSTM = 32         # LSTM hidden     (module: 1024)
D_POST = 32         # post-net hidden (module: 512)
MAX_DEC_LEN = 8     # decoder steps   (module: 1000)
KSIZE = 5           # post-net conv kernel size
BN_EPS = 1e-5
POST_ACTIVATE = (True, True, True, True, False)   # BN+tanh on first 4 conv layers

WEIGHT_DTYPE = jnp.float32
# TODO(synk): at module scale (d_lstm=1024) on v7x (64 MiB VMEM) set WEIGHT_DTYPE=bfloat16 so the
#             resident decoder weight set (~70 MB f32 -> ~35 MB bf16) fits; on v5e/v6e (128 MiB,
#             int8 MXU) int8 weights + per-channel scales would quarter weight-streaming traffic.
# TODO(synk): nn.Dropout layers are treated as eval-mode (identity) in this kernel.
# TODO(synk): BatchNorm1d uses eval-mode running statistics (mean=0, var=1, gamma=1, beta=0)
#             folded into per-channel scale/shift.


def _const_spec(a):
    """BlockSpec covering the whole array with a grid-invariant index_map (VMEM resident)."""
    n = a.ndim
    return pl.BlockSpec(a.shape, lambda *idx: (0,) * n)


# ------------------------- decoder (whole recurrence) -----------------------
def _decoder_kernel(
    # inputs (all whole-array VMEM residents, single-buffered: no grid => no pipelining)
    teach_ref, enc_ref,
    pre_w1_ref, pre_b1_ref, pre_w2_ref, pre_b2_ref,
    attn_w_ref, attn_b_ref,
    wih1_ref, whh1_ref, b1_ref,
    wih2_ref, whh2_ref, b2_ref,
    out_w_ref, out_b_ref,
    h_init_ref, c_init_ref,
    # outputs (whole [T, ...] slabs, written step-by-step in VMEM, one HBM writeback)
    frame_ref, attn_out_ref,
    *, teacher_forcing,
):
    f32 = jnp.float32
    T, B, d_spec = teach_ref.shape
    d_lstm = whh1_ref.shape[0]
    d_pre = pre_w1_ref.shape[1]
    d_enc = enc_ref.shape[-1]

    sig = jax.nn.sigmoid
    gate_acts = (sig, sig, jnp.tanh, sig)     # PyTorch LSTM gate order: i, f, g, o

    def lstm_cell(parts, h, c, wih_ref, whh_ref, b_ref):
        """Per-gate structuring bounds the live set to ~B x d_lstm instead of B x 4*d_lstm."""
        acts = []
        for g in range(4):
            lo, hi = g * d_lstm, (g + 1) * d_lstm
            z = jnp.dot(h, whh_ref[:, lo:hi], preferred_element_type=f32) + b_ref[:, lo:hi]
            for x, rlo, rhi in parts:
                z = z + jnp.dot(x, wih_ref[rlo:rhi, lo:hi], preferred_element_type=f32)
            # TODO(synk): on v6e/v7x cast z to bf16 before the nonlinearity (EUP bf16 path);
            #             keep f32 on v5e.
            acts.append(gate_acts[g](z))
        i_g, f_g, g_g, o_g = acts
        c_new = f_g * c + i_g * g_g
        h_new = o_g * jnp.tanh(c_new)
        return h_new, c_new

    enc = enc_ref[...]                         # [B, L, d_enc], d_enc lane-dense, VMEM resident

    def step(t, carry):
        h0, h1, c0, c1, prev = carry

        # -------------- input frame selection (static branch) ----------------
        if teacher_forcing:
            x = teach_ref[t]                   # [B, d_spec]
        else:
            x = prev                           # previous out_frame

        # -------------- pre-net: (Linear -> ReLU -> Dropout) x 2 -------------
        p = jnp.maximum(
            jnp.dot(x, pre_w1_ref[...], preferred_element_type=f32) + pre_b1_ref[...], 0.0)
        p = jnp.maximum(
            jnp.dot(p, pre_w2_ref[...], preferred_element_type=f32) + pre_b2_ref[...], 0.0)

        # -------------- DotAttention on previous LSTM state -------------------
        # Linear(4*d_lstm, d_enc) applied to cat(h0, h1, c0, c1) as 4 split matmuls.
        proj = (jnp.dot(h0, attn_w_ref[0], preferred_element_type=f32)
                + jnp.dot(h1, attn_w_ref[1], preferred_element_type=f32)
                + jnp.dot(c0, attn_w_ref[2], preferred_element_type=f32)
                + jnp.dot(c1, attn_w_ref[3], preferred_element_type=f32)
                + attn_b_ref[...])             # [B, d_enc]
        # scores/context on VPU (broadcast-multiply) + XLU (reduce): the q=1 MXU einsums
        # would be single-row weight pushes at <3% utilization.
        scores = jnp.sum(proj[:, None, :] * enc, axis=-1)          # [B, L]
        m = jnp.max(scores, axis=-1, keepdims=True)
        e = jnp.exp(scores - m)
        attn = e / jnp.sum(e, axis=-1, keepdims=True)              # exact softmax over L
        context = jnp.sum(attn[:, :, None] * enc, axis=1)          # [B, d_enc]

        # -------------- 2-layer LSTM cell (per-gate fused projections) --------
        h0n, c0n = lstm_cell([(p, 0, d_pre), (context, d_pre, d_pre + d_enc)],
                             h0, c0, wih1_ref, whh1_ref, b1_ref)
        h1n, c1n = lstm_cell([(h0n, 0, d_lstm)],
                             h1, c1, wih2_ref, whh2_ref, b2_ref)

        # -------------- fused spec-frame + stop-logit head ---------------------
        out = (jnp.dot(h1n, out_w_ref[:d_lstm, :], preferred_element_type=f32)
               + jnp.dot(context, out_w_ref[d_lstm:, :], preferred_element_type=f32)
               + out_b_ref[...])               # [B, d_spec + 1]

        frame_ref[pl.ds(t, 1)] = out[None]     # VMEM-resident slab, single HBM writeback
        attn_out_ref[pl.ds(t, 1)] = attn[None]
        return h0n, h1n, c0n, c1n, out[:, :d_spec]

    carry0 = (h_init_ref[0], h_init_ref[1], c_init_ref[0], c_init_ref[1],
              jnp.zeros((B, d_spec), f32))
    lax.fori_loop(0, T, step, carry0)


def _run_decoder(params, teach, enc_b, h_init, c_init, teacher_forcing):
    T, B, _ = teach.shape
    L = enc_b.shape[1]
    kernel = functools.partial(_decoder_kernel, teacher_forcing=teacher_forcing)
    # No grid: the whole recurrence is one kernel invocation. Default specs place every
    # operand and output fully in VMEM exactly once (single-buffered by construction).
    # TODO(synk): if the serving batch allows, pad B to 16-256 sublanes per call; MXU M-rows
    #             are nearly free when the step cost is weight-streaming bound.
    return pl.pallas_call(
        kernel,
        out_shape=(jax.ShapeDtypeStruct((T, B, D_SPEC + 1), jnp.float32),
                   jax.ShapeDtypeStruct((T, B, L), jnp.float32)),
    )(teach, enc_b,
      params['pre_w1'], params['pre_b1'], params['pre_w2'], params['pre_b2'],
      params['attn_w'], params['attn_b'],
      params['wih1'], params['whh1'], params['b1'],
      params['wih2'], params['whh2'], params['b2'],
      params['out_w'], params['out_b'],
      h_init, c_init)


# --------------------------- fused post-net kernel ---------------------------
def _postnet_kernel(x_ref,
                    w0, b0, s0, t0, w1, b1, s1, t1, w2, b2, s2, t2,
                    w3, b3, s3, t3, w4, b4, s4, t4,
                    out_ref):
    f32 = jnp.float32
    x = x_ref[0]                                              # [T, C_in]  (one batch element)
    tlen = x.shape[0]
    pad = KSIZE // 2
    ws = (w0, w1, w2, w3, w4)
    bs = (b0, b1, b2, b3, b4)
    scales = (s0, s1, s2, s3, s4)
    shifts = (t0, t1, t2, t3, t4)
    for li in range(5):
        w = ws[li][...]                                       # [K*C_in, C_out] pre-reshaped
        c_in = w.shape[0] // KSIZE
        zpad = jnp.zeros((pad, c_in), f32)
        xp = jnp.concatenate([zpad, x, zpad], axis=0)         # [T + K - 1, C_in] halo in VMEM
        # im2col once per layer, then a single M=T matmul per layer (MXU-efficient).
        cols = jnp.concatenate([xp[k:k + tlen, :] for k in range(KSIZE)], axis=1)
        y = jnp.dot(cols, w, preferred_element_type=f32) + bs[li][...]
        y = y * scales[li][...] + shifts[li][...]             # eval-mode BatchNorm (folded)
        if POST_ACTIVATE[li]:
            y = jnp.tanh(y)
        x = y
    out_ref[0] = x


def _postnet(params, x_btc):
    """x_btc: [B, T, d_spec] channels-last; all 5 conv layers in one kernel, grid over batch."""
    B, T, _ = x_btc.shape
    in_arrays = [x_btc]
    in_specs = [pl.BlockSpec((1, T, D_SPEC), lambda b: (b, 0, 0))]
    for layer in params['post']:
        for name in ('w', 'b', 'scale', 'shift'):
            a = layer[name]
            in_arrays.append(a)
            in_specs.append(_const_spec(a))
    # TODO(synk): at module scale on v7x, single-buffer these constant weight specs
    #             (pl.Buffered(1)) and store them in bf16; optionally add a T-tile grid axis
    #             (with K-1 halo rows) for finer megacore granularity.
    return pl.pallas_call(
        _postnet_kernel,
        out_shape=jax.ShapeDtypeStruct((B, T, D_SPEC), jnp.float32),
        grid_spec=pltpu.PrefetchScalarGridSpec(
            num_scalar_prefetch=0,
            grid=(B,),
            in_specs=in_specs,
            out_specs=pl.BlockSpec((1, T, D_SPEC), lambda b: (b, 0, 0))),
        compiler_params=pltpu.CompilerParams(
            dimension_semantics=("parallel",),
            vmem_limit_bytes=48 * 1024 * 1024),
    )(*in_arrays)


# --------------------------------- forward ----------------------------------
def forward(params, enc_out, s_true, teacher_forcing):
    """enc_out: [Lt_max, B, d_enc]; s_true: [St_max, B, d_spec]."""
    L, B, _ = enc_out.shape
    st_max = s_true.shape[0]
    B_pad = max(8, ((B + 7) // 8) * 8)       # fill full sublanes inside the kernel

    enc_b = jnp.transpose(enc_out, (1, 0, 2))                 # [B, L, d_enc], d_enc lane-dense
    enc_b = jnp.pad(enc_b, ((0, B_pad - B), (0, 0), (0, 0)))

    # teacher frame used at step t: 0 -> zero; 1 <= t < St_max -> S_true[t-1]; else zero
    teach = jnp.zeros((MAX_DEC_LEN, B_pad, D_SPEC), jnp.float32)
    if teacher_forcing:
        n = min(st_max, MAX_DEC_LEN) - 1
        if n > 0:
            s_pad = jnp.pad(s_true[:n], ((0, 0), (0, B_pad - B), (0, 0)))
            teach = teach.at[1:n + 1].set(s_pad)

    h_init = jnp.tile(params['h_init'], (1, B_pad, 1))
    c_init = jnp.tile(params['c_init'], (1, B_pad, 1))

    frames, attn = _run_decoder(params, teach, enc_b, h_init, c_init, teacher_forcing)
    # frames: [T, B_pad, d_spec + 1]  (spec frame || stop logit), attn: [T, B_pad, L]
    s_before = frames[:, :B, :D_SPEC]                         # [T, B, d_spec]
    stop_logits = frames[:, :B, D_SPEC]                       # [T, B]
    attn_weights = jnp.transpose(attn[:, :B, :], (0, 2, 1))   # [T, L, B]

    post_out = _postnet(params, jnp.transpose(s_before, (1, 0, 2)))   # [B, T, d_spec]
    s_after = s_before + jnp.transpose(post_out, (1, 0, 2))
    return s_before, s_after, stop_logits, attn_weights


# ----------------------------- parameter init -------------------------------
def init_params(key):
    def dense(k, shape, scale=0.1):
        return scale * jax.random.normal(k, shape, jnp.float32)

    keys = jax.random.split(key, 40)
    ki = iter(keys)
    p = {}
    # pre-net
    p['pre_w1'] = dense(next(ki), (D_SPEC, D_PRE))
    p['pre_b1'] = dense(next(ki), (1, D_PRE))
    p['pre_w2'] = dense(next(ki), (D_PRE, D_PRE))
    p['pre_b2'] = dense(next(ki), (1, D_PRE))
    # DotAttention: Linear(4*d_lstm, d_enc), split over [h0, h1, c0, c1]
    p['attn_w'] = dense(next(ki), (4, D_LSTM, D_ENC)).astype(WEIGHT_DTYPE)
    p['attn_b'] = dense(next(ki), (1, D_ENC))
    # 2-layer LSTM, fused gate weights [d_in, 4*d_lstm] in PyTorch order (i, f, g, o);
    # bias = b_ih + b_hh
    p['wih1'] = dense(next(ki), (D_PRE + D_ENC, 4 * D_LSTM)).astype(WEIGHT_DTYPE)
    p['whh1'] = dense(next(ki), (D_LSTM, 4 * D_LSTM)).astype(WEIGHT_DTYPE)
    p['b1'] = dense(next(ki), (1, 4 * D_LSTM))
    p['wih2'] = dense(next(ki), (D_LSTM, 4 * D_LSTM)).astype(WEIGHT_DTYPE)
    p['whh2'] = dense(next(ki), (D_LSTM, 4 * D_LSTM)).astype(WEIGHT_DTYPE)
    p['b2'] = dense(next(ki), (1, 4 * D_LSTM))
    # to_spec_frame and to_stop_logit folded into one head on cat(lstm_output, context)
    p['out_w'] = dense(next(ki), (D_LSTM + D_ENC, D_SPEC + 1)).astype(WEIGHT_DTYPE)
    p['out_b'] = dense(next(ki), (1, D_SPEC + 1))
    # initial LSTM state parameters (module initializes to zeros)
    p['h_init'] = jnp.zeros((2, 1, D_LSTM), jnp.float32)
    p['c_init'] = jnp.zeros((2, 1, D_LSTM), jnp.float32)
    # post-net: 5 conv1d layers, weights pre-reshaped to im2col layout [K*C_in, C_out];
    # BN folded into per-channel scale/shift (eval mode)
    chans = [D_SPEC, D_POST, D_POST, D_POST, D_POST, D_SPEC]
    post = []
    for i in range(5):
        cin, cout = chans[i], chans[i + 1]
        w = dense(next(ki), (KSIZE, cin, cout)).reshape(KSIZE * cin, cout)
        b = dense(next(ki), (1, cout))
        if i < 4:
            gamma = jnp.ones((1, cout), jnp.float32)
            beta = jnp.zeros((1, cout), jnp.float32)
            mean = jnp.zeros((1, cout), jnp.float32)
            var = jnp.ones((1, cout), jnp.float32)
            scale = gamma / jnp.sqrt(var + BN_EPS)
            shift = beta - mean * scale
        else:  # last layer has no BN / tanh
            scale = jnp.ones((1, cout), jnp.float32)
            shift = jnp.zeros((1, cout), jnp.float32)
        post.append({'w': w, 'b': b, 'scale': scale, 'shift': shift})
    p['post'] = post
    return p


# ----------------------------------- main ------------------------------------
if __name__ == "__main__":
    key = jax.random.PRNGKey(0)
    B = 2
    LT_MAX = 8      # encoder length
    ST_MAX = 8      # ground-truth spectrogram length

    k_enc, k_s, k_p = jax.random.split(key, 3)
    enc_out = jax.random.normal(k_enc, (LT_MAX, B, D_ENC), jnp.float32)
    s_true = jax.random.normal(k_s, (ST_MAX, B, D_SPEC), jnp.float32)
    params = init_params(k_p)

    fwd = jax.jit(forward, static_argnums=(3,))
    s_before, s_after, stop_logits, attn_weights = fwd(params, enc_out, s_true, True)
    jax.block_until_ready((s_before, s_after, stop_logits, attn_weights))

    assert s_before.shape == (MAX_DEC_LEN, B, D_SPEC)
    assert s_after.shape == (MAX_DEC_LEN, B, D_SPEC)
    assert stop_logits.shape == (MAX_DEC_LEN, B)
    assert attn_weights.shape == (MAX_DEC_LEN, LT_MAX, B)
    assert bool(jnp.all(jnp.isfinite(s_after)))
    assert bool(jnp.all(jnp.isfinite(attn_weights)))
    print("KERNEL_OK")
</pallas_src>

<mosaic_0001>
module attributes {stable_mosaic.version = 11 : i64} {
  func.func @_decoder_kernel(%arg0: memref<8x8x16xf32, #tpu.memory_space<vmem>>, %arg1: memref<8x8x32xf32, #tpu.memory_space<vmem>>, %arg2: memref<16x32xf32, #tpu.memory_space<vmem>>, %arg3: memref<1x32xf32, #tpu.memory_space<vmem>>, %arg4: memref<32x32xf32, #tpu.memory_space<vmem>>, %arg5: memref<1x32xf32, #tpu.memory_space<vmem>>, %arg6: memref<4x32x32xf32, #tpu.memory_space<vmem>>, %arg7: memref<1x32xf32, #tpu.memory_space<vmem>>, %arg8: memref<64x128xf32, #tpu.memory_space<vmem>>, %arg9: memref<32x128xf32, #tpu.memory_space<vmem>>, %arg10: memref<1x128xf32, #tpu.memory_space<vmem>>, %arg11: memref<32x128xf32, #tpu.memory_space<vmem>>, %arg12: memref<32x128xf32, #tpu.memory_space<vmem>>, %arg13: memref<1x128xf32, #tpu.memory_space<vmem>>, %arg14: memref<64x17xf32, #tpu.memory_space<vmem>>, %arg15: memref<1x17xf32, #tpu.memory_space<vmem>>, %arg16: memref<2x8x32xf32, #tpu.memory_space<vmem>>, %arg17: memref<2x8x32xf32, #tpu.memory_space<vmem>>, %arg18: memref<8x8x17xf32, #tpu.memory_space<vmem>>, %arg19: memref<8x8x8xf32, #tpu.memory_space<vmem>>) attributes {dimension_semantics = [], scalar_prefetch = 0 : i64, scratch_operands = 0 : i64, tpu.core_type = #tpu.core_type<tc>} {
    %c0 = arith.constant 0 : index
    %c0_0 = arith.constant 0 : index
    %c0_1 = arith.constant 0 : index
    %0 = vector.load %arg1[%c0, %c0_0, %c0_1] : memref<8x8x32xf32, #tpu.memory_space<vmem>>, vector<8x8x32xf32>
    %c0_2 = arith.constant 0 : index
    %c0_3 = arith.constant 0 : index
    %c0_4 = arith.constant 0 : index
    %1 = vector.load %arg16[%c0_2, %c0_3, %c0_4] : memref<2x8x32xf32, #tpu.memory_space<vmem>>, vector<1x8x32xf32>
    %2 = vector.shape_cast %1 : vector<1x8x32xf32> to vector<8x32xf32>
    %c1 = arith.constant 1 : index
    %c0_5 = arith.constant 0 : index
    %c0_6 = arith.constant 0 : index
    %3 = vector.load %arg16[%c1, %c0_5, %c0_6] : memref<2x8x32xf32, #tpu.memory_space<vmem>>, vector<1x8x32xf32>
    %4 = vector.shape_cast %3 : vector<1x8x32xf32> to vector<8x32xf32>
    %c0_7 = arith.constant 0 : index
    %c0_8 = arith.constant 0 : index
    %c0_9 = arith.constant 0 : index
    %5 = vector.load %arg17[%c0_7, %c0_8, %c0_9] : memref<2x8x32xf32, #tpu.memory_space<vmem>>, vector<1x8x32xf32>
    %6 = vector.shape_cast %5 : vector<1x8x32xf32> to vector<8x32xf32>
    %c1_10 = arith.constant 1 : index
    %c0_11 = arith.constant 0 : index
    %c0_12 = arith.constant 0 : index
    %7 = vector.load %arg17[%c1_10, %c0_11, %c0_12] : memref<2x8x32xf32, #tpu.memory_space<vmem>>, vector<1x8x32xf32>
    %8 = vector.shape_cast %7 : vector<1x8x32xf32> to vector<8x32xf32>
    %c0_i32 = arith.constant 0 : i32
    %c8_i32 = arith.constant 8 : i32
    %9 = arith.addi %c0_i32, %c8_i32 : i32
    %c1_i32 = arith.constant 1 : i32
    %10:4 = scf.for %arg20 = %c0_i32 to %9 step %c1_i32 iter_args(%arg21 = %2, %arg22 = %4, %arg23 = %6, %arg24 = %8) -> (vector<8x32xf32>, vector<8x32xf32>, vector<8x32xf32>, vector<8x32xf32>)  : i32 {
      %11 = arith.index_cast %arg20 : i32 to index
      %c0_14 = arith.constant 0 : index
      %c0_15 = arith.constant 0 : index
      %12 = vector.load %arg0[%11, %c0_14, %c0_15] : memref<8x8x16xf32, #tpu.memory_space<vmem>>, vector<1x8x16xf32>
      %13 = vector.shape_cast %12 : vector<1x8x16xf32> to vector<8x16xf32>
      %c0_16 = arith.constant 0 : index
      %c0_17 = arith.constant 0 : index
      %14 = vector.load %arg2[%c0_16, %c0_17] : memref<16x32xf32, #tpu.memory_space<vmem>>, vector<16x32xf32>
      %cst = arith.constant dense<0.000000e+00> : vector<8x32xf32>
      %15 = tpu.matmul %13, %14, %cst {dimension_numbers = #tpu.dot_dimension_numbers<[1], [0], [0], [1], [0, 0, 1, 1], [], []>} : vector<8x16xf32>, vector<16x32xf32>, vector<8x32xf32> -> vector<8x32xf32>
      %c0_18 = arith.constant 0 : index
      %c0_19 = arith.constant 0 : index
      %16 = vector.load %arg3[%c0_18, %c0_19] : memref<1x32xf32, #tpu.memory_space<vmem>>, vector<1x32xf32>
      %17 = vector.broadcast %16 : vector<1x32xf32> to vector<8x32xf32>
      %18 = arith.addf %15, %17 : vector<8x32xf32>
      %cst_20 = arith.constant 0.000000e+00 : f32
      %19 = vector.broadcast %cst_20 : f32 to vector<8x32xf32>
      %20 = arith.maximumf %18, %19 : vector<8x32xf32>
      %c0_21 = arith.constant 0 : index
      %c0_22 = arith.constant 0 : index
      %21 = vector.load %arg4[%c0_21, %c0_22] : memref<32x32xf32, #tpu.memory_space<vmem>>, vector<32x32xf32>
      %cst_23 = arith.constant dense<0.000000e+00> : vector<8x32xf32>
      %22 = tpu.matmul %20, %21, %cst_23 {dimension_numbers = #tpu.dot_dimension_numbers<[1], [0], [0], [1], [0, 0, 1, 1], [], []>} : vector<8x32xf32>, vector<32x32xf32>, vector<8x32xf32> -> vector<8x32xf32>
      %c0_24 = arith.constant 0 : index
      %c0_25 = arith.constant 0 : index
      %23 = vector.load %arg5[%c0_24, %c0_25] : memref<1x32xf32, #tpu.memory_space<vmem>>, vector<1x32xf32>
      %24 = vector.broadcast %23 : vector<1x32xf32> to vector<8x32xf32>
      %25 = arith.addf %22, %24 : vector<8x32xf32>
      %cst_26 = arith.constant 0.000000e+00 : f32
      %26 = vector.broadcast %cst_26 : f32 to vector<8x32xf32>
      %27 = arith.maximumf %25, %26 : vector<8x32xf32>
      %c0_27 = arith.constant 0 : index
      %c0_28 = arith.constant 0 : index
      %c0_29 = arith.constant 0 : index
      %28 = vector.load %arg6[%c0_27, %c0_28, %c0_29] : memref<4x32x32xf32, #tpu.memory_space<vmem>>, vector<1x32x32xf32>
      %29 = vector.shape_cast %28 : vector<1x32x32xf32> to vector<32x32xf32>
      %cst_30 = arith.constant dense<0.000000e+00> : vector<8x32xf32>
      %30 = tpu.matmul %arg21, %29, %cst_30 {dimension_numbers = #tpu.dot_dimension_numbers<[1], [0], [0], [1], [0, 0, 1, 1], [], []>} : vector<8x32xf32>, vector<32x32xf32>, vector<8x32xf32> -> vector<8x32xf32>
      %c1_31 = arith.constant 1 : index
      %c0_32 = arith.constant 0 : index
      %c0_33 = arith.constant 0 : index
      %31 = vector.load %arg6[%c1_31, %c0_32, %c0_33] : memref<4x32x32xf32, #tpu.memory_space<vmem>>, vector<1x32x32xf32>
      %32 = vector.shape_cast %31 : vector<1x32x32xf32> to vector<32x32xf32>
      %cst_34 = arith.constant dense<0.000000e+00> : vector<8x32xf32>
      %33 = tpu.matmul %arg22, %32, %cst_34 {dimension_numbers = #tpu.dot_dimension_numbers<[1], [0], [0], [1], [0, 0, 1, 1], [], []>} : vector<8x32xf32>, vector<32x32xf32>, vector<8x32xf32> -> vector<8x32xf32>
      %34 = arith.addf %30, %33 : vector<8x32xf32>
      %c2 = arith.constant 2 : index
      %c0_35 = arith.constant 0 : index
      %c0_36 = arith.constant 0 : index
      %35 = vector.load %arg6[%c2, %c0_35, %c0_36] : memref<4x32x32xf32, #tpu.memory_space<vmem>>, vector<1x32x32xf32>
      %36 = vector.shape_cast %35 : vector<1x32x32xf32> to vector<32x32xf32>
      %cst_37 = arith.constant dense<0.000000e+00> : vector<8x32xf32>
      %37 = tpu.matmul %arg23, %36, %cst_37 {dimension_numbers = #tpu.dot_dimension_numbers<[1], [0], [0], [1], [0, 0, 1, 1], [], []>} : vector<8x32xf32>, vector<32x32xf32>, vector<8x32xf32> -> vector<8x32xf32>
      %38 = arith.addf %34, %37 : vector<8x32xf32>
      %c3 = arith.constant 3 : index
      %c0_38 = arith.constant 0 : index
      %c0_39 = arith.constant 0 : index
      %39 = vector.load %arg6[%c3, %c0_38, %c0_39] : memref<4x32x32xf32, #tpu.memory_space<vmem>>, vector<1x32x32xf32>
      %40 = vector.shape_cast %39 : vector<1x32x32xf32> to vector<32x32xf32>
      %cst_40 = arith.constant dense<0.000000e+00> : vector<8x32xf32>
      %41 = tpu.matmul %arg24, %40, %cst_40 {dimension_numbers = #tpu.dot_dimension_numbers<[1], [0], [0], [1], [0, 0, 1, 1], [], []>} : vector<8x32xf32>, vector<32x32xf32>, vector<8x32xf32> -> vector<8x32xf32>
      %42 = arith.addf %38, %41 : vector<8x32xf32>
      %c0_41 = arith.constant 0 : index
      %c0_42 = arith.constant 0 : index
      %43 = vector.load %arg7[%c0_41, %c0_42] : memref<1x32xf32, #tpu.memory_space<vmem>>, vector<1x32xf32>
      %44 = vector.broadcast %43 : vector<1x32xf32> to vector<8x32xf32>
      %45 = arith.addf %42, %44 : vector<8x32xf32>
      %46 = vector.shape_cast %45 : vector<8x32xf32> to vector<8x1x32xf32>
      %47 = vector.broadcast %46 : vector<8x1x32xf32> to vector<8x8x32xf32>
      %48 = arith.mulf %47, %0 : vector<8x8x32xf32>
      %cst_43 = arith.constant dense<0.000000e+00> : vector<8x8xf32>
      %49 = vector.multi_reduction <add>, %48, %cst_43 [2] : vector<8x8x32xf32> to vector<8x8xf32>
      %cst_44 = arith.constant dense<0xFF800000> : vector<8xf32>
      %50 = vector.multi_reduction <maximumf>, %49, %cst_44 [1] : vector<8x8xf32> to vector<8xf32>
      %51 = vector.shape_cast %50 : vector<8xf32> to vector<8x1xf32>
      %52 = vector.broadcast %51 : vector<8x1xf32> to vector<8x8xf32>
      %53 = arith.subf %49, %52 : vector<8x8xf32>
      %54 = math.exp %53 : vector<8x8xf32>
      %cst_45 = arith.constant dense<0.000000e+00> : vector<8xf32>
      %55 = vector.multi_reduction <add>, %54, %cst_45 [1] : vector<8x8xf32> to vector<8xf32>
      %56 = vector.shape_cast %55 : vector<8xf32> to vector<8x1xf32>
      %57 = vector.broadcast %56 : vector<8x1xf32> to vector<8x8xf32>
      %58 = arith.divf %54, %57 : vector<8x8xf32>
      %59 = vector.shape_cast %58 : vector<8x8xf32> to vector<8x8x1xf32>
      %60 = vector.broadcast %59 : vector<8x8x1xf32> to vector<8x8x32xf32>
      %61 = arith.mulf %60, %0 : vector<8x8x32xf32>
      %cst_46 = arith.constant dense<0.000000e+00> : vector<8x32xf32>
      %62 = vector.multi_reduction <add>, %61, %cst_46 [1] : vector<8x8x32xf32> to vector<8x32xf32>
      %c0_47 = arith.constant 0 : index
      %c0_48 = arith.constant 0 : index
      %63 = vector.load %arg9[%c0_47, %c0_48] : memref<32x128xf32, #tpu.memory_space<vmem>>, vector<32x32xf32>
      %cst_49 = arith.constant dense<0.000000e+00> : vector<8x32xf32>
      %64 = tpu.matmul %arg21, %63, %cst_49 {dimension_numbers = #tpu.dot_dimension_numbers<[1], [0], [0], [1], [0, 0, 1, 1], [], []>} : vector<8x32xf32>, vector<32x32xf32>, vector<8x32xf32> -> vector<8x32xf32>
      %c0_50 = arith.constant 0 : index
      %c0_51 = arith.constant 0 : index
      %65 = vector.load %arg10[%c0_50, %c0_51] : memref<1x128xf32, #tpu.memory_space<vmem>>, vector<1x32xf32>
      %66 = vector.broadcast %65 : vector<1x32xf32> to vector<8x32xf32>
      %67 = arith.addf %64, %66 : vector<8x32xf32>
      %c0_52 = arith.constant 0 : index
      %c0_53 = arith.constant 0 : index
      %68 = vector.load %arg8[%c0_52, %c0_53] : memref<64x128xf32, #tpu.memory_space<vmem>>, vector<32x32xf32>
      %cst_54 = arith.constant dense<0.000000e+00> : vector<8x32xf32>
      %69 = tpu.matmul %27, %68, %cst_54 {dimension_numbers = #tpu.dot_dimension_numbers<[1], [0], [0], [1], [0, 0, 1, 1], [], []>} : vector<8x32xf32>, vector<32x32xf32>, vector<8x32xf32> -> vector<8x32xf32>
      %70 = arith.addf %67, %69 : vector<8x32xf32>
      %c32 = arith.constant 32 : index
      %c0_55 = arith.constant 0 : index
      %71 = vector.load %arg8[%c32, %c0_55] : memref<64x128xf32, #tpu.memory_space<vmem>>, vector<32x32xf32>
      %cst_56 = arith.constant dense<0.000000e+00> : vector<8x32xf32>
      %72 = tpu.matmul %62, %71, %cst_56 {dimension_numbers = #tpu.dot_dimension_numbers<[1], [0], [0], [1], [0, 0, 1, 1], [], []>} : vector<8x32xf32>, vector<32x32xf32>, vector<8x32xf32> -> vector<8x32xf32>
      %73 = arith.addf %70, %72 : vector<8x32xf32>
      %74 = arith.negf %73 : vector<8x32xf32>
      %75 = math.exp %74 : vector<8x32xf32>
      %cst_57 = arith.constant 1.000000e+00 : f32
      %76 = vector.broadcast %cst_57 : f32 to vector<8x32xf32>
      %77 = arith.addf %76, %75 : vector<8x32xf32>
      %78 = arith.divf %76, %77 : vector<8x32xf32>
      %c0_58 = arith.constant 0 : index
      %c32_59 = arith.constant 32 : index
      %79 = vector.load %arg9[%c0_58, %c32_59] : memref<32x128xf32, #tpu.memory_space<vmem>>, vector<32x32xf32>
      %cst_60 = arith.constant dense<0.000000e+00> : vector<8x32xf32>
      %80 = tpu.matmul %arg21, %79, %cst_60 {dimension_numbers = #tpu.dot_dimension_numbers<[1], [0], [0], [1], [0, 0, 1, 1], [], []>} : vector<8x32xf32>, vector<32x32xf32>, vector<8x32xf32> -> vector<8x32xf32>
      %c0_61 = arith.constant 0 : index
      %c32_62 = arith.constant 32 : index
      %81 = vector.load %arg10[%c0_61, %c32_62] : memref<1x128xf32, #tpu.memory_space<vmem>>, vector<1x32xf32>
      %82 = vector.broadcast %81 : vector<1x32xf32> to vector<8x32xf32>
      %83 = arith.addf %80, %82 : vector<8x32xf32>
      %c0_63 = arith.constant 0 : index
      %c32_64 = arith.constant 32 : index
      %84 = vector.load %arg8[%c0_63, %c32_64] : memref<64x128xf32, #tpu.memory_space<vmem>>, vector<32x32xf32>
      %cst_65 = arith.constant dense<0.000000e+00> : vector<8x32xf32>
      %85 = tpu.matmul %27, %84, %cst_65 {dimension_numbers = #tpu.dot_dimension_numbers<[1], [0], [0], [1], [0, 0, 1, 1], [], []>} : vector<8x32xf32>, vector<32x32xf32>, vector<8x32xf32> -> vector<8x32xf32>
      %86 = arith.addf %83, %85 : vector<8x32xf32>
      %c32_66 = arith.constant 32 : index
      %c32_67 = arith.constant 32 : index
      %87 = vector.load %arg8[%c32_66, %c32_67] : memref<64x128xf32, #tpu.memory_space<vmem>>, vector<32x32xf32>
      %cst_68 = arith.constant dense<0.000000e+00> : vector<8x32xf32>
      %88 = tpu.matmul %62, %87, %cst_68 {dimension_numbers = #tpu.dot_dimension_numbers<[1], [0], [0], [1], [0, 0, 1, 1], [], []>} : vector<8x32xf32>, vector<32x32xf32>, vector<8x32xf32> -> vector<8x32xf32>
      %89 = arith.addf %86, %88 : vector<8x32xf32>
      %90 = arith.negf %89 : vector<8x32xf32>
      %91 = math.exp %90 : vector<8x32xf32>
      %cst_69 = arith.constant 1.000000e+00 : f32
      %92 = vector.broadcast %cst_69 : f32 to vector<8x32xf32>
      %93 = arith.addf %92, %91 : vector<8x32xf32>
      %94 = arith.divf %92, %93 : vector<8x32xf32>
      %c0_70 = arith.constant 0 : index
      %c64 = arith.constant 64 : index
      %95 = vector.load %arg9[%c0_70, %c64] : memref<32x128xf32, #tpu.memory_space<vmem>>, vector<32x32xf32>
      %cst_71 = arith.constant dense<0.000000e+00> : vector<8x32xf32>
      %96 = tpu.matmul %arg21, %95, %cst_71 {dimension_numbers = #tpu.dot_dimension_numbers<[1], [0], [0], [1], [0, 0, 1, 1], [], []>} : vector<8x32xf32>, vector<32x32xf32>, vector<8x32xf32> -> vector<8x32xf32>
      %c0_72 = arith.constant 0 : index
      %c64_73 = arith.constant 64 : index
      %97 = vector.load %arg10[%c0_72, %c64_73] : memref<1x128xf32, #tpu.memory_space<vmem>>, vector<1x32xf32>
      %98 = vector.broadcast %97 : vector<1x32xf32> to vector<8x32xf32>
      %99 = arith.addf %96, %98 : vector<8x32xf32>
      %c0_74 = arith.constant 0 : index
      %c64_75 = arith.constant 64 : index
      %100 = vector.load %arg8[%c0_74, %c64_75] : memref<64x128xf32, #tpu.memory_space<vmem>>, vector<32x32xf32>
      %cst_76 = arith.constant dense<0.000000e+00> : vector<8x32xf32>
      %101 = tpu.matmul %27, %100, %cst_76 {dimension_numbers = #tpu.dot_dimension_numbers<[1], [0], [0], [1], [0, 0, 1, 1], [], []>} : vector<8x32xf32>, vector<32x32xf32>, vector<8x32xf32> -> vector<8x32xf32>
      %102 = arith.addf %99, %101 : vector<8x32xf32>
      %c32_77 = arith.constant 32 : index
      %c64_78 = arith.constant 64 : index
      %103 = vector.load %arg8[%c32_77, %c64_78] : memref<64x128xf32, #tpu.memory_space<vmem>>, vector<32x32xf32>
      %cst_79 = arith.constant dense<0.000000e+00> : vector<8x32xf32>
      %104 = tpu.matmul %62, %103, %cst_79 {dimension_numbers = #tpu.dot_dimension_numbers<[1], [0], [0], [1], [0, 0, 1, 1], [], []>} : vector<8x32xf32>, vector<32x32xf32>, vector<8x32xf32> -> vector<8x32xf32>
      %105 = arith.addf %102, %104 : vector<8x32xf32>
      %106 = math.tanh %105 : vector<8x32xf32>
      %c0_80 = arith.constant 0 : index
      %c96 = arith.constant 96 : index
      %107 = vector.load %arg9[%c0_80, %c96] : memref<32x128xf32, #tpu.memory_space<vmem>>, vector<32x32xf32>
      %cst_81 = arith.constant dense<0.000000e+00> : vector<8x32xf32>
      %108 = tpu.matmul %arg21, %107, %cst_81 {dimension_numbers = #tpu.dot_dimension_numbers<[1], [0], [0], [1], [0, 0, 1, 1], [], []>} : vector<8x32xf32>, vector<32x32xf32>, vector<8x32xf32> -> vector<8x32xf32>
      %c0_82 = arith.constant 0 : index
      %c96_83 = arith.constant 96 : index
      %109 = vector.load %arg10[%c0_82, %c96_83] : memref<1x128xf32, #tpu.memory_space<vmem>>, vector<1x32xf32>
      %110 = vector.broadcast %109 : vector<1x32xf32> to vector<8x32xf32>
      %111 = arith.addf %108, %110 : vector<8x32xf32>
      %c0_84 = arith.constant 0 : index
      %c96_85 = arith.constant 96 : index
      %112 = vector.load %arg8[%c0_84, %c96_85] : memref<64x128xf32, #tpu.memory_space<vmem>>, vector<32x32xf32>
      %cst_86 = arith.constant dense<0.000000e+00> : vector<8x32xf32>
      %113 = tpu.matmul %27, %112, %cst_86 {dimension_numbers = #tpu.dot_dimension_numbers<[1], [0], [0], [1], [0, 0, 1, 1], [], []>} : vector<8x32xf32>, vector<32x32xf32>, vector<8x32xf32> -> vector<8x32xf32>
      %114 = arith.addf %111, %113 : vector<8x32xf32>
      %c32_87 = arith.constant 32 : index
      %c96_88 = arith.constant 96 : index
      %115 = vector.load %arg8[%c32_87, %c96_88] : memref<64x128xf32, #tpu.memory_space<vmem>>, vector<32x32xf32>
      %cst_89 = arith.constant dense<0.000000e+00> : vector<8x32xf32>
      %116 = tpu.matmul %62, %115, %cst_89 {dimension_numbers = #tpu.dot_dimension_numbers<[1], [0], [0], [1], [0, 0, 1, 1], [], []>} : vector<8x32xf32>, vector<32x32xf32>, vector<8x32xf32> -> vector<8x32xf32>
      %117 = arith.addf %114, %116 : vector<8x32xf32>
      %118 = arith.negf %117 : vector<8x32xf32>
      %119 = math.exp %118 : vector<8x32xf32>
      %cst_90 = arith.constant 1.000000e+00 : f32
      %120 = vector.broadcast %cst_90 : f32 to vector<8x32xf32>
      %121 = arith.addf %120, %119 : vector<8x32xf32>
      %122 = arith.divf %120, %121 : vector<8x32xf32>
      %123 = arith.mulf %94, %arg23 : vector<8x32xf32>
      %124 = arith.mulf %78, %106 : vector<8x32xf32>
      %125 = arith.addf %123, %124 : vector<8x32xf32>
      %126 = math.tanh %125 : vector<8x32xf32>
      %127 = arith.mulf %122, %126 : vector<8x32xf32>
      %c0_91 = arith.constant 0 : index
      %c0_92 = arith.constant 0 : index
      %128 = vector.load %arg12[%c0_91, %c0_92] : memref<32x128xf32, #tpu.memory_space<vmem>>, vector<32x32xf32>
      %cst_93 = arith.constant dense<0.000000e+00> : vector<8x32xf32>
      %129 = tpu.matmul %arg22, %128, %cst_93 {dimension_numbers = #tpu.dot_dimension_numbers<[1], [0], [0], [1], [0, 0, 1, 1], [], []>} : vector<8x32xf32>, vector<32x32xf32>, vector<8x32xf32> -> vector<8x32xf32>
      %c0_94 = arith.constant 0 : index
      %c0_95 = arith.constant 0 : index
      %130 = vector.load %arg13[%c0_94, %c0_95] : memref<1x128xf32, #tpu.memory_space<vmem>>, vector<1x32xf32>
      %131 = vector.broadcast %130 : vector<1x32xf32> to vector<8x32xf32>
      %132 = arith.addf %129, %131 : vector<8x32xf32>
      %c0_96 = arith.constant 0 : index
      %c0_97 = arith.constant 0 : index
      %133 = vector.load %arg11[%c0_96, %c0_97] : memref<32x128xf32, #tpu.memory_space<vmem>>, vector<32x32xf32>
      %cst_98 = arith.constant dense<0.000000e+00> : vector<8x32xf32>
      %134 = tpu.matmul %127, %133, %cst_98 {dimension_numbers = #tpu.dot_dimension_numbers<[1], [0], [0], [1], [0, 0, 1, 1], [], []>} : vector<8x32xf32>, vector<32x32xf32>, vector<8x32xf32> -> vector<8x32xf32>
      %135 = arith.addf %132, %134 : vector<8x32xf32>
      %136 = arith.negf %135 : vector<8x32xf32>
      %137 = math.exp %136 : vector<8x32xf32>
      %cst_99 = arith.constant 1.000000e+00 : f32
      %138 = vector.broadcast %cst_99 : f32 to vector<8x32xf32>
      %139 = arith.addf %138, %137 : vector<8x32xf32>
      %140 = arith.divf %138, %139 : vector<8x32xf32>
      %c0_100 = arith.constant 0 : index
      %c32_101 = arith.constant 32 : index
      %141 = vector.load %arg12[%c0_100, %c32_101] : memref<32x128xf32, #tpu.memory_space<vmem>>, vector<32x32xf32>
      %cst_102 = arith.constant dense<0.000000e+00> : vector<8x32xf32>
      %142 = tpu.matmul %arg22, %141, %cst_102 {dimension_numbers = #tpu.dot_dimension_numbers<[1], [0], [0], [1], [0, 0, 1, 1], [], []>} : vector<8x32xf32>, vector<32x32xf32>, vector<8x32xf32> -> vector<8x32xf32>
      %c0_103 = arith.constant 0 : index
      %c32_104 = arith.constant 32 : index
      %143 = vector.load %arg13[%c0_103, %c32_104] : memref<1x128xf32, #tpu.memory_space<vmem>>, vector<1x32xf32>
      %144 = vector.broadcast %143 : vector<1x32xf32> to vector<8x32xf32>
      %145 = arith.addf %142, %144 : vector<8x32xf32>
      %c0_105 = arith.constant 0 : index
      %c32_106 = arith.constant 32 : index
      %146 = vector.load %arg11[%c0_105, %c32_106] : memref<32x128xf32, #tpu.memory_space<vmem>>, vector<32x32xf32>
      %cst_107 = arith.constant dense<0.000000e+00> : vector<8x32xf32>
      %147 = tpu.matmul %127, %146, %cst_107 {dimension_numbers = #tpu.dot_dimension_numbers<[1], [0], [0], [1], [0, 0, 1, 1], [], []>} : vector<8x32xf32>, vector<32x32xf32>, vector<8x32xf32> -> vector<8x32xf32>
      %148 = arith.addf %145, %147 : vector<8x32xf32>
      %149 = arith.negf %148 : vector<8x32xf32>
      %150 = math.exp %149 : vector<8x32xf32>
      %cst_108 = arith.constant 1.000000e+00 : f32
      %151 = vector.broadcast %cst_108 : f32 to vector<8x32xf32>
      %152 = arith.addf %151, %150 : vector<8x32xf32>
      %153 = arith.divf %151, %152 : vector<8x32xf32>
      %c0_109 = arith.constant 0 : index
      %c64_110 = arith.constant 64 : index
      %154 = vector.load %arg12[%c0_109, %c64_110] : memref<32x128xf32, #tpu.memory_space<vmem>>, vector<32x32xf32>
      %cst_111 = arith.constant dense<0.000000e+00> : vector<8x32xf32>
      %155 = tpu.matmul %arg22, %154, %cst_111 {dimension_numbers = #tpu.dot_dimension_numbers<[1], [0], [0], [1], [0, 0, 1, 1], [], []>} : vector<8x32xf32>, vector<32x32xf32>, vector<8x32xf32> -> vector<8x32xf32>
      %c0_112 = arith.constant 0 : index
      %c64_113 = arith.constant 64 : index
      %156 = vector.load %arg13[%c0_112, %c64_113] : memref<1x128xf32, #tpu.memory_space<vmem>>, vector<1x32xf32>
      %157 = vector.broadcast %156 : vector<1x32xf32> to vector<8x32xf32>
      %158 = arith.addf %155, %157 : vector<8x32xf32>
      %c0_114 = arith.constant 0 : index
      %c64_115 = arith.constant 64 : index
      %159 = vector.load %arg11[%c0_114, %c64_115] : memref<32x128xf32, #tpu.memory_space<vmem>>, vector<32x32xf32>
      %cst_116 = arith.constant dense<0.000000e+00> : vector<8x32xf32>
      %160 = tpu.matmul %127, %159, %cst_116 {dimension_numbers = #tpu.dot_dimension_numbers<[1], [0], [0], [1], [0, 0, 1, 1], [], []>} : vector<8x32xf32>, vector<32x32xf32>, vector<8x32xf32> -> vector<8x32xf32>
      %161 = arith.addf %158, %160 : vector<8x32xf32>
      %162 = math.tanh %161 : vector<8x32xf32>
      %c0_117 = arith.constant 0 : index
      %c96_118 = arith.constant 96 : index
      %163 = vector.load %arg12[%c0_117, %c96_118] : memref<32x128xf32, #tpu.memory_space<vmem>>, vector<32x32xf32>
      %cst_119 = arith.constant dense<0.000000e+00> : vector<8x32xf32>
      %164 = tpu.matmul %arg22, %163, %cst_119 {dimension_numbers = #tpu.dot_dimension_numbers<[1], [0], [0], [1], [0, 0, 1, 1], [], []>} : vector<8x32xf32>, vector<32x32xf32>, vector<8x32xf32> -> vector<8x32xf32>
      %c0_120 = arith.constant 0 : index
      %c96_121 = arith.constant 96 : index
      %165 = vector.load %arg13[%c0_120, %c96_121] : memref<1x128xf32, #tpu.memory_space<vmem>>, vector<1x32xf32>
      %166 = vector.broadcast %165 : vector<1x32xf32> to vector<8x32xf32>
      %167 = arith.addf %164, %166 : vector<8x32xf32>
      %c0_122 = arith.constant 0 : index
      %c96_123 = arith.constant 96 : index
      %168 = vector.load %arg11[%c0_122, %c96_123] : memref<32x128xf32, #tpu.memory_space<vmem>>, vector<32x32xf32>
      %cst_124 = arith.constant dense<0.000000e+00> : vector<8x32xf32>
      %169 = tpu.matmul %127, %168, %cst_124 {dimension_numbers = #tpu.dot_dimension_numbers<[1], [0], [0], [1], [0, 0, 1, 1], [], []>} : vector<8x32xf32>, vector<32x32xf32>, vector<8x32xf32> -> vector<8x32xf32>
      %170 = arith.addf %167, %169 : vector<8x32xf32>
      %171 = arith.negf %170 : vector<8x32xf32>
      %172 = math.exp %171 : vector<8x32xf32>
      %cst_125 = arith.constant 1.000000e+00 : f32
      %173 = vector.broadcast %cst_125 : f32 to vector<8x32xf32>
      %174 = arith.addf %173, %172 : vector<8x32xf32>
      %175 = arith.divf %173, %174 : vector<8x32xf32>
      %176 = arith.mulf %153, %arg24 : vector<8x32xf32>
      %177 = arith.mulf %140, %162 : vector<8x32xf32>
      %178 = arith.addf %176, %177 : vector<8x32xf32>
      %179 = math.tanh %178 : vector<8x32xf32>
      %180 = arith.mulf %175, %179 : vector<8x32xf32>
      %c0_126 = arith.constant 0 : index
      %c0_127 = arith.constant 0 : index
      %181 = vector.load %arg14[%c0_126, %c0_127] : memref<64x17xf32, #tpu.memory_space<vmem>>, vector<32x17xf32>
      %cst_128 = arith.constant dense<0.000000e+00> : vector<8x17xf32>
      %182 = tpu.matmul %180, %181, %cst_128 {dimension_numbers = #tpu.dot_dimension_numbers<[1], [0], [0], [1], [0, 0, 1, 1], [], []>} : vector<8x32xf32>, vector<32x17xf32>, vector<8x17xf32> -> vector<8x17xf32>
      %c32_129 = arith.constant 32 : index
      %c0_130 = arith.constant 0 : index
      %183 = vector.load %arg14[%c32_129, %c0_130] : memref<64x17xf32, #tpu.memory_space<vmem>>, vector<32x17xf32>
      %cst_131 = arith.constant dense<0.000000e+00> : vector<8x17xf32>
      %184 = tpu.matmul %62, %183, %cst_131 {dimension_numbers = #tpu.dot_dimension_numbers<[1], [0], [0], [1], [0, 0, 1, 1], [], []>} : vector<8x32xf32>, vector<32x17xf32>, vector<8x17xf32> -> vector<8x17xf32>
      %185 = arith.addf %182, %184 : vector<8x17xf32>
      %c0_132 = arith.constant 0 : index
      %c0_133 = arith.constant 0 : index
      %186 = vector.load %arg15[%c0_132, %c0_133] : memref<1x17xf32, #tpu.memory_space<vmem>>, vector<1x17xf32>
      %187 = vector.broadcast %186 : vector<1x17xf32> to vector<8x17xf32>
      %188 = arith.addf %185, %187 : vector<8x17xf32>
      %189 = vector.shape_cast %188 : vector<8x17xf32> to vector<1x8x17xf32>
      %190 = arith.index_cast %arg20 : i32 to index
      %c0_134 = arith.constant 0 : index
      %c0_135 = arith.constant 0 : index
      %191 = vector.load %arg18[%190, %c0_134, %c0_135] : memref<8x8x17xf32, #tpu.memory_space<vmem>>, vector<1x8x17xf32>
      tpu.vector_store %arg18[%190, %c0_134, %c0_135], %189 {strides = array<i32>} : memref<8x8x17xf32, #tpu.memory_space<vmem>>, vector<1x8x17xf32>,
      %192 = vector.shape_cast %58 : vector<8x8xf32> to vector<1x8x8xf32>
      %193 = arith.index_cast %arg20 : i32 to index
      %c0_136 = arith.constant 0 : index
      %c0_137 = arith.constant 0 : index
      %194 = vector.load %arg19[%193, %c0_136, %c0_137] : memref<8x8x8xf32, #tpu.memory_space<vmem>>, vector<1x8x8xf32>
      tpu.vector_store %arg19[%193, %c0_136, %c0_137], %192 {strides = array<i32>} : memref<8x8x8xf32, #tpu.memory_space<vmem>>, vector<1x8x8xf32>,
      scf.yield %127, %180, %125, %178 : vector<8x32xf32>, vector<8x32xf32>, vector<8x32xf32>, vector<8x32xf32>
    }
    %c8_i32_13 = arith.constant 8 : i32
    return
  }
}

module attributes {stable_mosaic.version = 11 : i64} {
  func.func @_postnet_kernel(%arg0: i32, %arg1: memref<1x8x16xf32, #tpu.memory_space<vmem>>, %arg2: memref<80x32xf32, #tpu.memory_space<vmem>>, %arg3: memref<1x32xf32, #tpu.memory_space<vmem>>, %arg4: memref<1x32xf32, #tpu.memory_space<vmem>>, %arg5: memref<1x32xf32, #tpu.memory_space<vmem>>, %arg6: memref<160x32xf32, #tpu.memory_space<vmem>>, %arg7: memref<1x32xf32, #tpu.memory_space<vmem>>, %arg8: memref<1x32xf32, #tpu.memory_space<vmem>>, %arg9: memref<1x32xf32, #tpu.memory_space<vmem>>, %arg10: memref<160x32xf32, #tpu.memory_space<vmem>>, %arg11: memref<1x32xf32, #tpu.memory_space<vmem>>, %arg12: memref<1x32xf32, #tpu.memory_space<vmem>>, %arg13: memref<1x32xf32, #tpu.memory_space<vmem>>, %arg14: memref<160x32xf32, #tpu.memory_space<vmem>>, %arg15: memref<1x32xf32, #tpu.memory_space<vmem>>, %arg16: memref<1x32xf32, #tpu.memory_space<vmem>>, %arg17: memref<1x32xf32, #tpu.memory_space<vmem>>, %arg18: memref<160x16xf32, #tpu.memory_space<vmem>>, %arg19: memref<1x16xf32, #tpu.memory_space<vmem>>, %arg20: memref<1x16xf32, #tpu.memory_space<vmem>>, %arg21: memref<1x16xf32, #tpu.memory_space<vmem>>, %arg22: memref<1x8x16xf32, #tpu.memory_space<vmem>>) attributes {dimension_semantics = [#tpu.dimension_semantics<parallel>], iteration_bounds = array<i64: 2>, scalar_prefetch = 0 : i64, scratch_operands = 0 : i64, tpu.core_type = #tpu.core_type<tc>, window_params = [{transform_indices = @transform_0, window_bounds = array<i64: 1, 8, 16>}, {pipeline_mode = #tpu.pipeline_mode<synchronous>, transform_indices = @transform_1, window_bounds = array<i64: 80, 32>}, {pipeline_mode = #tpu.pipeline_mode<synchronous>, transform_indices = @transform_2, window_bounds = array<i64: 1, 32>}, {pipeline_mode = #tpu.pipeline_mode<synchronous>, transform_indices = @transform_3, window_bounds = array<i64: 1, 32>}, {pipeline_mode = #tpu.pipeline_mode<synchronous>, transform_indices = @transform_4, window_bounds = array<i64: 1, 32>}, {pipeline_mode = #tpu.pipeline_mode<synchronous>, transform_indices = @transform_5, window_bounds = array<i64: 160, 32>}, {pipeline_mode = #tpu.pipeline_mode<synchronous>, transform_indices = @transform_6, window_bounds = array<i64: 1, 32>}, {pipeline_mode = #tpu.pipeline_mode<synchronous>, transform_indices = @transform_7, window_bounds = array<i64: 1, 32>}, {pipeline_mode = #tpu.pipeline_mode<synchronous>, transform_indices = @transform_8, window_bounds = array<i64: 1, 32>}, {pipeline_mode = #tpu.pipeline_mode<synchronous>, transform_indices = @transform_9, window_bounds = array<i64: 160, 32>}, {pipeline_mode = #tpu.pipeline_mode<synchronous>, transform_indices = @transform_10, window_bounds = array<i64: 1, 32>}, {pipeline_mode = #tpu.pipeline_mode<synchronous>, transform_indices = @transform_11, window_bounds = array<i64: 1, 32>}, {pipeline_mode = #tpu.pipeline_mode<synchronous>, transform_indices = @transform_12, window_bounds = array<i64: 1, 32>}, {pipeline_mode = #tpu.pipeline_mode<synchronous>, transform_indices = @transform_13, window_bounds = array<i64: 160, 32>}, {pipeline_mode = #tpu.pipeline_mode<synchronous>, transform_indices = @transform_14, window_bounds = array<i64: 1, 32>}, {pipeline_mode = #tpu.pipeline_mode<synchronous>, transform_indices = @transform_15, window_bounds = array<i64: 1, 32>}, {pipeline_mode = #tpu.pipeline_mode<synchronous>, transform_indices = @transform_16, window_bounds = array<i64: 1, 32>}, {pipeline_mode = #tpu.pipeline_mode<synchronous>, transform_indices = @transform_17, window_bounds = array<i64: 160, 16>}, {pipeline_mode = #tpu.pipeline_mode<synchronous>, transform_indices = @transform_18, window_bounds = array<i64: 1, 16>}, {pipeline_mode = #tpu.pipeline_mode<synchronous>, transform_indices = @transform_19, window_bounds = array<i64: 1, 16>}, {pipeline_mode = #tpu.pipeline_mode<synchronous>, transform_indices = @transform_20, window_bounds = array<i64: 1, 16>}, {transform_indices = @transform_21, window_bounds = array<i64: 1, 8, 16>}]} {
    %c0 = arith.constant 0 : index
    %c0_0 = arith.constant 0 : index
    %c0_1 = arith.constant 0 : index
    %0 = vector.load %arg1[%c0, %c0_0, %c0_1] : memref<1x8x16xf32, #tpu.memory_space<vmem>>, vector<1x8x16xf32>
    %1 = vector.shape_cast %0 : vector<1x8x16xf32> to vector<8x16xf32>
    %c0_2 = arith.constant 0 : index
    %c0_3 = arith.constant 0 : index
    %2 = vector.load %arg2[%c0_2, %c0_3] : memref<80x32xf32, #tpu.memory_space<vmem>>, vector<80x32xf32>
    %cst = arith.constant 0.000000e+00 : f32
    %3 = vector.broadcast %cst : f32 to vector<2x16xf32>
    %4 = tpu.concatenate %3, %1, %3 in 0 : vector<2x16xf32>, vector<8x16xf32>, vector<2x16xf32> -> vector<12x16xf32>
    %5 = vector.extract_strided_slice %4 {offsets = [0, 0], sizes = [8, 16], strides = [1, 1]} : vector<12x16xf32> to vector<8x16xf32>
    %6 = vector.extract_strided_slice %4 {offsets = [1, 0], sizes = [8, 16], strides = [1, 1]} : vector<12x16xf32> to vector<8x16xf32>
    %7 = vector.extract_strided_slice %4 {offsets = [2, 0], sizes = [8, 16], strides = [1, 1]} : vector<12x16xf32> to vector<8x16xf32>
    %8 = vector.extract_strided_slice %4 {offsets = [3, 0], sizes = [8, 16], strides = [1, 1]} : vector<12x16xf32> to vector<8x16xf32>
    %9 = vector.extract_strided_slice %4 {offsets = [4, 0], sizes = [8, 16], strides = [1, 1]} : vector<12x16xf32> to vector<8x16xf32>
    %10 = tpu.concatenate %5, %6, %7, %8, %9 in 1 : vector<8x16xf32>, vector<8x16xf32>, vector<8x16xf32>, vector<8x16xf32>, vector<8x16xf32> -> vector<8x80xf32>
    %cst_4 = arith.constant dense<0.000000e+00> : vector<8x32xf32>
    %11 = tpu.matmul %10, %2, %cst_4 {dimension_numbers = #tpu.dot_dimension_numbers<[1], [0], [0], [1], [0, 0, 1, 1], [], []>} : vector<8x80xf32>, vector<80x32xf32>, vector<8x32xf32> -> vector<8x32xf32>
    %c0_5 = arith.constant 0 : index
    %c0_6 = arith.constant 0 : index
    %12 = vector.load %arg3[%c0_5, %c0_6] : memref<1x32xf32, #tpu.memory_space<vmem>>, vector<1x32xf32>
    %13 = vector.broadcast %12 : vector<1x32xf32> to vector<8x32xf32>
    %14 = arith.addf %11, %13 : vector<8x32xf32>
    %c0_7 = arith.constant 0 : index
    %c0_8 = arith.constant 0 : index
    %15 = vector.load %arg4[%c0_7, %c0_8] : memref<1x32xf32, #tpu.memory_space<vmem>>, vector<1x32xf32>
    %16 = vector.broadcast %15 : vector<1x32xf32> to vector<8x32xf32>
    %17 = arith.mulf %14, %16 : vector<8x32xf32>
    %c0_9 = arith.constant 0 : index
    %c0_10 = arith.constant 0 : index
    %18 = vector.load %arg5[%c0_9, %c0_10] : memref<1x32xf32, #tpu.memory_space<vmem>>, vector<1x32xf32>
    %19 = vector.broadcast %18 : vector<1x32xf32> to vector<8x32xf32>
    %20 = arith.addf %17, %19 : vector<8x32xf32>
    %21 = math.tanh %20 : vector<8x32xf32>
    %c0_11 = arith.constant 0 : index
    %c0_12 = arith.constant 0 : index
    %22 = vector.load %arg6[%c0_11, %c0_12] : memref<160x32xf32, #tpu.memory_space<vmem>>, vector<160x32xf32>
    %cst_13 = arith.constant 0.000000e+00 : f32
    %23 = vector.broadcast %cst_13 : f32 to vector<2x32xf32>
    %24 = tpu.concatenate %23, %21, %23 in 0 : vector<2x32xf32>, vector<8x32xf32>, vector<2x32xf32> -> vector<12x32xf32>
    %25 = vector.extract_strided_slice %24 {offsets = [0, 0], sizes = [8, 32], strides = [1, 1]} : vector<12x32xf32> to vector<8x32xf32>
    %26 = vector.extract_strided_slice %24 {offsets = [1, 0], sizes = [8, 32], strides = [1, 1]} : vector<12x32xf32> to vector<8x32xf32>
    %27 = vector.extract_strided_slice %24 {offsets = [2, 0], sizes = [8, 32], strides = [1, 1]} : vector<12x32xf32> to vector<8x32xf32>
    %28 = vector.extract_strided_slice %24 {offsets = [3, 0], sizes = [8, 32], strides = [1, 1]} : vector<12x32xf32> to vector<8x32xf32>
    %29 = vector.extract_strided_slice %24 {offsets = [4, 0], sizes = [8, 32], strides = [1, 1]} : vector<12x32xf32> to vector<8x32xf32>
    %30 = tpu.concatenate %25, %26, %27, %28, %29 in 1 : vector<8x32xf32>, vector<8x32xf32>, vector<8x32xf32>, vector<8x32xf32>, vector<8x32xf32> -> vector<8x160xf32>
    %cst_14 = arith.constant dense<0.000000e+00> : vector<8x32xf32>
    %31 = tpu.matmul %30, %22, %cst_14 {dimension_numbers = #tpu.dot_dimension_numbers<[1], [0], [0], [1], [0, 0, 1, 1], [], []>} : vector<8x160xf32>, vector<160x32xf32>, vector<8x32xf32> -> vector<8x32xf32>
    %c0_15 = arith.constant 0 : index
    %c0_16 = arith.constant 0 : index
    %32 = vector.load %arg7[%c0_15, %c0_16] : memref<1x32xf32, #tpu.memory_space<vmem>>, vector<1x32xf32>
    %33 = vector.broadcast %32 : vector<1x32xf32> to vector<8x32xf32>
    %34 = arith.addf %31, %33 : vector<8x32xf32>
    %c0_17 = arith.constant 0 : index
    %c0_18 = arith.constant 0 : index
    %35 = vector.load %arg8[%c0_17, %c0_18] : memref<1x32xf32, #tpu.memory_space<vmem>>, vector<1x32xf32>
    %36 = vector.broadcast %35 : vector<1x32xf32> to vector<8x32xf32>
    %37 = arith.mulf %34, %36 : vector<8x32xf32>
    %c0_19 = arith.constant 0 : index
    %c0_20 = arith.constant 0 : index
    %38 = vector.load %arg9[%c0_19, %c0_20] : memref<1x32xf32, #tpu.memory_space<vmem>>, vector<1x32xf32>
    %39 = vector.broadcast %38 : vector<1x32xf32> to vector<8x32xf32>
    %40 = arith.addf %37, %39 : vector<8x32xf32>
    %41 = math.tanh %40 : vector<8x32xf32>
    %c0_21 = arith.constant 0 : index
    %c0_22 = arith.constant 0 : index
    %42 = vector.load %arg10[%c0_21, %c0_22] : memref<160x32xf32, #tpu.memory_space<vmem>>, vector<160x32xf32>
    %cst_23 = arith.constant 0.000000e+00 : f32
    %43 = vector.broadcast %cst_23 : f32 to vector<2x32xf32>
    %44 = tpu.concatenate %43, %41, %43 in 0 : vector<2x32xf32>, vector<8x32xf32>, vector<2x32xf32> -> vector<12x32xf32>
    %45 = vector.extract_strided_slice %44 {offsets = [0, 0], sizes = [8, 32], strides = [1, 1]} : vector<12x32xf32> to vector<8x32xf32>
    %46 = vector.extract_strided_slice %44 {offsets = [1, 0], sizes = [8, 32], strides = [1, 1]} : vector<12x32xf32> to vector<8x32xf32>
    %47 = vector.extract_strided_slice %44 {offsets = [2, 0], sizes = [8, 32], strides = [1, 1]} : vector<12x32xf32> to vector<8x32xf32>
    %48 = vector.extract_strided_slice %44 {offsets = [3, 0], sizes = [8, 32], strides = [1, 1]} : vector<12x32xf32> to vector<8x32xf32>
    %49 = vector.extract_strided_slice %44 {offsets = [4, 0], sizes = [8, 32], strides = [1, 1]} : vector<12x32xf32> to vector<8x32xf32>
    %50 = tpu.concatenate %45, %46, %47, %48, %49 in 1 : vector<8x32xf32>, vector<8x32xf32>, vector<8x32xf32>, vector<8x32xf32>, vector<8x32xf32> -> vector<8x160xf32>
    %cst_24 = arith.constant dense<0.000000e+00> : vector<8x32xf32>
    %51 = tpu.matmul %50, %42, %cst_24 {dimension_numbers = #tpu.dot_dimension_numbers<[1], [0], [0], [1], [0, 0, 1, 1], [], []>} : vector<8x160xf32>, vector<160x32xf32>, vector<8x32xf32> -> vector<8x32xf32>
    %c0_25 = arith.constant 0 : index
    %c0_26 = arith.constant 0 : index
    %52 = vector.load %arg11[%c0_25, %c0_26] : memref<1x32xf32, #tpu.memory_space<vmem>>, vector<1x32xf32>
    %53 = vector.broadcast %52 : vector<1x32xf32> to vector<8x32xf32>
    %54 = arith.addf %51, %53 : vector<8x32xf32>
    %c0_27 = arith.constant 0 : index
    %c0_28 = arith.constant 0 : index
    %55 = vector.load %arg12[%c0_27, %c0_28] : memref<1x32xf32, #tpu.memory_space<vmem>>, vector<1x32xf32>
    %56 = vector.broadcast %55 : vector<1x32xf32> to vector<8x32xf32>
    %57 = arith.mulf %54, %56 : vector<8x32xf32>
    %c0_29 = arith.constant 0 : index
    %c0_30 = arith.constant 0 : index
    %58 = vector.load %arg13[%c0_29, %c0_30] : memref<1x32xf32, #tpu.memory_space<vmem>>, vector<1x32xf32>
    %59 = vector.broadcast %58 : vector<1x32xf32> to vector<8x32xf32>
    %60 = arith.addf %57, %59 : vector<8x32xf32>
    %61 = math.tanh %60 : vector<8x32xf32>
    %c0_31 = arith.constant 0 : index
    %c0_32 = arith.constant 0 : index
    %62 = vector.load %arg14[%c0_31, %c0_32] : memref<160x32xf32, #tpu.memory_space<vmem>>, vector<160x32xf32>
    %cst_33 = arith.constant 0.000000e+00 : f32
    %63 = vector.broadcast %cst_33 : f32 to vector<2x32xf32>
    %64 = tpu.concatenate %63, %61, %63 in 0 : vector<2x32xf32>, vector<8x32xf32>, vector<2x32xf32> -> vector<12x32xf32>
    %65 = vector.extract_strided_slice %64 {offsets = [0, 0], sizes = [8, 32], strides = [1, 1]} : vector<12x32xf32> to vector<8x32xf32>
    %66 = vector.extract_strided_slice %64 {offsets = [1, 0], sizes = [8, 32], strides = [1, 1]} : vector<12x32xf32> to vector<8x32xf32>
    %67 = vector.extract_strided_slice %64 {offsets = [2, 0], sizes = [8, 32], strides = [1, 1]} : vector<12x32xf32> to vector<8x32xf32>
    %68 = vector.extract_strided_slice %64 {offsets = [3, 0], sizes = [8, 32], strides = [1, 1]} : vector<12x32xf32> to vector<8x32xf32>
    %69 = vector.extract_strided_slice %64 {offsets = [4, 0], sizes = [8, 32], strides = [1, 1]} : vector<12x32xf32> to vector<8x32xf32>
    %70 = tpu.concatenate %65, %66, %67, %68, %69 in 1 : vector<8x32xf32>, vector<8x32xf32>, vector<8x32xf32>, vector<8x32xf32>, vector<8x32xf32> -> vector<8x160xf32>
    %cst_34 = arith.constant dense<0.000000e+00> : vector<8x32xf32>
    %71 = tpu.matmul %70, %62, %cst_34 {dimension_numbers = #tpu.dot_dimension_numbers<[1], [0], [0], [1], [0, 0, 1, 1], [], []>} : vector<8x160xf32>, vector<160x32xf32>, vector<8x32xf32> -> vector<8x32xf32>
    %c0_35 = arith.constant 0 : index
    %c0_36 = arith.constant 0 : index
    %72 = vector.load %arg15[%c0_35, %c0_36] : memref<1x32xf32, #tpu.memory_space<vmem>>, vector<1x32xf32>
    %73 = vector.broadcast %72 : vector<1x32xf32> to vector<8x32xf32>
    %74 = arith.addf %71, %73 : vector<8x32xf32>
    %c0_37 = arith.constant 0 : index
    %c0_38 = arith.constant 0 : index
    %75 = vector.load %arg16[%c0_37, %c0_38] : memref<1x32xf32, #tpu.memory_space<vmem>>, vector<1x32xf32>
    %76 = vector.broadcast %75 : vector<1x32xf32> to vector<8x32xf32>
    %77 = arith.mulf %74, %76 : vector<8x32xf32>
    %c0_39 = arith.constant 0 : index
    %c0_40 = arith.constant 0 : index
    %78 = vector.load %arg17[%c0_39, %c0_40] : memref<1x32xf32, #tpu.memory_space<vmem>>, vector<1x32xf32>
    %79 = vector.broadcast %78 : vector<1x32xf32> to vector<8x32xf32>
    %80 = arith.addf %77, %79 : vector<8x32xf32>
    %81 = math.tanh %80 : vector<8x32xf32>
    %c0_41 = arith.constant 0 : index
    %c0_42 = arith.constant 0 : index
    %82 = vector.load %arg18[%c0_41, %c0_42] : memref<160x16xf32, #tpu.memory_space<vmem>>, vector<160x16xf32>
    %cst_43 = arith.constant 0.000000e+00 : f32
    %83 = vector.broadcast %cst_43 : f32 to vector<2x32xf32>
    %84 = tpu.concatenate %83, %81, %83 in 0 : vector<2x32xf32>, vector<8x32xf32>, vector<2x32xf32> -> vector<12x32xf32>
    %85 = vector.extract_strided_slice %84 {offsets = [0, 0], sizes = [8, 32], strides = [1, 1]} : vector<12x32xf32> to vector<8x32xf32>
    %86 = vector.extract_strided_slice %84 {offsets = [1, 0], sizes = [8, 32], strides = [1, 1]} : vector<12x32xf32> to vector<8x32xf32>
    %87 = vector.extract_strided_slice %84 {offsets = [2, 0], sizes = [8, 32], strides = [1, 1]} : vector<12x32xf32> to vector<8x32xf32>
    %88 = vector.extract_strided_slice %84 {offsets = [3, 0], sizes = [8, 32], strides = [1, 1]} : vector<12x32xf32> to vector<8x32xf32>
    %89 = vector.extract_strided_slice %84 {offsets = [4, 0], sizes = [8, 32], strides = [1, 1]} : vector<12x32xf32> to vector<8x32xf32>
    %90 = tpu.concatenate %85, %86, %87, %88, %89 in 1 : vector<8x32xf32>, vector<8x32xf32>, vector<8x32xf32>, vector<8x32xf32>, vector<8x32xf32> -> vector<8x160xf32>
    %cst_44 = arith.constant dense<0.000000e+00> : vector<8x16xf32>
    %91 = tpu.matmul %90, %82, %cst_44 {dimension_numbers = #tpu.dot_dimension_numbers<[1], [0], [0], [1], [0, 0, 1, 1], [], []>} : vector<8x160xf32>, vector<160x16xf32>, vector<8x16xf32> -> vector<8x16xf32>
    %c0_45 = arith.constant 0 : index
    %c0_46 = arith.constant 0 : index
    %92 = vector.load %arg19[%c0_45, %c0_46] : memref<1x16xf32, #tpu.memory_space<vmem>>, vector<1x16xf32>
    %93 = vector.broadcast %92 : vector<1x16xf32> to vector<8x16xf32>
    %94 = arith.addf %91, %93 : vector<8x16xf32>
    %c0_47 = arith.constant 0 : index
    %c0_48 = arith.constant 0 : index
    %95 = vector.load %arg20[%c0_47, %c0_48] : memref<1x16xf32, #tpu.memory_space<vmem>>, vector<1x16xf32>
    %96 = vector.broadcast %95 : vector<1x16xf32> to vector<8x16xf32>
    %97 = arith.mulf %94, %96 : vector<8x16xf32>
    %c0_49 = arith.constant 0 : index
    %c0_50 = arith.constant 0 : index
    %98 = vector.load %arg21[%c0_49, %c0_50] : memref<1x16xf32, #tpu.memory_space<vmem>>, vector<1x16xf32>
    %99 = vector.broadcast %98 : vector<1x16xf32> to vector<8x16xf32>
    %100 = arith.addf %97, %99 : vector<8x16xf32>
    %c0_51 = arith.constant 0 : index
    %c0_52 = arith.constant 0 : index
    %c0_53 = arith.constant 0 : index
    %101 = vector.load %arg22[%c0_51, %c0_52, %c0_53] : memref<1x8x16xf32, #tpu.memory_space<vmem>>, vector<1x8x16xf32>
    %102 = vector.shape_cast %101 : vector<1x8x16xf32> to vector<8x16xf32>
    %103 = vector.shape_cast %100 : vector<8x16xf32> to vector<1x8x16xf32>
    tpu.vector_store %arg22[%c0_51, %c0_52, %c0_53], %103 {strides = array<i32>} : memref<1x8x16xf32, #tpu.memory_space<vmem>>, vector<1x8x16xf32>,
    return
  }
  func.func @transform_0(%arg0: i32) -> (i32, i32, i32) {
    %c0_i32 = arith.constant 0 : i32
    %c0_i32_0 = arith.constant 0 : i32
    %c0_i32_1 = arith.constant 0 : i32
    return %arg0, %c0_i32, %c0_i32_0 : i32, i32, i32
  }
  func.func @transform_1(%arg0: i32) -> (i32, i32) {
    %c0_i32 = arith.constant 0 : i32
    %c0_i32_0 = arith.constant 0 : i32
    %c0_i32_1 = arith.constant 0 : i32
    return %c0_i32, %c0_i32_0 : i32, i32
  }
  func.func @transform_2(%arg0: i32) -> (i32, i32) {
    %c0_i32 = arith.constant 0 : i32
    %c0_i32_0 = arith.constant 0 : i32
    %c0_i32_1 = arith.constant 0 : i32
    return %c0_i32, %c0_i32_0 : i32, i32
  }
  func.func @transform_3(%arg0: i32) -> (i32, i32) {
    %c0_i32 = arith.constant 0 : i32
    %c0_i32_0 = arith.constant 0 : i32
    %c0_i32_1 = arith.constant 0 : i32
    return %c0_i32, %c0_i32_0 : i32, i32
  }
  func.func @transform_4(%arg0: i32) -> (i32, i32) {
    %c0_i32 = arith.constant 0 : i32
    %c0_i32_0 = arith.constant 0 : i32
    %c0_i32_1 = arith.constant 0 : i32
    return %c0_i32, %c0_i32_0 : i32, i32
  }
  func.func @transform_5(%arg0: i32) -> (i32, i32) {
    %c0_i32 = arith.constant 0 : i32
    %c0_i32_0 = arith.constant 0 : i32
    %c0_i32_1 = arith.constant 0 : i32
    return %c0_i32, %c0_i32_0 : i32, i32
  }
  func.func @transform_6(%arg0: i32) -> (i32, i32) {
    %c0_i32 = arith.constant 0 : i32
    %c0_i32_0 = arith.constant 0 : i32
    %c0_i32_1 = arith.constant 0 : i32
    return %c0_i32, %c0_i32_0 : i32, i32
  }
  func.func @transform_7(%arg0: i32) -> (i32, i32) {
    %c0_i32 = arith.constant 0 : i32
    %c0_i32_0 = arith.constant 0 : i32
    %c0_i32_1 = arith.constant 0 : i32
    return %c0_i32, %c0_i32_0 : i32, i32
  }
  func.func @transform_8(%arg0: i32) -> (i32, i32) {
    %c0_i32 = arith.constant 0 : i32
    %c0_i32_0 = arith.constant 0 : i32
    %c0_i32_1 = arith.constant 0 : i32
    return %c0_i32, %c0_i32_0 : i32, i32
  }
  func.func @transform_9(%arg0: i32) -> (i32, i32) {
    %c0_i32 = arith.constant 0 : i32
    %c0_i32_0 = arith.constant 0 : i32
    %c0_i32_1 = arith.constant 0 : i32
    return %c0_i32, %c0_i32_0 : i32, i32
  }
  func.func @transform_10(%arg0: i32) -> (i32, i32) {
    %c0_i32 = arith.constant 0 : i32
    %c0_i32_0 = arith.constant 0 : i32
    %c0_i32_1 = arith.constant 0 : i32
    return %c0_i32, %c0_i32_0 : i32, i32
  }
  func.func @transform_11(%arg0: i32) -> (i32, i32) {
    %c0_i32 = arith.constant 0 : i32
    %c0_i32_0 = arith.constant 0 : i32
    %c0_i32_1 = arith.constant 0 : i32
    return %c0_i32, %c0_i32_0 : i32, i32
  }
  func.func @transform_12(%arg0: i32) -> (i32, i32) {
    %c0_i32 = arith.constant 0 : i32
    %c0_i32_0 = arith.constant 0 : i32
    %c0_i32_1 = arith.constant 0 : i32
    return %c0_i32, %c0_i32_0 : i32, i32
  }
  func.func @transform_13(%arg0: i32) -> (i32, i32) {
    %c0_i32 = arith.constant 0 : i32
    %c0_i32_0 = arith.constant 0 : i32
    %c0_i32_1 = arith.constant 0 : i32
    return %c0_i32, %c0_i32_0 : i32, i32
  }
  func.func @transform_14(%arg0: i32) -> (i32, i32) {
    %c0_i32 = arith.constant 0 : i32
    %c0_i32_0 = arith.constant 0 : i32
    %c0_i32_1 = arith.constant 0 : i32
    return %c0_i32, %c0_i32_0 : i32, i32
  }
  func.func @transform_15(%arg0: i32) -> (i32, i32) {
    %c0_i32 = arith.constant 0 : i32
    %c0_i32_0 = arith.constant 0 : i32
    %c0_i32_1 = arith.constant 0 : i32
    return %c0_i32, %c0_i32_0 : i32, i32
  }
  func.func @transform_16(%arg0: i32) -> (i32, i32) {
    %c0_i32 = arith.constant 0 : i32
    %c0_i32_0 = arith.constant 0 : i32
    %c0_i32_1 = arith.constant 0 : i32
    return %c0_i32, %c0_i32_0 : i32, i32
  }
  func.func @transform_17(%arg0: i32) -> (i32, i32) {
    %c0_i32 = arith.constant 0 : i32
    %c0_i32_0 = arith.constant 0 : i32
    %c0_i32_1 = arith.constant 0 : i32
    return %c0_i32, %c0_i32_0 : i32, i32
  }
  func.func @transform_18(%arg0: i32) -> (i32, i32) {
    %c0_i32 = arith.constant 0 : i32
    %c0_i32_0 = arith.constant 0 : i32
    %c0_i32_1 = arith.constant 0 : i32
    return %c0_i32, %c0_i32_0 : i32, i32
  }
  func.func @transform_19(%arg0: i32) -> (i32, i32) {
    %c0_i32 = arith.constant 0 : i32
    %c0_i32_0 = arith.constant 0 : i32
    %c0_i32_1 = arith.constant 0 : i32
    return %c0_i32, %c0_i32_0 : i32, i32
  }
  func.func @transform_20(%arg0: i32) -> (i32, i32) {
    %c0_i32 = arith.constant 0 : i32
    %c0_i32_0 = arith.constant 0 : i32
    %c0_i32_1 = arith.constant 0 : i32
    return %c0_i32, %c0_i32_0 : i32, i32
  }
  func.func @transform_21(%arg0: i32) -> (i32, i32, i32) {
    %c0_i32 = arith.constant 0 : i32
    %c0_i32_0 = arith.constant 0 : i32
    %c0_i32_1 = arith.constant 0 : i32
    return %arg0, %c0_i32, %c0_i32_0 : i32, i32, i32
  }
}

</mosaic_0001>

<llo_original>
// kernel: forward.3
$region0: #{forward.3}
  #allocation0 [shape = 'u32[]', space=smem, size = 0x4, offset = 0x4, fixed_abs, tag = 'smem constant byte address 0x4 - core index']
  #allocation1 [shape = 'u32[144,128]{1,0:T(1,128)}', space=vmem, size = 0x12000, scoped, tag = 'internal scratch']
  %s0 = inlined_call_operand.vmem [shape: f32[2,8,16], index: 0, kind: input, shape index: {}]
  %s1 = inlined_call_operand.vmem [shape: f32[80,32], index: 1, kind: input, shape index: {}]
  %s2 = inlined_call_operand.vmem [shape: f32[1,32], index: 2, kind: input, shape index: {}]
  %s3 = inlined_call_operand.vmem [shape: f32[1,32], index: 3, kind: input, shape index: {}]
  %s4 = inlined_call_operand.vmem [shape: f32[1,32], index: 4, kind: input, shape index: {}]
  %s5 = inlined_call_operand.vmem [shape: f32[160,32], index: 5, kind: input, shape index: {}]
  %s6 = inlined_call_operand.vmem [shape: f32[1,32], index: 6, kind: input, shape index: {}]
  %s7 = inlined_call_operand.vmem [shape: f32[1,32], index: 7, kind: input, shape index: {}]
  %s8 = inlined_call_operand.vmem [shape: f32[1,32], index: 8, kind: input, shape index: {}]
  %s9 = inlined_call_operand.vmem [shape: f32[160,32], index: 9, kind: input, shape index: {}]
  %s10 = inlined_call_operand.vmem [shape: f32[1,32], index: 10, kind: input, shape index: {}]
  %s11 = inlined_call_operand.vmem [shape: f32[1,32], index: 11, kind: input, shape index: {}]
  %s12 = inlined_call_operand.vmem [shape: f32[1,32], index: 12, kind: input, shape index: {}]
  %s13 = inlined_call_operand.vmem [shape: f32[160,32], index: 13, kind: input, shape index: {}]
  %s14 = inlined_call_operand.vmem [shape: f32[1,32], index: 14, kind: input, shape index: {}]
  %s15 = inlined_call_operand.vmem [shape: f32[1,32], index: 15, kind: input, shape index: {}]
  %s16 = inlined_call_operand.vmem [shape: f32[1,32], index: 16, kind: input, shape index: {}]
  %s17 = inlined_call_operand.vmem [shape: f32[160,16], index: 17, kind: input, shape index: {}]
  %s18 = inlined_call_operand.vmem [shape: f32[1,16], index: 18, kind: input, shape index: {}]
  %s19 = inlined_call_operand.vmem [shape: f32[1,16], index: 19, kind: input, shape index: {}]
  %s20 = inlined_call_operand.vmem [shape: f32[1,16], index: 20, kind: input, shape index: {}]
  %s21 = inlined_call_operand.vmem [shape: f32[2,8,16], index: 21, kind: output, shape index: {}]
  %s22 = sld [smem:[#allocation0]]
  $region117: #{forward.3} parent=0
    _
  %s24 = ssub.s32 1, %s22
  %s25 = scalar_select 0, %s24, %s22
  loop: start=0, step=1, limit=4
  $region2: #{forward.3} parent=0 // loop_pre_header
    _
  $region3: #{forward.3} parent=0 // loop_header
    %s27 = sphi 0, %s31
    %p28 = scmp.ge.s32.totalorder %s27, 4
    %s37 = sphi 0, %s39
    %s40 = sphi 0, %s37
    %s41 = sphi 0, %s40
    %s57 = sphi 0, %s41
    %s61 = sphi 0, %s61
    %s63 = sphi 0, %s61
    %s64 = sphi 0, %s63
    %s78 = sphi 0, %s64
    %s82 = sphi 0, %s82
    %s84 = sphi 0, %s82
    %s85 = sphi 0, %s84
    %s99 = sphi 0, %s85
    %s103 = sphi 0, %s103
    %s105 = sphi 0, %s103
    %s106 = sphi 0, %s105
    %s120 = sphi 0, %s106
    %s124 = sphi 0, %s124
    %s126 = sphi 0, %s124
    %s127 = sphi 0, %s126
    %s141 = sphi 0, %s127
    %s145 = sphi 0, %s145
    %s147 = sphi 0, %s145
    %s148 = sphi 0, %s147
    %s162 = sphi 0, %s148
    %s166 = sphi 0, %s166
    %s168 = sphi 0, %s166
    %s169 = sphi 0, %s168
    %s183 = sphi 0, %s169
    %s187 = sphi 0, %s187
    %s189 = sphi 0, %s187
    %s190 = sphi 0, %s189
    %s204 = sphi 0, %s190
    %s208 = sphi 0, %s208
    %s210 = sphi 0, %s208
    %s211 = sphi 0, %s210
    %s225 = sphi 0, %s211
    %s229 = sphi 0, %s229
    %s231 = sphi 0, %s229
    %s232 = sphi 0, %s231
    %s246 = sphi 0, %s232
    %s250 = sphi 0, %s250
    %s252 = sphi 0, %s250
    %s253 = sphi 0, %s252
    %s267 = sphi 0, %s253
    %s271 = sphi 0, %s271
    %s273 = sphi 0, %s271
    %s274 = sphi 0, %s273
    %s288 = sphi 0, %s274
    %s292 = sphi 0, %s292
    %s294 = sphi 0, %s292
    %s295 = sphi 0, %s294
    %s309 = sphi 0, %s295
    %s313 = sphi 0, %s313
    %s315 = sphi 0, %s313
    %s316 = sphi 0, %s315
    %s330 = sphi 0, %s316
    %s334 = sphi 0, %s334
    %s336 = sphi 0, %s334
    %s337 = sphi 0, %s336
    %s351 = sphi 0, %s337
    %s355 = sphi 0, %s355
    %s357 = sphi 0, %s355
    %s358 = sphi 0, %s357
    %s372 = sphi 0, %s358
    %s376 = sphi 0, %s376
    %s378 = sphi 0, %s376
    %s379 = sphi 0, %s378
    %s393 = sphi 0, %s379
    %s397 = sphi 0, %s397
    %s399 = sphi 0, %s397
    %s400 = sphi 0, %s399
    %s414 = sphi 0, %s400
    %s418 = sphi 0, %s418
    %s420 = sphi 0, %s418
    %s421 = sphi 0, %s420
    %s435 = sphi 0, %s421
    %s439 = sphi 0, %s439
    %s441 = sphi 0, %s439
    %s442 = sphi 0, %s441
    %s456 = sphi 0, %s442
    %s460 = sphi 0, %s460
    %s462 = sphi 0, %s460
    %s463 = sphi 0, %s462
    %s477 = sphi 0, %s463
    %s483 = sphi 0, %s485
    %s486 = sphi 0, %s483
    %s487 = sphi 0, %s486
    %s503 = sphi 0, %s487
  $region4: #{forward.3} parent=0 // loop_header_branch
    %30 = sbr.rel (%p28) target = $region8
  $region5: #{forward.3} parent=0 // loop_body
    %s32 = ssub.s32 %s27, 1
    %s33 = ssub.s32 %s27, 2
    %s34 = sadd.s32 %s27, 1
    %s35 = ssub.s32 %s27, %s34
    %p36 = scmp.eq.s32.totalorder %s35, 0
    %s38 = sadd.s32 %s37, 1
    %s39 = scalar_select %p36, %s37, %s38
    %p42 = pneg %p36
    %p43 = scmp.eq.s32.totalorder %s27, 1
    %p44 = por %p42, %p43
    %p45 = scmp.ne.s32.totalorder %s37, %s40
    %p46 = scmp.eq.s32.totalorder %s27, 0
    %p47 = por %p45, %p46
    %p48 = scmp.ne.s32.totalorder %s37, %s40
    %p49 = scmp.eq.s32.totalorder %s32, 1
    %p50 = por %p48, %p49
    %p51 = scmp.ne.s32.totalorder %s40, %s41
    %p52 = scmp.eq.s32.totalorder %s32, 0
    %p53 = por %p51, %p52
    %p54 = scmp.ne.s32.totalorder %s40, %s41
    %p55 = scmp.eq.s32.totalorder %s33, 1
    %p56 = por %p54, %p55
    %p58 = scmp.ne.s32.totalorder %s41, %s57
    %p59 = scmp.eq.s32.totalorder %s33, 0
    %p60 = por %p58, %p59
    %s62 = sadd.s32 %s61, 1
    %p65 = scmp.eq.s32.totalorder %s27, 1
    %p66 = scmp.ne.s32.totalorder %s61, %s63
    %p67 = scmp.eq.s32.totalorder %s27, 0
    %p68 = por %p66, %p67
    %p69 = scmp.ne.s32.totalorder %s61, %s63
    %p70 = scmp.eq.s32.totalorder %s32, 1
    %p71 = por %p69, %p70
    %p72 = scmp.ne.s32.totalorder %s63, %s64
    %p73 = scmp.eq.s32.totalorder %s32, 0
    %p74 = por %p72, %p73
    %p75 = scmp.ne.s32.totalorder %s63, %s64
    %p76 = scmp.eq.s32.totalorder %s33, 1
    %p77 = por %p75, %p76
    %p79 = scmp.ne.s32.totalorder %s64, %s78
    %p80 = scmp.eq.s32.totalorder %s33, 0
    %p81 = por %p79, %p80
    %s83 = sadd.s32 %s82, 1
    %p86 = scmp.eq.s32.totalorder %s27, 1
    %p87 = scmp.ne.s32.totalorder %s82, %s84
    %p88 = scmp.eq.s32.totalorder %s27, 0
    %p89 = por %p87, %p88
    %p90 = scmp.ne.s32.totalorder %s82, %s84
    %p91 = scmp.eq.s32.totalorder %s32, 1
    %p92 = por %p90, %p91
    %p93 = scmp.ne.s32.totalorder %s84, %s85
    %p94 = scmp.eq.s32.totalorder %s32, 0
    %p95 = por %p93, %p94
    %p96 = scmp.ne.s32.totalorder %s84, %s85
    %p97 = scmp.eq.s32.totalorder %s33, 1
    %p98 = por %p96, %p97
    %p100 = scmp.ne.s32.totalorder %s85, %s99
    %p101 = scmp.eq.s32.totalorder %s33, 0
    %p102 = por %p100, %p101
    %s104 = sadd.s32 %s103, 1
    %p107 = scmp.eq.s32.totalorder %s27, 1
    %p108 = scmp.ne.s32.totalorder %s103, %s105
    %p109 = scmp.eq.s32.totalorder %s27, 0
    %p110 = por %p108, %p109
    %p111 = scmp.ne.s32.totalorder %s103, %s105
    %p112 = scmp.eq.s32.totalorder %s32, 1
    %p113 = por %p111, %p112
    %p114 = scmp.ne.s32.totalorder %s105, %s106
    %p115 = scmp.eq.s32.totalorder %s32, 0
    %p116 = por %p114, %p115
    %p117 = scmp.ne.s32.totalorder %s105, %s106
    %p118 = scmp.eq.s32.totalorder %s33, 1
    %p119 = por %p117, %p118
    %p121 = scmp.ne.s32.totalorder %s106, %s120
    %p122 = scmp.eq.s32.totalorder %s33, 0
    %p123 = por %p121, %p122
    %s125 = sadd.s32 %s124, 1
    %p128 = scmp.eq.s32.totalorder %s27, 1
    %p129 = scmp.ne.s32.totalorder %s124, %s126
    %p130 = scmp.eq.s32.totalorder %s27, 0
    %p131 = por %p129, %p130
    %p132 = scmp.ne.s32.totalorder %s124, %s126
    %p133 = scmp.eq.s32.totalorder %s32, 1
    %p134 = por %p132, %p133
    %p135 = scmp.ne.s32.totalorder %s126, %s127
    %p136 = scmp.eq.s32.totalorder %s32, 0
    %p137 = por %p135, %p136
    %p138 = scmp.ne.s32.totalorder %s126, %s127
    %p139 = scmp.eq.s32.totalorder %s33, 1
    %p140 = por %p138, %p139
    %p142 = scmp.ne.s32.totalorder %s127, %s141
    %p143 = scmp.eq.s32.totalorder %s33, 0
    %p144 = por %p142, %p143
    %s146 = sadd.s32 %s145, 1
    %p149 = scmp.eq.s32.totalorder %s27, 1
    %p150 = scmp.ne.s32.totalorder %s145, %s147
    %p151 = scmp.eq.s32.totalorder %s27, 0
    %p152 = por %p150, %p151
    %p153 = scmp.ne.s32.totalorder %s145, %s147
    %p154 = scmp.eq.s32.totalorder %s32, 1
    %p155 = por %p153, %p154
    %p156 = scmp.ne.s32.totalorder %s147, %s148
    %p157 = scmp.eq.s32.totalorder %s32, 0
    %p158 = por %p156, %p157
    %p159 = scmp.ne.s32.totalorder %s147, %s148
    %p160 = scmp.eq.s32.totalorder %s33, 1
    %p161 = por %p159, %p160
    %p163 = scmp.ne.s32.totalorder %s148, %s162
    %p164 = scmp.eq.s32.totalorder %s33, 0
    %p165 = por %p163, %p164
    %s167 = sadd.s32 %s166, 1
    %p170 = scmp.eq.s32.totalorder %s27, 1
    %p171 = scmp.ne.s32.totalorder %s166, %s168
    %p172 = scmp.eq.s32.totalorder %s27, 0
    %p173 = por %p171, %p172
    %p174 = scmp.ne.s32.totalorder %s166, %s168
    %p175 = scmp.eq.s32.totalorder %s32, 1
    %p176 = por %p174, %p175
    %p177 = scmp.ne.s32.totalorder %s168, %s169
    %p178 = scmp.eq.s32.totalorder %s32, 0
    %p179 = por %p177, %p178
    %p180 = scmp.ne.s32.totalorder %s168, %s169
    %p181 = scmp.eq.s32.totalorder %s33, 1
    %p182 = por %p180, %p181
    %p184 = scmp.ne.s32.totalorder %s169, %s183
    %p185 = scmp.eq.s32.totalorder %s33, 0
    %p186 = por %p184, %p185
    %s188 = sadd.s32 %s187, 1
    %p191 = scmp.eq.s32.totalorder %s27, 1
    %p192 = scmp.ne.s32.totalorder %s187, %s189
    %p193 = scmp.eq.s32.totalorder %s27, 0
    %p194 = por %p192, %p193
    %p195 = scmp.ne.s32.totalorder %s187, %s189
    %p196 = scmp.eq.s32.totalorder %s32, 1
    %p197 = por %p195, %p196
    %p198 = scmp.ne.s32.totalorder %s189, %s190
    %p199 = scmp.eq.s32.totalorder %s32, 0
    %p200 = por %p198, %p199
    %p201 = scmp.ne.s32.totalorder %s189, %s190
    %p202 = scmp.eq.s32.totalorder %s33, 1
    %p203 = por %p201, %p202
    %p205 = scmp.ne.s32.totalorder %s190, %s204
    %p206 = scmp.eq.s32.totalorder %s33, 0
    %p207 = por %p205, %p206
    %s209 = sadd.s32 %s208, 1
    %p212 = scmp.eq.s32.totalorder %s27, 1
    %p213 = scmp.ne.s32.totalorder %s208, %s210
    %p214 = scmp.eq.s32.totalorder %s27, 0
    %p215 = por %p213, %p214
    %p216 = scmp.ne.s32.totalorder %s208, %s210
    %p217 = scmp.eq.s32.totalorder %s32, 1
    %p218 = por %p216, %p217
    %p219 = scmp.ne.s32.totalorder %s210, %s211
    %p220 = scmp.eq.s32.totalorder %s32, 0
    %p221 = por %p219, %p220
    %p222 = scmp.ne.s32.totalorder %s210, %s211
    %p223 = scmp.eq.s32.totalorder %s33, 1
    %p224 = por %p222, %p223
    %p226 = scmp.ne.s32.totalorder %s211, %s225
    %p227 = scmp.eq.s32.totalorder %s33, 0
    %p228 = por %p226, %p227
    %s230 = sadd.s32 %s229, 1
    %p233 = scmp.eq.s32.totalorder %s27, 1
    %p234 = scmp.ne.s32.totalorder %s229, %s231
    %p235 = scmp.eq.s32.totalorder %s27, 0
    %p236 = por %p234, %p235
    %p237 = scmp.ne.s32.totalorder %s229, %s231
    %p238 = scmp.eq.s32.totalorder %s32, 1
    %p239 = por %p237, %p238
    %p240 = scmp.ne.s32.totalorder %s231, %s232
    %p241 = scmp.eq.s32.totalorder %s32, 0
    %p242 = por %p240, %p241
    %p243 = scmp.ne.s32.totalorder %s231, %s232
    %p244 = scmp.eq.s32.totalorder %s33, 1
    %p245 = por %p243, %p244
    %p247 = scmp.ne.s32.totalorder %s232, %s246
    %p248 = scmp.eq.s32.totalorder %s33, 0
    %p249 = por %p247, %p248
    %s251 = sadd.s32 %s250, 1
    %p254 = scmp.eq.s32.totalorder %s27, 1
    %p255 = scmp.ne.s32.totalorder %s250, %s252
    %p256 = scmp.eq.s32.totalorder %s27, 0
    %p257 = por %p255, %p256
    %p258 = scmp.ne.s32.totalorder %s250, %s252
    %p259 = scmp.eq.s32.totalorder %s32, 1
    %p260 = por %p258, %p259
    %p261 = scmp.ne.s32.totalorder %s252, %s253
    %p262 = scmp.eq.s32.totalorder %s32, 0
    %p263 = por %p261, %p262
    %p264 = scmp.ne.s32.totalorder %s252, %s253
    %p265 = scmp.eq.s32.totalorder %s33, 1
    %p266 = por %p264, %p265
    %p268 = scmp.ne.s32.totalorder %s253, %s267
    %p269 = scmp.eq.s32.totalorder %s33, 0
    %p270 = por %p268, %p269
    %s272 = sadd.s32 %s271, 1
    %p275 = scmp.eq.s32.totalorder %s27, 1
    %p276 = scmp.ne.s32.totalorder %s271, %s273
    %p277 = scmp.eq.s32.totalorder %s27, 0
    %p278 = por %p276, %p277
    %p279 = scmp.ne.s32.totalorder %s271, %s273
    %p280 = scmp.eq.s32.totalorder %s32, 1
    %p281 = por %p279, %p280
    %p282 = scmp.ne.s32.totalorder %s273, %s274
    %p283 = scmp.eq.s32.totalorder %s32, 0
    %p284 = por %p282, %p283
    %p285 = scmp.ne.s32.totalorder %s273, %s274
    %p286 = scmp.eq.s32.totalorder %s33, 1
    %p287 = por %p285, %p286
    %p289 = scmp.ne.s32.totalorder %s274, %s288
    %p290 = scmp.eq.s32.totalorder %s33, 0
    %p291 = por %p289, %p290
    %s293 = sadd.s32 %s292, 1
    %p296 = scmp.eq.s32.totalorder %s27, 1
    %p297 = scmp.ne.s32.totalorder %s292, %s294
    %p298 = scmp.eq.s32.totalorder %s27, 0
    %p299 = por %p297, %p298
    %p300 = scmp.ne.s32.totalorder %s292, %s294
    %p301 = scmp.eq.s32.totalorder %s32, 1
    %p302 = por %p300, %p301
    %p303 = scmp.ne.s32.totalorder %s294, %s295
    %p304 = scmp.eq.s32.totalorder %s32, 0
    %p305 = por %p303, %p304
    %p306 = scmp.ne.s32.totalorder %s294, %s295
    %p307 = scmp.eq.s32.totalorder %s33, 1
    %p308 = por %p306, %p307
    %p310 = scmp.ne.s32.totalorder %s295, %s309
    %p311 = scmp.eq.s32.totalorder %s33, 0
    %p312 = por %p310, %p311
    %s314 = sadd.s32 %s313, 1
    %p317 = scmp.eq.s32.totalorder %s27, 1
    %p318 = scmp.ne.s32.totalorder %s313, %s315
    %p319 = scmp.eq.s32.totalorder %s27, 0
    %p320 = por %p318, %p319
    %p321 = scmp.ne.s32.totalorder %s313, %s315
    %p322 = scmp.eq.s32.totalorder %s32, 1
    %p323 = por %p321, %p322
    %p324 = scmp.ne.s32.totalorder %s315, %s316
    %p325 = scmp.eq.s32.totalorder %s32, 0
    %p326 = por %p324, %p325
    %p327 = scmp.ne.s32.totalorder %s315, %s316
    %p328 = scmp.eq.s32.totalorder %s33, 1
    %p329 = por %p327, %p328
    %p331 = scmp.ne.s32.totalorder %s316, %s330
    %p332 = scmp.eq.s32.totalorder %s33, 0
    %p333 = por %p331, %p332
    %s335 = sadd.s32 %s334, 1
    %p338 = scmp.eq.s32.totalorder %s27, 1
    %p339 = scmp.ne.s32.totalorder %s334, %s336
    %p340 = scmp.eq.s32.totalorder %s27, 0
    %p341 = por %p339, %p340
    %p342 = scmp.ne.s32.totalorder %s334, %s336
    %p343 = scmp.eq.s32.totalorder %s32, 1
    %p344 = por %p342, %p343
    %p345 = scmp.ne.s32.totalorder %s336, %s337
    %p346 = scmp.eq.s32.totalorder %s32, 0
    %p347 = por %p345, %p346
    %p348 = scmp.ne.s32.totalorder %s336, %s337
    %p349 = scmp.eq.s32.totalorder %s33, 1
    %p350 = por %p348, %p349
    %p352 = scmp.ne.s32.totalorder %s337, %s351
    %p353 = scmp.eq.s32.totalorder %s33, 0
    %p354 = por %p352, %p353
    %s356 = sadd.s32 %s355, 1
    %p359 = scmp.eq.s32.totalorder %s27, 1
    %p360 = scmp.ne.s32.totalorder %s355, %s357
    %p361 = scmp.eq.s32.totalorder %s27, 0
    %p362 = por %p360, %p361
    %p363 = scmp.ne.s32.totalorder %s355, %s357
    %p364 = scmp.eq.s32.totalorder %s32, 1
    %p365 = por %p363, %p364
    %p366 = scmp.ne.s32.totalorder %s357, %s358
    %p367 = scmp.eq.s32.totalorder %s32, 0
    %p368 = por %p366, %p367
    %p369 = scmp.ne.s32.totalorder %s357, %s358
    %p370 = scmp.eq.s32.totalorder %s33, 1
    %p371 = por %p369, %p370
    %p373 = scmp.ne.s32.totalorder %s358, %s372
    %p374 = scmp.eq.s32.totalorder %s33, 0
    %p375 = por %p373, %p374
    %s377 = sadd.s32 %s376, 1
    %p380 = scmp.eq.s32.totalorder %s27, 1
    %p381 = scmp.ne.s32.totalorder %s376, %s378
    %p382 = scmp.eq.s32.totalorder %s27, 0
    %p383 = por %p381, %p382
    %p384 = scmp.ne.s32.totalorder %s376, %s378
    %p385 = scmp.eq.s32.totalorder %s32, 1
    %p386 = por %p384, %p385
    %p387 = scmp.ne.s32.totalorder %s378, %s379
    %p388 = scmp.eq.s32.totalorder %s32, 0
    %p389 = por %p387, %p388
    %p390 = scmp.ne.s32.totalorder %s378, %s379
    %p391 = scmp.eq.s32.totalorder %s33, 1
    %p392 = por %p390, %p391
    %p394 = scmp.ne.s32.totalorder %s379, %s393
    %p395 = scmp.eq.s32.totalorder %s33, 0
    %p396 = por %p394, %p395
    %s398 = sadd.s32 %s397, 1
    %p401 = scmp.eq.s32.totalorder %s27, 1
    %p402 = scmp.ne.s32.totalorder %s397, %s399
    %p403 = scmp.eq.s32.totalorder %s27, 0
    %p404 = por %p402, %p403
    %p405 = scmp.ne.s32.totalorder %s397, %s399
    %p406 = scmp.eq.s32.totalorder %s32, 1
    %p407 = por %p405, %p406
    %p408 = scmp.ne.s32.totalorder %s399, %s400
    %p409 = scmp.eq.s32.totalorder %s32, 0
    %p410 = por %p408, %p409
    %p411 = scmp.ne.s32.totalorder %s399, %s400
    %p412 = scmp.eq.s32.totalorder %s33, 1
    %p413 = por %p411, %p412
    %p415 = scmp.ne.s32.totalorder %s400, %s414
    %p416 = scmp.eq.s32.totalorder %s33, 0
    %p417 = por %p415, %p416
    %s419 = sadd.s32 %s418, 1
    %p422 = scmp.eq.s32.totalorder %s27, 1
    %p423 = scmp.ne.s32.totalorder %s418, %s420
    %p424 = scmp.eq.s32.totalorder %s27, 0
    %p425 = por %p423, %p424
    %p426 = scmp.ne.s32.totalorder %s418, %s420
    %p427 = scmp.eq.s32.totalorder %s32, 1
    %p428 = por %p426, %p427
    %p429 = scmp.ne.s32.totalorder %s420, %s421
    %p430 = scmp.eq.s32.totalorder %s32, 0
    %p431 = por %p429, %p430
    %p432 = scmp.ne.s32.totalorder %s420, %s421
    %p433 = scmp.eq.s32.totalorder %s33, 1
    %p434 = por %p432, %p433
    %p436 = scmp.ne.s32.totalorder %s421, %s435
    %p437 = scmp.eq.s32.totalorder %s33, 0
    %p438 = por %p436, %p437
    %s440 = sadd.s32 %s439, 1
    %p443 = scmp.eq.s32.totalorder %s27, 1
    %p444 = scmp.ne.s32.totalorder %s439, %s441
    %p445 = scmp.eq.s32.totalorder %s27, 0
    %p446 = por %p444, %p445
    %p447 = scmp.ne.s32.totalorder %s439, %s441
    %p448 = scmp.eq.s32.totalorder %s32, 1
    %p449 = por %p447, %p448
    %p450 = scmp.ne.s32.totalorder %s441, %s442
    %p451 = scmp.eq.s32.totalorder %s32, 0
    %p452 = por %p450, %p451
    %p453 = scmp.ne.s32.totalorder %s441, %s442
    %p454 = scmp.eq.s32.totalorder %s33, 1
    %p455 = por %p453, %p454
    %p457 = scmp.ne.s32.totalorder %s442, %s456
    %p458 = scmp.eq.s32.totalorder %s33, 0
    %p459 = por %p457, %p458
    %s461 = sadd.s32 %s460, 1
    %p464 = scmp.eq.s32.totalorder %s27, 1
    %p465 = scmp.ne.s32.totalorder %s460, %s462
    %p466 = scmp.eq.s32.totalorder %s27, 0
    %p467 = por %p465, %p466
    %p468 = scmp.ne.s32.totalorder %s460, %s462
    %p469 = scmp.eq.s32.totalorder %s32, 1
    %p470 = por %p468, %p469
    %p471 = scmp.ne.s32.totalorder %s462, %s463
    %p472 = scmp.eq.s32.totalorder %s32, 0
    %p473 = por %p471, %p472
    %p474 = scmp.ne.s32.totalorder %s462, %s463
    %p475 = scmp.eq.s32.totalorder %s33, 1
    %p476 = por %p474, %p475
    %p478 = scmp.ne.s32.totalorder %s463, %s477
    %p479 = scmp.eq.s32.totalorder %s33, 0
    %p480 = por %p478, %p479
    %s481 = ssub.s32 %s27, %s34
    %p482 = scmp.eq.s32.totalorder %s481, 0
    %s484 = sadd.s32 %s483, 1
    %s485 = scalar_select %p482, %s483, %s484
    %p488 = pneg %p482
    %p489 = scmp.eq.s32.totalorder %s27, 1
    %p490 = por %p488, %p489
    %p491 = scmp.ne.s32.totalorder %s483, %s486
    %p492 = scmp.eq.s32.totalorder %s27, 0
    %p493 = por %p491, %p492
    %p494 = scmp.ne.s32.totalorder %s483, %s486
    %p495 = scmp.eq.s32.totalorder %s32, 1
    %p496 = por %p494, %p495
    %p497 = scmp.ne.s32.totalorder %s486, %s487
    %p498 = scmp.eq.s32.totalorder %s32, 0
    %p499 = por %p497, %p498
    %p500 = scmp.ne.s32.totalorder %s486, %s487
    %p501 = scmp.eq.s32.totalorder %s33, 1
    %p502 = por %p500, %p501
    %p504 = scmp.ne.s32.totalorder %s487, %s503
    %p505 = scmp.eq.s32.totalorder %s33, 0
    %p506 = por %p504, %p505
    %p507 = scmp.le.s32.totalorder 1, %s27
    %p508 = scmp.lt.s32.totalorder %s27, 3
    %p509 = pnand %p507, %p508
    %p510 = pneg %p509
    // Predicated region
    $region9: #{forward.3} parent=5 // pred_check
      _
    $region10: #{forward.3} parent=5 // pred_check_branch
      %512 = sbr.rel (%p509) target = $region12
    $region11: #{forward.3} parent=5 // pred_region
      %s513 = ssub.s32 %s27, 1
      // Predicated region
      $region13: #{forward.3} parent=11 // pred_check
        %p514 = pneg %p74
      $region14: #{forward.3} parent=11 // pred_check_branch
        %516 = sbr.rel (%p514) target = $region16
      $region15: #{forward.3} parent=11 // pred_region
        _
      $region16: #{forward.3} parent=11 // pred_fallthru
        _
      // Predicated region
      $region17: #{forward.3} parent=11 // pred_check
        %p517 = pneg %p95
      $region18: #{forward.3} parent=11 // pred_check_branch
        %519 = sbr.rel (%p517) target = $region20
      $region19: #{forward.3} parent=11 // pred_region
        _
      $region20: #{forward.3} parent=11 // pred_fallthru
        _
      // Predicated region
      $region21: #{forward.3} parent=11 // pred_check
        %p520 = pneg %p116
      $region22: #{forward.3} parent=11 // pred_check_branch
        %522 = sbr.rel (%p520) target = $region24
      $region23: #{forward.3} parent=11 // pred_region
        _
      $region24: #{forward.3} parent=11 // pred_fallthru
        _
      // Predicated region
      $region25: #{forward.3} parent=11 // pred_check
        %p523 = pneg %p137
      $region26: #{forward.3} parent=11 // pred_check_branch
        %525 = sbr.rel (%p523) target = $region28
      $region27: #{forward.3} parent=11 // pred_region
        _
      $region28: #{forward.3} parent=11 // pred_fallthru
        _
      // Predicated region
      $region29: #{forward.3} parent=11 // pred_check
        %p526 = pneg %p158
      $region30: #{forward.3} parent=11 // pred_check_branch
        %528 = sbr.rel (%p526) target = $region32
      $region31: #{forward.3} parent=11 // pred_region
        _
      $region32: #{forward.3} parent=11 // pred_fallthru
        _
      // Predicated region
      $region33: #{forward.3} parent=11 // pred_check
        %p529 = pneg %p179
      $region34: #{forward.3} parent=11 // pred_check_branch
        %531 = sbr.rel (%p529) target = $region36
      $region35: #{forward.3} parent=11 // pred_region
        _
      $region36: #{forward.3} parent=11 // pred_fallthru
        _
      // Predicated region
      $region37: #{forward.3} parent=11 // pred_check
        %p532 = pneg %p200
      $region38: #{forward.3} parent=11 // pred_check_branch
        %534 = sbr.rel (%p532) target = $region40
      $region39: #{forward.3} parent=11 // pred_region
        _
      $region40: #{forward.3} parent=11 // pred_fallthru
        _
      // Predicated region
      $region41: #{forward.3} parent=11 // pred_check
        %p535 = pneg %p221
      $region42: #{forward.3} parent=11 // pred_check_branch
        %537 = sbr.rel (%p535) target = $region44
      $region43: #{forward.3} parent=11 // pred_region
        _
      $region44: #{forward.3} parent=11 // pred_fallthru
        _
      // Predicated region
      $region45: #{forward.3} parent=11 // pred_check
        %p538 = pneg %p242
      $region46: #{forward.3} parent=11 // pred_check_branch
        %540 = sbr.rel (%p538) target = $region48
      $region47: #{forward.3} parent=11 // pred_region
        _
      $region48: #{forward.3} parent=11 // pred_fallthru
        _
      // Predicated region
      $region49: #{forward.3} parent=11 // pred_check
        %p541 = pneg %p263
      $region50: #{forward.3} parent=11 // pred_check_branch
        %543 = sbr.rel (%p541) target = $region52
      $region51: #{forward.3} parent=11 // pred_region
        _
      $region52: #{forward.3} parent=11 // pred_fallthru
        _
      // Predicated region
      $region53: #{forward.3} parent=11 // pred_check
        %p544 = pneg %p284
      $region54: #{forward.3} parent=11 // pred_check_branch
        %546 = sbr.rel (%p544) target = $region56
      $region55: #{forward.3} parent=11 // pred_region
        _
      $region56: #{forward.3} parent=11 // pred_fallthru
        _
      // Predicated region
      $region57: #{forward.3} parent=11 // pred_check
        %p547 = pneg %p305
      $region58: #{forward.3} parent=11 // pred_check_branch
        %549 = sbr.rel (%p547) target = $region60
      $region59: #{forward.3} parent=11 // pred_region
        _
      $region60: #{forward.3} parent=11 // pred_fallthru
        _
      // Predicated region
      $region61: #{forward.3} parent=11 // pred_check
        %p550 = pneg %p326
      $region62: #{forward.3} parent=11 // pred_check_branch
        %552 = sbr.rel (%p550) target = $region64
      $region63: #{forward.3} parent=11 // pred_region
        _
      $region64: #{forward.3} parent=11 // pred_fallthru
        _
      // Predicated region
      $region65: #{forward.3} parent=11 // pred_check
        %p553 = pneg %p347
      $region66: #{forward.3} parent=11 // pred_check_branch
        %555 = sbr.rel (%p553) target = $region68
      $region67: #{forward.3} parent=11 // pred_region
        _
      $region68: #{forward.3} parent=11 // pred_fallthru
        _
      // Predicated region
      $region69: #{forward.3} parent=11 // pred_check
        %p556 = pneg %p368
      $region70: #{forward.3} parent=11 // pred_check_branch
        %558 = sbr.rel (%p556) target = $region72
      $region71: #{forward.3} parent=11 // pred_region
        _
      $region72: #{forward.3} parent=11 // pred_fallthru
        _
      // Predicated region
      $region73: #{forward.3} parent=11 // pred_check
        %p559 = pneg %p389
      $region74: #{forward.3} parent=11 // pred_check_branch
        %561 = sbr.rel (%p559) target = $region76
      $region75: #{forward.3} parent=11 // pred_region
        _
      $region76: #{forward.3} parent=11 // pred_fallthru
        _
      // Predicated region
      $region77: #{forward.3} parent=11 // pred_check
        %p562 = pneg %p410
      $region78: #{forward.3} parent=11 // pred_check_branch
        %564 = sbr.rel (%p562) target = $region80
      $region79: #{forward.3} parent=11 // pred_region
        _
      $region80: #{forward.3} parent=11 // pred_fallthru
        _
      // Predicated region
      $region81: #{forward.3} parent=11 // pred_check
        %p565 = pneg %p431
      $region82: #{forward.3} parent=11 // pred_check_branch
        %567 = sbr.rel (%p565) target = $region84
      $region83: #{forward.3} parent=11 // pred_region
        _
      $region84: #{forward.3} parent=11 // pred_fallthru
        _
      // Predicated region
      $region85: #{forward.3} parent=11 // pred_check
        %p568 = pneg %p452
      $region86: #{forward.3} parent=11 // pred_check_branch
        %570 = sbr.rel (%p568) target = $region88
      $region87: #{forward.3} parent=11 // pred_region
        _
      $region88: #{forward.3} parent=11 // pred_fallthru
        _
      // Predicated region
      $region89: #{forward.3} parent=11 // pred_check
        %p571 = pneg %p473
      $region90: #{forward.3} parent=11 // pred_check_branch
        %573 = sbr.rel (%p571) target = $region92
      $region91: #{forward.3} parent=11 // pred_region
        _
      $region92: #{forward.3} parent=11 // pred_fallthru
        _
    $region12: #{forward.3} parent=5 // pred_fallthru
      _
    %p574 = scmp.lt.s32.totalorder %s27, 2
    // Predicated region
    $region93: #{forward.3} parent=5 // pred_check
      %p575 = pneg %p574
    $region94: #{forward.3} parent=5 // pred_check_branch
      %577 = sbr.rel (%p575) target = $region96
    $region95: #{forward.3} parent=5 // pred_region
      // Predicated region
      $region97: #{forward.3} parent=95 // pred_check
        %p578 = pneg %p47
      $region98: #{forward.3} parent=95 // pred_check_branch
        %580 = sbr.rel (%p578) target = $region100
      $region99: #{forward.3} parent=95 // pred_region
        %p581 = scmp.lt.s32.totalorder %s27, 1
        %s582 = scalar_select %p581, %s27, 1
        %s583 = smul.addr %s582, 8
        %s584 = scalar_lea.vmem %s0, %s583
      $region100: #{forward.3} parent=95 // pred_fallthru
        _
    $region96: #{forward.3} parent=5 // pred_fallthru
      _
    %p585 = scmp.le.s32.totalorder 1, %s27
    %p586 = scmp.lt.s32.totalorder %s27, 3
    %p587 = pnand %p585, %p586
    %p588 = pneg %p587
    // Predicated region
    $region101: #{forward.3} parent=5 // pred_check
      _
    $region102: #{forward.3} parent=5 // pred_check_branch
      %590 = sbr.rel (%p587) target = $region104
    $region103: #{forward.3} parent=5 // pred_region
      %s591 = ssub.s32 %s27, 1
      %p592 = scmp.lt.s32.totalorder %s32, 1
      %s593 = scalar_select %p592, %s32, 1
      %s594 = smul.addr %s593, 8
      %s595 = scalar_lea.vmem %s0, %s594
      %p596 = pneg %p53
      %p597 = pneg %p50
      %p598 = pneg %p74
      %p599 = pneg %p71
      %p600 = pneg %p95
      %p601 = pneg %p92
      %p602 = pneg %p116
      %p603 = pneg %p113
      %p604 = pneg %p137
      %p605 = pneg %p134
      %p606 = pneg %p158
      %p607 = pneg %p155
      %p608 = pneg %p179
      %p609 = pneg %p176
      %p610 = pneg %p200
      %p611 = pneg %p197
      %p612 = pneg %p221
      %p613 = pneg %p218
      %p614 = pneg %p242
      %p615 = pneg %p239
      %p616 = pneg %p263
      %p617 = pneg %p260
      %p618 = pneg %p284
      %p619 = pneg %p281
      %p620 = pneg %p305
      %p621 = pneg %p302
      %p622 = pneg %p326
      %p623 = pneg %p323
      %p624 = pneg %p347
      %p625 = pneg %p344
      %p626 = pneg %p368
      %p627 = pneg %p365
      %p628 = pneg %p389
      %p629 = pneg %p386
      %p630 = pneg %p410
      %p631 = pneg %p407
      %p632 = pneg %p431
      %p633 = pneg %p428
      %p634 = pneg %p452
      %p635 = pneg %p449
      %p636 = pneg %p473
      %p637 = pneg %p470
      %p638 = pneg %p499
      %p639 = pneg %p496
      %p640 = scmp.lt.s32.totalorder %s32, 1
      %s641 = scalar_select %p640, %s32, 1
      %s642 = smul.addr %s641, 8
      %s643 = scalar_lea.vmem %s21, %s642
      %p644 = scmp.lt.s32.totalorder %s32, 1
      %s645 = scalar_select %p644, %s32, 1
      %s646 = smul.addr %s645, 8
      %s647 = scalar_lea.vmem %s0, %s646
      %p648 = scmp.lt.s32.totalorder %s32, 1
      %s649 = scalar_select %p648, %s32, 1
      %s650 = smul.addr %s649, 8
      %s651 = scalar_lea.vmem %s21, %s650
      %v652 = vld [vmem:[%s647] sm:$0xff]
      %v653 = vld [vmem:[%s1] sm:$0xff]
      %v654 = vld [vmem:[%s1 + $0x8] sm:$0xff]
      %v655 = vld [vmem:[%s1 + $0x10] sm:$0xff]
      %v656 = vld [vmem:[%s1 + $0x18] sm:$0xff]
      %v657 = vld [vmem:[%s1 + $0x20] sm:$0xff]
      %v658 = vld [vmem:[%s1 + $0x28] sm:$0xff]
      %v659 = vld [vmem:[%s1 + $0x30] sm:$0xff]
      %v660 = vld [vmem:[%s1 + $0x38] sm:$0xff]
      %v661 = vld [vmem:[%s1 + $0x40] sm:$0xff]
      %v662 = vld [vmem:[%s1 + $0x48] sm:$0xff]
      %v664 = vrot.slane %v652, 6
      %vm666 = vcmask 1041408
      %v667 = vsel %vm666, 0.0, %v664
      %v668 = vsel %vm666, %v664, 0.0
      %vm671 = vcmask 1046528
      %v672 = vrot.slane %v667, 1
      %v673 = vrot.slane %v668, 1
      %v674 = vsel %vm671, %v672, %v673
      %675 = vrot.lane.b32.xlu0 %v674, 16
      %v676 = vpop.permute.xlu0 %675
      %vm678 = vcmask 1045504
      %v679 = vrot.slane %v667, 2
      %v680 = vrot.slane %v668, 2
      %v681 = vsel %vm678, %v679, %v680
      %682 = vrot.lane.b32.xlu0 %v681, 32
      %v683 = vpop.permute.xlu0 %682
      %vm685 = vcmask 1044480
      %v686 = vrot.slane %v667, 3
      %v687 = vrot.slane %v668, 3
      %v688 = vsel %vm685, %v686, %v687
      %689 = vrot.lane.b32.xlu0 %v688, 48
      %v690 = vpop.permute.xlu0 %689
      %vm692 = vcmask 1043456
      %v693 = vrot.slane %v667, 4
      %v694 = vrot.slane %v668, 4
      %v695 = vsel %vm692, %v693, %v694
      %696 = vrot.lane.b32.xlu0 %v695, 64
      %v697 = vpop.permute.xlu0 %696
      %vm699 = vcmask 130048
      %v700 = vsel %vm699, %v667, %v676
      %vm701 = vcmask 261120
      %v702 = vsel %vm701, %v700, %v683
      %vm703 = vcmask 392192
      %v704 = vsel %vm703, %v702, %v690
      %vm705 = vcmask 523264
      %v706 = vsel %vm705, %v704, %v697
      %v707 = vld [vmem:[%s2] sm:$0x1]
      %v709 = vlaneseq
      %v710 = vshrl.u32 %v709, 7
      %v711 = vsub.s32 0, %v710
      %v712 = vrot.slane %v707, %v711
      %vm714 = vcmask 654336
      %v716 = vsel %vm714, %v706, 0
      %718 = vmatprep.subr.mxu0 0.0
      %719 = vmatpush1.msra.mxu0 0.0
      %720 = vmatprep.subr.mxu0 0.0
      %721 = vmatpush1.msra.mxu0 0.0
      %722 = vmatprep.subr.mxu0 0.0
      %723 = vmatpush1.msra.mxu0 0.0
      %724 = vmatprep.subr.mxu0 0.0
      %725 = vmatpush1.msra.mxu0 0.0
      %726 = vmatprep.subr.mxu0 0.0
      %727 = vmatpush1.msra.mxu0 0.0
      %728 = vmatprep.subr.mxu0 0.0
      %729 = vmatpush1.msra.mxu0 0.0
      %730 = vmatprep.subr.mxu0 0.0
      %731 = vmatpush1.msra.mxu0 %v662
      %732 = vmatprep.subr.mxu0 0.0
      %733 = vmatpush1.msra.mxu0 %v661
      %734 = vmatprep.subr.mxu0 0.0
      %735 = vmatpush1.msra.mxu0 %v660
      %736 = vmatprep.subr.mxu0 0.0
      %737 = vmatpush1.msra.mxu0 %v659
      %738 = vmatprep.subr.mxu0 0.0
      %739 = vmatpush1.msra.mxu0 %v658
      %740 = vmatprep.subr.mxu0 0.0
      %741 = vmatpush1.msra.mxu0 %v657
      %742 = vmatprep.subr.mxu0 0.0
      %743 = vmatpush1.msra.mxu0 %v656
      %744 = vmatprep.subr.mxu0 0.0
      %745 = vmatpush1.msra.mxu0 %v655
      %746 = vmatprep.subr.mxu0 0.0
      %747 = vmatpush1.msra.mxu0 %v654
      %748 = vmatprep.subr.mxu0 0.0
      %749 = vmatpush1.msra.mxu0 %v653
      %750 = vmatprep.subr.mxu0 0.0
      %751 = vmatpush2.msra.mxu0 0.0
      %752 = vmatprep.subr.mxu0 0.0
      %753 = vmatpush2.msra.mxu0 0.0
      %754 = vmatprep.subr.mxu0 0.0
      %755 = vmatpush2.msra.mxu0 0.0
      %756 = vmatprep.subr.mxu0 0.0
      %757 = vmatpush2.msra.mxu0 0.0
      %758 = vmatprep.subr.mxu0 0.0
      %759 = vmatpush2.msra.mxu0 0.0
      %760 = vmatprep.subr.mxu0 0.0
      %761 = vmatpush2.msra.mxu0 0.0
      %762 = vmatprep.subr.mxu0 0.0
      %763 = vmatpush2.msra.mxu0 0.0
      %764 = vmatprep.subr.mxu0 0.0
      %765 = vmatpush2.msra.mxu0 0.0
      %766 = vmatprep.subr.mxu0 0.0
      %767 = vmatpush2.msra.mxu0 0.0
      %768 = vmatprep.subr.mxu0 0.0
      %769 = vmatpush2.msra.mxu0 0.0
      %770 = vmatprep.subr.mxu0 0.0
      %771 = vmatpush2.msra.mxu0 0.0
      %772 = vmatprep.subr.mxu0 0.0
      %773 = vmatpush2.msra.mxu0 0.0
      %774 = vmatprep.subr.mxu0 0.0
      %775 = vmatpush2.msra.mxu0 0.0
      %776 = vmatprep.subr.mxu0 0.0
      %777 = vmatpush2.msra.mxu0 0.0
      %778 = vmatprep.subr.mxu0 0.0
      %779 = vmatpush2.msra.mxu0 0.0
      %780 = vmatprep.subr.mxu0 0.0
      %781 = vmatpush2.msra.mxu0 0.0
      %782 = vmatprep.mubr.f32.mxu0 0.0
      %783 = vmatmul.mubr.f32.gmra.mxu0 %v716
      %v784 = vpop.f32.mrf.mxu0
      %v785 = vadd.f32 %v712, %v784
      %v786 = vpop.f32.mrf.mxu0
      %787 = vdwg.mxu0
      %v788 = vld [vmem:[%s3] sm:$0x1]
      %v790 = vlaneseq
      %v791 = vshrl.u32 %v790, 7
      %v792 = vsub.s32 0, %v791
      %v793 = vrot.slane %v788, %v792
      %v795 = vmul.f32 %v785, %v793
      %v796 = vld [vmem:[%s4] sm:$0x1]
      %v798 = vlaneseq
      %v799 = vshrl.u32 %v798, 7
      %v800 = vsub.s32 0, %v799
      %v801 = vrot.slane %v796, %v800
      %v803 = vadd.f32 %v795, %v801
      %v804 = vtanh.pop %v803
      %v805 = vld [vmem:[%s5] sm:$0xff]
      %v806 = vld [vmem:[%s5 + $0x8] sm:$0xff]
      %v807 = vld [vmem:[%s5 + $0x10] sm:$0xff]
      %v808 = vld [vmem:[%s5 + $0x18] sm:$0xff]
      %v809 = vld [vmem:[%s5 + $0x20] sm:$0xff]
      %v810 = vld [vmem:[%s5 + $0x28] sm:$0xff]
      %v811 = vld [vmem:[%s5 + $0x30] sm:$0xff]
      %v812 = vld [vmem:[%s5 + $0x38] sm:$0xff]
      %v813 = vld [vmem:[%s5 + $0x40] sm:$0xff]
      %v814 = vld [vmem:[%s5 + $0x48] sm:$0xff]
      %v815 = vld [vmem:[%s5 + $0x50] sm:$0xff]
      %v816 = vld [vmem:[%s5 + $0x58] sm:$0xff]
      %v817 = vld [vmem:[%s5 + $0x60] sm:$0xff]
      %v818 = vld [vmem:[%s5 + $0x68] sm:$0xff]
      %v819 = vld [vmem:[%s5 + $0x70] sm:$0xff]
      %v820 = vld [vmem:[%s5 + $0x78] sm:$0xff]
      %v821 = vld [vmem:[%s5 + $0x80] sm:$0xff]
      %v822 = vld [vmem:[%s5 + $0x88] sm:$0xff]
      %v823 = vld [vmem:[%s5 + $0x90] sm:$0xff]
      %v824 = vld [vmem:[%s5 + $0x98] sm:$0xff]
      %v826 = vrot.slane %v804, 6
      %v828 = vsel %vm666, 0.0, %v826
      %v829 = vsel %vm666, %v826, 0.0
      %v832 = vrot.slane %v828, 1
      %v833 = vrot.slane %v829, 1
      %v834 = vsel %vm671, %v832, %v833
      %835 = vrot.lane.b32.xlu0 %v834, 32
      %v836 = vpop.permute.xlu0 %835
      %v838 = vrot.slane %v828, 2
      %v839 = vrot.slane %v829, 2
      %v840 = vsel %vm678, %v838, %v839
      %841 = vrot.lane.b32.xlu0 %v840, 64
      %v842 = vpop.permute.xlu0 %841
      %v844 = vrot.slane %v828, 3
      %v845 = vrot.slane %v829, 3
      %v846 = vsel %vm685, %v844, %v845
      %847 = vrot.lane.b32.xlu0 %v846, 96
      %v848 = vpop.permute.xlu0 %847
      %v850 = vrot.slane %v828, 4
      %v851 = vrot.slane %v829, 4
      %v852 = vsel %vm692, %v850, %v851
      %v853 = vsel %vm701, %v828, %v836
      %v854 = vsel %vm705, %v853, %v842
      %vm855 = vcmask 785408
      %v856 = vsel %vm855, %v854, %v848
      %v857 = vld [vmem:[%s6] sm:$0x1]
      %v859 = vlaneseq
      %v860 = vshrl.u32 %v859, 7
      %v861 = vsub.s32 0, %v860
      %v862 = vrot.slane %v857, %v861
      %v864 = vsel %vm701, %v852, 0
      %866 = vmatprep.subr.mxu0 0.0
      %867 = vmatpush1.msra.mxu0 %v820
      %868 = vmatprep.subr.mxu0 0.0
      %869 = vmatpush1.msra.mxu0 %v819
      %870 = vmatprep.subr.mxu0 0.0
      %871 = vmatpush1.msra.mxu0 %v818
      %872 = vmatprep.subr.mxu0 0.0
      %873 = vmatpush1.msra.mxu0 %v817
      %874 = vmatprep.subr.mxu0 0.0
      %875 = vmatpush1.msra.mxu0 %v816
      %876 = vmatprep.subr.mxu0 0.0
      %877 = vmatpush1.msra.mxu0 %v815
      %878 = vmatprep.subr.mxu0 0.0
      %879 = vmatpush1.msra.mxu0 %v814
      %880 = vmatprep.subr.mxu0 0.0
      %881 = vmatpush1.msra.mxu0 %v813
      %882 = vmatprep.subr.mxu0 0.0
      %883 = vmatpush1.msra.mxu0 %v812
      %884 = vmatprep.subr.mxu0 0.0
      %885 = vmatpush1.msra.mxu0 %v811
      %886 = vmatprep.subr.mxu0 0.0
      %887 = vmatpush1.msra.mxu0 %v810
      %888 = vmatprep.subr.mxu0 0.0
      %889 = vmatpush1.msra.mxu0 %v809
      %890 = vmatprep.subr.mxu0 0.0
      %891 = vmatpush1.msra.mxu0 %v808
      %892 = vmatprep.subr.mxu0 0.0
      %893 = vmatpush1.msra.mxu0 %v807
      %894 = vmatprep.subr.mxu0 0.0
      %895 = vmatpush1.msra.mxu0 %v806
      %896 = vmatprep.subr.mxu0 0.0
      %897 = vmatpush1.msra.mxu0 %v805
      %898 = vmatprep.subr.mxu0 0.0
      %899 = vmatpush2.msra.mxu0 0.0
      %900 = vmatprep.subr.mxu0 0.0
      %901 = vmatpush2.msra.mxu0 0.0
      %902 = vmatprep.subr.mxu0 0.0
      %903 = vmatpush2.msra.mxu0 0.0
      %904 = vmatprep.subr.mxu0 0.0
      %905 = vmatpush2.msra.mxu0 0.0
      %906 = vmatprep.subr.mxu0 0.0
      %907 = vmatpush2.msra.mxu0 0.0
      %908 = vmatprep.subr.mxu0 0.0
      %909 = vmatpush2.msra.mxu0 0.0
      %910 = vmatprep.subr.mxu0 0.0
      %911 = vmatpush2.msra.mxu0 0.0
      %912 = vmatprep.subr.mxu0 0.0
      %913 = vmatpush2.msra.mxu0 0.0
      %914 = vmatprep.subr.mxu0 0.0
      %915 = vmatpush2.msra.mxu0 0.0
      %916 = vmatprep.subr.mxu0 0.0
      %917 = vmatpush2.msra.mxu0 0.0
      %918 = vmatprep.subr.mxu0 0.0
      %919 = vmatpush2.msra.mxu0 0.0
      %920 = vmatprep.subr.mxu0 0.0
      %921 = vmatpush2.msra.mxu0 0.0
      %922 = vmatprep.subr.mxu0 0.0
      %923 = vmatpush2.msra.mxu0 %v824
      %924 = vmatprep.subr.mxu0 0.0
      %925 = vmatpush2.msra.mxu0 %v823
      %926 = vmatprep.subr.mxu0 0.0
      %927 = vmatpush2.msra.mxu0 %v822
      %928 = vmatprep.subr.mxu0 0.0
      %929 = vmatpush2.msra.mxu0 %v821
      %930 = vmatprep.mubr.f32.mxu0 %v864
      %931 = vmatmul.mubr.f32.gmra.mxu0 %v856
      %v932 = vpop.f32.mrf.mxu0
      %v933 = vadd.f32 %v862, %v932
      %v934 = vpop.f32.mrf.mxu0
      %935 = vdwg.mxu0
      %v936 = vld [vmem:[%s7] sm:$0x1]
      %v938 = vlaneseq
      %v939 = vshrl.u32 %v938, 7
      %v940 = vsub.s32 0, %v939
      %v941 = vrot.slane %v936, %v940
      %v943 = vmul.f32 %v933, %v941
      %v944 = vld [vmem:[%s8] sm:$0x1]
      %v946 = vlaneseq
      %v947 = vshrl.u32 %v946, 7
      %v948 = vsub.s32 0, %v947
      %v949 = vrot.slane %v944, %v948
      %v951 = vadd.f32 %v943, %v949
      %v952 = vtanh.pop %v951
      %v953 = vld [vmem:[%s9] sm:$0xff]
      %v954 = vld [vmem:[%s9 + $0x8] sm:$0xff]
      %v955 = vld [vmem:[%s9 + $0x10] sm:$0xff]
      %v956 = vld [vmem:[%s9 + $0x18] sm:$0xff]
      %v957 = vld [vmem:[%s9 + $0x20] sm:$0xff]
      %v958 = vld [vmem:[%s9 + $0x28] sm:$0xff]
      %v959 = vld [vmem:[%s9 + $0x30] sm:$0xff]
      %v960 = vld [vmem:[%s9 + $0x38] sm:$0xff]
      %v961 = vld [vmem:[%s9 + $0x40] sm:$0xff]
      %v962 = vld [vmem:[%s9 + $0x48] sm:$0xff]
      %v963 = vld [vmem:[%s9 + $0x50] sm:$0xff]
      %v964 = vld [vmem:[%s9 + $0x58] sm:$0xff]
      %v965 = vld [vmem:[%s9 + $0x60] sm:$0xff]
      %v966 = vld [vmem:[%s9 + $0x68] sm:$0xff]
      %v967 = vld [vmem:[%s9 + $0x70] sm:$0xff]
      %v968 = vld [vmem:[%s9 + $0x78] sm:$0xff]
      %v969 = vld [vmem:[%s9 + $0x80] sm:$0xff]
      %v970 = vld [vmem:[%s9 + $0x88] sm:$0xff]
      %v971 = vld [vmem:[%s9 + $0x90] sm:$0xff]
      %v972 = vld [vmem:[%s9 + $0x98] sm:$0xff]
      %v974 = vrot.slane %v952, 6
      %v976 = vsel %vm666, 0.0, %v974
      %v977 = vsel %vm666, %v974, 0.0
      %v980 = vrot.slane %v976, 1
      %v981 = vrot.slane %v977, 1
      %v982 = vsel %vm671, %v980, %v981
      %983 = vrot.lane.b32.xlu0 %v982, 32
      %v984 = vpop.permute.xlu0 %983
      %v986 = vrot.slane %v976, 2
      %v987 = vrot.slane %v977, 2
      %v988 = vsel %vm678, %v986, %v987
      %989 = vrot.lane.b32.xlu0 %v988, 64
      %v990 = vpop.permute.xlu0 %989
      %v992 = vrot.slane %v976, 3
      %v993 = vrot.slane %v977, 3
      %v994 = vsel %vm685, %v992, %v993
      %995 = vrot.lane.b32.xlu0 %v994, 96
      %v996 = vpop.permute.xlu0 %995
      %v998 = vrot.slane %v976, 4
      %v999 = vrot.slane %v977, 4
      %v1000 = vsel %vm692, %v998, %v999
      %v1001 = vsel %vm701, %v976, %v984
      %v1002 = vsel %vm705, %v1001, %v990
      %v1003 = vsel %vm855, %v1002, %v996
      %v1004 = vld [vmem:[%s10] sm:$0x1]
      %v1006 = vlaneseq
      %v1007 = vshrl.u32 %v1006, 7
      %v1008 = vsub.s32 0, %v1007
      %v1009 = vrot.slane %v1004, %v1008
      %v1011 = vsel %vm701, %v1000, 0
      %1013 = vmatprep.subr.mxu0 0.0
      %1014 = vmatpush1.msra.mxu0 %v968
      %1015 = vmatprep.subr.mxu0 0.0
      %1016 = vmatpush1.msra.mxu0 %v967
      %1017 = vmatprep.subr.mxu0 0.0
      %1018 = vmatpush1.msra.mxu0 %v966
      %1019 = vmatprep.subr.mxu0 0.0
      %1020 = vmatpush1.msra.mxu0 %v965
      %1021 = vmatprep.subr.mxu0 0.0
      %1022 = vmatpush1.msra.mxu0 %v964
      %1023 = vmatprep.subr.mxu0 0.0
      %1024 = vmatpush1.msra.mxu0 %v963
      %1025 = vmatprep.subr.mxu0 0.0
      %1026 = vmatpush1.msra.mxu0 %v962
      %1027 = vmatprep.subr.mxu0 0.0
      %1028 = vmatpush1.msra.mxu0 %v961
      %1029 = vmatprep.subr.mxu0 0.0
      %1030 = vmatpush1.msra.mxu0 %v960
      %1031 = vmatprep.subr.mxu0 0.0
      %1032 = vmatpush1.msra.mxu0 %v959
      %1033 = vmatprep.subr.mxu0 0.0
      %1034 = vmatpush1.msra.mxu0 %v958
      %1035 = vmatprep.subr.mxu0 0.0
      %1036 = vmatpush1.msra.mxu0 %v957
      %1037 = vmatprep.subr.mxu0 0.0
      %1038 = vmatpush1.msra.mxu0 %v956
      %1039 = vmatprep.subr.mxu0 0.0
      %1040 = vmatpush1.msra.mxu0 %v955
      %1041 = vmatprep.subr.mxu0 0.0
      %1042 = vmatpush1.msra.mxu0 %v954
      %1043 = vmatprep.subr.mxu0 0.0
      %1044 = vmatpush1.msra.mxu0 %v953
      %1045 = vmatprep.subr.mxu0 0.0
      %1046 = vmatpush2.msra.mxu0 0.0
      %1047 = vmatprep.subr.mxu0 0.0
      %1048 = vmatpush2.msra.mxu0 0.0
      %1049 = vmatprep.subr.mxu0 0.0
      %1050 = vmatpush2.msra.mxu0 0.0
      %1051 = vmatprep.subr.mxu0 0.0
      %1052 = vmatpush2.msra.mxu0 0.0
      %1053 = vmatprep.subr.mxu0 0.0
      %1054 = vmatpush2.msra.mxu0 0.0
      %1055 = vmatprep.subr.mxu0 0.0
      %1056 = vmatpush2.msra.mxu0 0.0
      %1057 = vmatprep.subr.mxu0 0.0
      %1058 = vmatpush2.msra.mxu0 0.0
      %1059 = vmatprep.subr.mxu0 0.0
      %1060 = vmatpush2.msra.mxu0 0.0
      %1061 = vmatprep.subr.mxu0 0.0
      %1062 = vmatpush2.msra.mxu0 0.0
      %1063 = vmatprep.subr.mxu0 0.0
      %1064 = vmatpush2.msra.mxu0 0.0
      %1065 = vmatprep.subr.mxu0 0.0
      %1066 = vmatpush2.msra.mxu0 0.0
      %1067 = vmatprep.subr.mxu0 0.0
      %1068 = vmatpush2.msra.mxu0 0.0
      %1069 = vmatprep.subr.mxu0 0.0
      %1070 = vmatpush2.msra.mxu0 %v972
      %1071 = vmatprep.subr.mxu0 0.0
      %1072 = vmatpush2.msra.mxu0 %v971
      %1073 = vmatprep.subr.mxu0 0.0
      %1074 = vmatpush2.msra.mxu0 %v970
      %1075 = vmatprep.subr.mxu0 0.0
      %1076 = vmatpush2.msra.mxu0 %v969
      %1077 = vmatprep.mubr.f32.mxu0 %v1011
      %1078 = vmatmul.mubr.f32.gmra.mxu0 %v1003
      %v1079 = vpop.f32.mrf.mxu0
      %v1080 = vadd.f32 %v1009, %v1079
      %v1081 = vpop.f32.mrf.mxu0
      %1082 = vdwg.mxu0
      %v1083 = vld [vmem:[%s11] sm:$0x1]
      %v1085 = vlaneseq
      %v1086 = vshrl.u32 %v1085, 7
      %v1087 = vsub.s32 0, %v1086
      %v1088 = vrot.slane %v1083, %v1087
      %v1090 = vmul.f32 %v1080, %v1088
      %v1091 = vld [vmem:[%s12] sm:$0x1]
      %v1093 = vlaneseq
      %v1094 = vshrl.u32 %v1093, 7
      %v1095 = vsub.s32 0, %v1094
      %v1096 = vrot.slane %v1091, %v1095
      %v1098 = vadd.f32 %v1090, %v1096
      %v1099 = vtanh.pop %v1098
      %v1100 = vld [vmem:[%s13] sm:$0xff]
      %v1101 = vld [vmem:[%s13 + $0x8] sm:$0xff]
      %v1102 = vld [vmem:[%s13 + $0x10] sm:$0xff]
      %v1103 = vld [vmem:[%s13 + $0x18] sm:$0xff]
      %v1104 = vld [vmem:[%s13 + $0x20] sm:$0xff]
      %v1105 = vld [vmem:[%s13 + $0x28] sm:$0xff]
      %v1106 = vld [vmem:[%s13 + $0x30] sm:$0xff]
      %v1107 = vld [vmem:[%s13 + $0x38] sm:$0xff]
      %v1108 = vld [vmem:[%s13 + $0x40] sm:$0xff]
      %v1109 = vld [vmem:[%s13 + $0x48] sm:$0xff]
      %v1110 = vld [vmem:[%s13 + $0x50] sm:$0xff]
      %v1111 = vld [vmem:[%s13 + $0x58] sm:$0xff]
      %v1112 = vld [vmem:[%s13 + $0x60] sm:$0xff]
      %v1113 = vld [vmem:[%s13 + $0x68] sm:$0xff]
      %v1114 = vld [vmem:[%s13 + $0x70] sm:$0xff]
      %v1115 = vld [vmem:[%s13 + $0x78] sm:$0xff]
      %v1116 = vld [vmem:[%s13 + $0x80] sm:$0xff]
      %v1117 = vld [vmem:[%s13 + $0x88] sm:$0xff]
      %v1118 = vld [vmem:[%s13 + $0x90] sm:$0xff]
      %v1119 = vld [vmem:[%s13 + $0x98] sm:$0xff]
      %v1121 = vrot.slane %v1099, 6
      %v1123 = vsel %vm666, 0.0, %v1121
      %v1124 = vsel %vm666, %v1121, 0.0
      %v1127 = vrot.slane %v1123, 1
      %v1128 = vrot.slane %v1124, 1
      %v1129 = vsel %vm671, %v1127, %v1128
      %1130 = vrot.lane.b32.xlu0 %v1129, 32
      %v1131 = vpop.permute.xlu0 %1130
      %v1133 = vrot.slane %v1123, 2
      %v1134 = vrot.slane %v1124, 2
      %v1135 = vsel %vm678, %v1133, %v1134
      %1136 = vrot.lane.b32.xlu0 %v1135, 64
      %v1137 = vpop.permute.xlu0 %1136
      %v1139 = vrot.slane %v1123, 3
      %v1140 = vrot.slane %v1124, 3
      %v1141 = vsel %vm685, %v1139, %v1140
      %1142 = vrot.lane.b32.xlu0 %v1141, 96
      %v1143 = vpop.permute.xlu0 %1142
      %v1145 = vrot.slane %v1123, 4
      %v1146 = vrot.slane %v1124, 4
      %v1147 = vsel %vm692, %v1145, %v1146
      %v1148 = vsel %vm701, %v1123, %v1131
      %v1149 = vsel %vm705, %v1148, %v1137
      %v1150 = vsel %vm855, %v1149, %v1143
      %v1151 = vld [vmem:[%s14] sm:$0x1]
      %v1153 = vlaneseq
      %v1154 = vshrl.u32 %v1153, 7
      %v1155 = vsub.s32 0, %v1154
      %v1156 = vrot.slane %v1151, %v1155
      %v1158 = vsel %vm701, %v1147, 0
      %1160 = vmatprep.subr.mxu0 0.0
      %1161 = vmatpush1.msra.mxu0 %v1115
      %1162 = vmatprep.subr.mxu0 0.0
      %1163 = vmatpush1.msra.mxu0 %v1114
      %1164 = vmatprep.subr.mxu0 0.0
      %1165 = vmatpush1.msra.mxu0 %v1113
      %1166 = vmatprep.subr.mxu0 0.0
      %1167 = vmatpush1.msra.mxu0 %v1112
      %1168 = vmatprep.subr.mxu0 0.0
      %1169 = vmatpush1.msra.mxu0 %v1111
      %1170 = vmatprep.subr.mxu0 0.0
      %1171 = vmatpush1.msra.mxu0 %v1110
      %1172 = vmatprep.subr.mxu0 0.0
      %1173 = vmatpush1.msra.mxu0 %v1109
      %1174 = vmatprep.subr.mxu0 0.0
      %1175 = vmatpush1.msra.mxu0 %v1108
      %1176 = vmatprep.subr.mxu0 0.0
      %1177 = vmatpush1.msra.mxu0 %v1107
      %1178 = vmatprep.subr.mxu0 0.0
      %1179 = vmatpush1.msra.mxu0 %v1106
      %1180 = vmatprep.subr.mxu0 0.0
      %1181 = vmatpush1.msra.mxu0 %v1105
      %1182 = vmatprep.subr.mxu0 0.0
      %1183 = vmatpush1.msra.mxu0 %v1104
      %1184 = vmatprep.subr.mxu0 0.0
      %1185 = vmatpush1.msra.mxu0 %v1103
      %1186 = vmatprep.subr.mxu0 0.0
      %1187 = vmatpush1.msra.mxu0 %v1102
      %1188 = vmatprep.subr.mxu0 0.0
      %1189 = vmatpush1.msra.mxu0 %v1101
      %1190 = vmatprep.subr.mxu0 0.0
      %1191 = vmatpush1.msra.mxu0 %v1100
      %1192 = vmatprep.subr.mxu0 0.0
      %1193 = vmatpush2.msra.mxu0 0.0
      %1194 = vmatprep.subr.mxu0 0.0
      %1195 = vmatpush2.msra.mxu0 0.0
      %1196 = vmatprep.subr.mxu0 0.0
      %1197 = vmatpush2.msra.mxu0 0.0
      %1198 = vmatprep.subr.mxu0 0.0
      %1199 = vmatpush2.msra.mxu0 0.0
      %1200 = vmatprep.subr.mxu0 0.0
      %1201 = vmatpush2.msra.mxu0 0.0
      %1202 = vmatprep.subr.mxu0 0.0
      %1203 = vmatpush2.msra.mxu0 0.0
      %1204 = vmatprep.subr.mxu0 0.0
      %1205 = vmatpush2.msra.mxu0 0.0
      %1206 = vmatprep.subr.mxu0 0.0
      %1207 = vmatpush2.msra.mxu0 0.0
      %1208 = vmatprep.subr.mxu0 0.0
      %1209 = vmatpush2.msra.mxu0 0.0
      %1210 = vmatprep.subr.mxu0 0.0
      %1211 = vmatpush2.msra.mxu0 0.0
      %1212 = vmatprep.subr.mxu0 0.0
      %1213 = vmatpush2.msra.mxu0 0.0
      %1214 = vmatprep.subr.mxu0 0.0
      %1215 = vmatpush2.msra.mxu0 0.0
      %1216 = vmatprep.subr.mxu0 0.0
      %1217 = vmatpush2.msra.mxu0 %v1119
      %1218 = vmatprep.subr.mxu0 0.0
      %1219 = vmatpush2.msra.mxu0 %v1118
      %1220 = vmatprep.subr.mxu0 0.0
      %1221 = vmatpush2.msra.mxu0 %v1117
      %1222 = vmatprep.subr.mxu0 0.0
      %1223 = vmatpush2.msra.mxu0 %v1116
      %1224 = vmatprep.mubr.f32.mxu0 %v1158
      %1225 = vmatmul.mubr.f32.gmra.mxu0 %v1150
      %v1226 = vpop.f32.mrf.mxu0
      %v1227 = vadd.f32 %v1156, %v1226
      %v1228 = vpop.f32.mrf.mxu0
      %1229 = vdwg.mxu0
      %v1230 = vld [vmem:[%s15] sm:$0x1]
      %v1232 = vlaneseq
      %v1233 = vshrl.u32 %v1232, 7
      %v1234 = vsub.s32 0, %v1233
      %v1235 = vrot.slane %v1230, %v1234
      %v1237 = vmul.f32 %v1227, %v1235
      %v1238 = vld [vmem:[%s16] sm:$0x1]
      %v1240 = vlaneseq
      %v1241 = vshrl.u32 %v1240, 7
      %v1242 = vsub.s32 0, %v1241
      %v1243 = vrot.slane %v1238, %v1242
      %v1245 = vadd.f32 %v1237, %v1243
      %v1246 = vtanh.pop %v1245
      %v1247 = vld [vmem:[%s17] sm:$0xff]
      %v1248 = vld [vmem:[%s17 + $0x8] sm:$0xff]
      %v1249 = vld [vmem:[%s17 + $0x10] sm:$0xff]
      %v1250 = vld [vmem:[%s17 + $0x18] sm:$0xff]
      %v1251 = vld [vmem:[%s17 + $0x20] sm:$0xff]
      %v1252 = vld [vmem:[%s17 + $0x28] sm:$0xff]
      %v1253 = vld [vmem:[%s17 + $0x30] sm:$0xff]
      %v1254 = vld [vmem:[%s17 + $0x38] sm:$0xff]
      %v1255 = vld [vmem:[%s17 + $0x40] sm:$0xff]
      %v1256 = vld [vmem:[%s17 + $0x48] sm:$0xff]
      %v1257 = vld [vmem:[%s17 + $0x50] sm:$0xff]
      %v1258 = vld [vmem:[%s17 + $0x58] sm:$0xff]
      %v1259 = vld [vmem:[%s17 + $0x60] sm:$0xff]
      %v1260 = vld [vmem:[%s17 + $0x68] sm:$0xff]
      %v1261 = vld [vmem:[%s17 + $0x70] sm:$0xff]
      %v1262 = vld [vmem:[%s17 + $0x78] sm:$0xff]
      %v1263 = vld [vmem:[%s17 + $0x80] sm:$0xff]
      %v1264 = vld [vmem:[%s17 + $0x88] sm:$0xff]
      %v1265 = vld [vmem:[%s17 + $0x90] sm:$0xff]
      %v1266 = vld [vmem:[%s17 + $0x98] sm:$0xff]
      %v1268 = vrot.slane %v1246, 6
      %v1270 = vsel %vm666, 0.0, %v1268
      %v1271 = vsel %vm666, %v1268, 0.0
      %v1274 = vrot.slane %v1270, 1
      %v1275 = vrot.slane %v1271, 1
      %v1276 = vsel %vm671, %v1274, %v1275
      %1277 = vrot.lane.b32.xlu0 %v1276, 32
      %v1278 = vpop.permute.xlu0 %1277
      %v1280 = vrot.slane %v1270, 2
      %v1281 = vrot.slane %v1271, 2
      %v1282 = vsel %vm678, %v1280, %v1281
      %1283 = vrot.lane.b32.xlu0 %v1282, 64
      %v1284 = vpop.permute.xlu0 %1283
      %v1286 = vrot.slane %v1270, 3
      %v1287 = vrot.slane %v1271, 3
      %v1288 = vsel %vm685, %v1286, %v1287
      %1289 = vrot.lane.b32.xlu0 %v1288, 96
      %v1290 = vpop.permute.xlu0 %1289
      %v1292 = vrot.slane %v1270, 4
      %v1293 = vrot.slane %v1271, 4
      %v1294 = vsel %vm692, %v1292, %v1293
      %v1295 = vsel %vm701, %v1270, %v1278
      %v1296 = vsel %vm705, %v1295, %v1284
      %v1297 = vsel %vm855, %v1296, %v1290
      %v1298 = vld [vmem:[%s18] sm:$0x1]
      %v1300 = vlaneseq
      %v1301 = vshrl.u32 %v1300, 7
      %v1302 = vsub.s32 0, %v1301
      %v1303 = vrot.slane %v1298, %v1302
      %v1305 = vsel %vm701, %v1294, 0
      %1307 = vmatprep.subr.mxu0 0.0
      %1308 = vmatpush1.msra.mxu0 %v1262
      %1309 = vmatprep.subr.mxu0 0.0
      %1310 = vmatpush1.msra.mxu0 %v1261
      %1311 = vmatprep.subr.mxu0 0.0
      %1312 = vmatpush1.msra.mxu0 %v1260
      %1313 = vmatprep.subr.mxu0 0.0
      %1314 = vmatpush1.msra.mxu0 %v1259
      %1315 = vmatprep.subr.mxu0 0.0
      %1316 = vmatpush1.msra.mxu0 %v1258
      %1317 = vmatprep.subr.mxu0 0.0
      %1318 = vmatpush1.msra.mxu0 %v1257
      %1319 = vmatprep.subr.mxu0 0.0
      %1320 = vmatpush1.msra.mxu0 %v1256
      %1321 = vmatprep.subr.mxu0 0.0
      %1322 = vmatpush1.msra.mxu0 %v1255
      %1323 = vmatprep.subr.mxu0 0.0
      %1324 = vmatpush1.msra.mxu0 %v1254
      %1325 = vmatprep.subr.mxu0 0.0
      %1326 = vmatpush1.msra.mxu0 %v1253
      %1327 = vmatprep.subr.mxu0 0.0
      %1328 = vmatpush1.msra.mxu0 %v1252
      %1329 = vmatprep.subr.mxu0 0.0
      %1330 = vmatpush1.msra.mxu0 %v1251
      %1331 = vmatprep.subr.mxu0 0.0
      %1332 = vmatpush1.msra.mxu0 %v1250
      %1333 = vmatprep.subr.mxu0 0.0
      %1334 = vmatpush1.msra.mxu0 %v1249
      %1335 = vmatprep.subr.mxu0 0.0
      %1336 = vmatpush1.msra.mxu0 %v1248
      %1337 = vmatprep.subr.mxu0 0.0
      %1338 = vmatpush1.msra.mxu0 %v1247
      %1339 = vmatprep.subr.mxu0 0.0
      %1340 = vmatpush2.msra.mxu0 0.0
      %1341 = vmatprep.subr.mxu0 0.0
      %1342 = vmatpush2.msra.mxu0 0.0
      %1343 = vmatprep.subr.mxu0 0.0
      %1344 = vmatpush2.msra.mxu0 0.0
      %1345 = vmatprep.subr.mxu0 0.0
      %1346 = vmatpush2.msra.mxu0 0.0
      %1347 = vmatprep.subr.mxu0 0.0
      %1348 = vmatpush2.msra.mxu0 0.0
      %1349 = vmatprep.subr.mxu0 0.0
      %1350 = vmatpush2.msra.mxu0 0.0
      %1351 = vmatprep.subr.mxu0 0.0
      %1352 = vmatpush2.msra.mxu0 0.0
      %1353 = vmatprep.subr.mxu0 0.0
      %1354 = vmatpush2.msra.mxu0 0.0
      %1355 = vmatprep.subr.mxu0 0.0
      %1356 = vmatpush2.msra.mxu0 0.0
      %1357 = vmatprep.subr.mxu0 0.0
      %1358 = vmatpush2.msra.mxu0 0.0
      %1359 = vmatprep.subr.mxu0 0.0
      %1360 = vmatpush2.msra.mxu0 0.0
      %1361 = vmatprep.subr.mxu0 0.0
      %1362 = vmatpush2.msra.mxu0 0.0
      %1363 = vmatprep.subr.mxu0 0.0
      %1364 = vmatpush2.msra.mxu0 %v1266
      %1365 = vmatprep.subr.mxu0 0.0
      %1366 = vmatpush2.msra.mxu0 %v1265
      %1367 = vmatprep.subr.mxu0 0.0
      %1368 = vmatpush2.msra.mxu0 %v1264
      %1369 = vmatprep.subr.mxu0 0.0
      %1370 = vmatpush2.msra.mxu0 %v1263
      %1371 = vmatprep.mubr.f32.mxu0 %v1305
      %1372 = vmatmul.mubr.f32.gmra.mxu0 %v1297
      %v1373 = vpop.f32.mrf.mxu0
      %v1374 = vadd.f32 %v1303, %v1373
      %v1375 = vpop.f32.mrf.mxu0
      %1376 = vdwg.mxu0
      %v1377 = vld [vmem:[%s19] sm:$0x1]
      %v1379 = vlaneseq
      %v1380 = vshrl.u32 %v1379, 7
      %v1381 = vsub.s32 0, %v1380
      %v1382 = vrot.slane %v1377, %v1381
      %v1384 = vmul.f32 %v1374, %v1382
      %v1385 = vld [vmem:[%s20] sm:$0x1]
      %v1387 = vlaneseq
      %v1388 = vshrl.u32 %v1387, 7
      %v1389 = vsub.s32 0, %v1388
      %v1390 = vrot.slane %v1385, %v1389
      %v1392 = vadd.f32 %v1384, %v1390
      %1393 = vst.msk [vmem:[%s651] sm:$0xff] %vm699, %v1392
      %p1394 = scmp.lt.s32.totalorder %s32, 1
      %s1395 = scalar_select %p1394, %s32, 1
      %s1396 = smul.addr %s1395, 8
      %s1397 = scalar_lea.vmem %s21, %s1396
      // Predicated region
      $region105: #{forward.3} parent=103 // pred_check
        %p1398 = pneg %p496
      $region106: #{forward.3} parent=103 // pred_check_branch
        %1400 = sbr.rel (%p1398) target = $region108
      $region107: #{forward.3} parent=103 // pred_region
        _
      $region108: #{forward.3} parent=103 // pred_fallthru
        _
    $region104: #{forward.3} parent=5 // pred_fallthru
      _
    %p1401 = scmp.le.s32.totalorder 2, %s27
    // Predicated region
    $region109: #{forward.3} parent=5 // pred_check
      %p1402 = pneg %p1401
    $region110: #{forward.3} parent=5 // pred_check_branch
      %1404 = sbr.rel (%p1402) target = $region112
    $region111: #{forward.3} parent=5 // pred_region
      %s1405 = ssub.s32 %s27, 2
      // Predicated region
      $region113: #{forward.3} parent=111 // pred_check
        %p1406 = pneg %p502
      $region114: #{forward.3} parent=111 // pred_check_branch
        %1408 = sbr.rel (%p1406) target = $region116
      $region115: #{forward.3} parent=111 // pred_region
        %p1409 = scmp.lt.s32.totalorder %s33, 1
        %s1410 = scalar_select %p1409, %s33, 1
        %s1411 = smul.addr %s1410, 8
        %s1412 = scalar_lea.vmem %s21, %s1411
      $region116: #{forward.3} parent=111 // pred_fallthru
        _
    $region112: #{forward.3} parent=5 // pred_fallthru
      _
  $region6: #{forward.3} parent=0 // loop_footer
    %s31 = sadd.s32 1, %s27
  $region7: #{forward.3} parent=0 // loop_footer_branch
    %26 = sbr.rel target = $region3
  $region8: #{forward.3} parent=0 // loop_exit
    _

// kernel: forward.2
$region0: #{forward.2}
  #allocation0 [shape = 'u32[]', space=smem, size = 0x4, offset = 0x4, fixed_abs, tag = 'smem constant byte address 0x4 - core index']
  #allocation1 [shape = 'u32[144,128]{1,0:T(1,128)}', space=vmem, size = 0x12000, scoped, tag = 'internal scratch']
  %s0 = inlined_call_operand.vmem [shape: f32[8,8,16], index: 0, kind: input, shape index: {}]
  %s1 = inlined_call_operand.vmem [shape: f32[8,8,32], index: 1, kind: input, shape index: {}]
  %s2 = inlined_call_operand.vmem [shape: f32[16,32], index: 2, kind: input, shape index: {}]
  %s3 = inlined_call_operand.vmem [shape: f32[1,32], index: 3, kind: input, shape index: {}]
  %s4 = inlined_call_operand.vmem [shape: f32[32,32], index: 4, kind: input, shape index: {}]
  %s5 = inlined_call_operand.vmem [shape: f32[1,32], index: 5, kind: input, shape index: {}]
  %s6 = inlined_call_operand.vmem [shape: f32[4,32,32], index: 6, kind: input, shape index: {}]
  %s7 = inlined_call_operand.hbm [shape: f32[1,32], index: 7, kind: input, shape index: {}]
  %s8 = inlined_call_operand.vmem [shape: f32[64,128], index: 8, kind: input, shape index: {}]
  %s9 = inlined_call_operand.vmem [shape: f32[32,128], index: 9, kind: input, shape index: {}]
  %s10 = inlined_call_operand.hbm [shape: f32[1,128], index: 10, kind: input, shape index: {}]
  %s11 = inlined_call_operand.vmem [shape: f32[32,128], index: 11, kind: input, shape index: {}]
  %s12 = inlined_call_operand.vmem [shape: f32[32,128], index: 12, kind: input, shape index: {}]
  %s13 = inlined_call_operand.hbm [shape: f32[1,128], index: 13, kind: input, shape index: {}]
  %s14 = inlined_call_operand.vmem [shape: f32[64,17], index: 14, kind: input, shape index: {}]
  %s15 = inlined_call_operand.hbm [shape: f32[1,17], index: 15, kind: input, shape index: {}]
  %s16 = inlined_call_operand.vmem [shape: f32[2,8,32], index: 16, kind: input, shape index: {}]
  %s17 = inlined_call_operand.vmem [shape: f32[2,8,32], index: 17, kind: input, shape index: {}]
  %s18 = inlined_call_operand.vmem [shape: f32[8,8,17], index: 18, kind: output, shape index: {0}]
  %s19 = inlined_call_operand.vmem [shape: f32[8,8,8], index: 19, kind: output, shape index: {1}]
  %20 = xla_tuple %s18, %s19
  %s21 = sld [smem:[#allocation0]]
  $region113: #{forward.2} parent=0
    _
  %s23 = ssub.s32 1, %s21
  %s24 = scalar_select 0, %s23, %s21
  $region1: #{forward.2} parent=0
    #allocation2 [shape = 'u8[512]{0}', space=vmem, size = 0x400, scoped, tag = 'input window, operand 7, single buffered']
    #allocation3 [shape = 's32[1]{0}', space=sflag, size = 0x4, scoped, tag = 'scoped memory for forward.2']
    #allocation4 [shape = 'u8[512]{0}', space=vmem, size = 0x400, scoped, tag = 'input window, operand 10, single buffered']
    #allocation5 [shape = 's32[1]{0}', space=sflag, size = 0x4, scoped, tag = 'scoped memory for forward.2']
    #allocation6 [shape = 'u8[512]{0}', space=vmem, size = 0x400, scoped, tag = 'input window, operand 13, single buffered']
    #allocation7 [shape = 'u8[512]{0}', space=vmem, size = 0x400, scoped, tag = 'input window, operand 15, single buffered']
    #allocation8 [shape = 's32[1]{0}', space=sflag, size = 0x4, scoped, tag = 'scoped memory for forward.2']
    %25 = vsyncpa [#allocation3], 0
    %26 = vsyncpa [#allocation5], 0
    %27 = vsyncpa [#allocation8], 0
    // Predicated region
    $region2: #{forward.2} parent=1 // pred_check
      _
    $region3: #{forward.2} parent=1 // pred_check_branch
      %29 = sbr.rel (0) target = $region5
    $region4: #{forward.2} parent=1 // pred_region
      _
    $region5: #{forward.2} parent=1 // pred_fallthru
      _
    // Predicated region
    $region6: #{forward.2} parent=1 // pred_check
      _
    $region7: #{forward.2} parent=1 // pred_check_branch
      %31 = sbr.rel (0) target = $region9
    $region8: #{forward.2} parent=1 // pred_region
      _
    $region9: #{forward.2} parent=1 // pred_fallthru
      _
    // Predicated region
    $region10: #{forward.2} parent=1 // pred_check
      _
    $region11: #{forward.2} parent=1 // pred_check_branch
      %33 = sbr.rel (0) target = $region13
    $region12: #{forward.2} parent=1 // pred_region
      _
    $region13: #{forward.2} parent=1 // pred_fallthru
      _
    // Predicated region
    $region14: #{forward.2} parent=1 // pred_check
      _
    $region15: #{forward.2} parent=1 // pred_check_branch
      %35 = sbr.rel (0) target = $region17
    $region16: #{forward.2} parent=1 // pred_region
      _
    $region17: #{forward.2} parent=1 // pred_fallthru
      _
    // Predicated region
    $region18: #{forward.2} parent=1 // pred_check
      _
    $region19: #{forward.2} parent=1 // pred_check_branch
      %37 = sbr.rel (0) target = $region21
    $region20: #{forward.2} parent=1 // pred_region
      _
    $region21: #{forward.2} parent=1 // pred_fallthru
      _
    // Predicated region
    $region22: #{forward.2} parent=1 // pred_check
      _
    $region23: #{forward.2} parent=1 // pred_check_branch
      %39 = sbr.rel (0) target = $region25
    $region24: #{forward.2} parent=1 // pred_region
      _
    $region25: #{forward.2} parent=1 // pred_fallthru
      _
    // Predicated region
    $region26: #{forward.2} parent=1 // pred_check
      _
    $region27: #{forward.2} parent=1 // pred_check_branch
      %41 = sbr.rel (0) target = $region29
    $region28: #{forward.2} parent=1 // pred_region
      _
    $region29: #{forward.2} parent=1 // pred_fallthru
      _
    // Predicated region
    $region30: #{forward.2} parent=1 // pred_check
      _
    $region31: #{forward.2} parent=1 // pred_check_branch
      %43 = sbr.rel (0) target = $region33
    $region32: #{forward.2} parent=1 // pred_region
      %s45 = ssub.s32 16, 16
      %46 = vsyncadd [#allocation3], %s45
      %s48 = sshll.u32 [#allocation2], 4
      %s49 = int_to_ptr.vmem [resolvable:$true] %s48
      %51 = dma.hbm_to_vmem [thread:$0]  %s7, 16, %s49, [#allocation3]
    $region33: #{forward.2} parent=1 // pred_fallthru
      _
    // Predicated region
    $region34: #{forward.2} parent=1 // pred_check
      _
    $region35: #{forward.2} parent=1 // pred_check_branch
      %53 = sbr.rel (0) target = $region37
    $region36: #{forward.2} parent=1 // pred_region
      _
    $region37: #{forward.2} parent=1 // pred_fallthru
      _
    // Predicated region
    $region38: #{forward.2} parent=1 // pred_check
      _
    $region39: #{forward.2} parent=1 // pred_check_branch
      %55 = sbr.rel (0) target = $region41
    $region40: #{forward.2} parent=1 // pred_region
      _
    $region41: #{forward.2} parent=1 // pred_fallthru
      _
    // Predicated region
    $region42: #{forward.2} parent=1 // pred_check
      _
    $region43: #{forward.2} parent=1 // pred_check_branch
      %57 = sbr.rel (0) target = $region45
    $region44: #{forward.2} parent=1 // pred_region
      %s59 = ssub.s32 16, 16
      %60 = vsyncadd [#allocation5], %s59
      %s62 = sshll.u32 [#allocation4], 4
      %s63 = int_to_ptr.vmem [resolvable:$true] %s62
      %65 = dma.hbm_to_vmem [thread:$0]  %s10, 16, %s63, [#allocation5]
    $region45: #{forward.2} parent=1 // pred_fallthru
      _
    // Predicated region
    $region46: #{forward.2} parent=1 // pred_check
      _
    $region47: #{forward.2} parent=1 // pred_check_branch
      %67 = sbr.rel (0) target = $region49
    $region48: #{forward.2} parent=1 // pred_region
      _
    $region49: #{forward.2} parent=1 // pred_fallthru
      _
    // Predicated region
    $region50: #{forward.2} parent=1 // pred_check
      _
    $region51: #{forward.2} parent=1 // pred_check_branch
      %69 = sbr.rel (0) target = $region53
    $region52: #{forward.2} parent=1 // pred_region
      _
    $region53: #{forward.2} parent=1 // pred_fallthru
      _
    // Predicated region
    $region54: #{forward.2} parent=1 // pred_check
      _
    $region55: #{forward.2} parent=1 // pred_check_branch
      %71 = sbr.rel (0) target = $region57
    $region56: #{forward.2} parent=1 // pred_region
      %s73 = ssub.s32 16, 16
      %74 = vsyncadd [#allocation5], %s73
      %s76 = sshll.u32 [#allocation6], 4
      %s77 = int_to_ptr.vmem [resolvable:$true] %s76
      %79 = dma.hbm_to_vmem [thread:$0]  %s13, 16, %s77, [#allocation5]
    $region57: #{forward.2} parent=1 // pred_fallthru
      _
    // Predicated region
    $region58: #{forward.2} parent=1 // pred_check
      _
    $region59: #{forward.2} parent=1 // pred_check_branch
      %81 = sbr.rel (0) target = $region61
    $region60: #{forward.2} parent=1 // pred_region
      _
    $region61: #{forward.2} parent=1 // pred_fallthru
      _
    // Predicated region
    $region62: #{forward.2} parent=1 // pred_check
      _
    $region63: #{forward.2} parent=1 // pred_check_branch
      %83 = sbr.rel (0) target = $region65
    $region64: #{forward.2} parent=1 // pred_region
      %s85 = ssub.s32 16, 16
      %86 = vsyncadd [#allocation8], %s85
      %s88 = sshll.u32 [#allocation7], 4
      %s89 = int_to_ptr.vmem [resolvable:$true] %s88
      %91 = dma.hbm_to_vmem [thread:$0]  %s15, 16, %s89, [#allocation8]
    $region65: #{forward.2} parent=1 // pred_fallthru
      _
    // Predicated region
    $region66: #{forward.2} parent=1 // pred_check
      _
    $region67: #{forward.2} parent=1 // pred_check_branch
      %93 = sbr.rel (0) target = $region69
    $region68: #{forward.2} parent=1 // pred_region
      _
    $region69: #{forward.2} parent=1 // pred_fallthru
      _
    // Predicated region
    $region70: #{forward.2} parent=1 // pred_check
      _
    $region71: #{forward.2} parent=1 // pred_check_branch
      %95 = sbr.rel (0) target = $region73
    $region72: #{forward.2} parent=1 // pred_region
      _
    $region73: #{forward.2} parent=1 // pred_fallthru
      _
    // Predicated region
    $region74: #{forward.2} parent=1 // pred_check
      _
    $region75: #{forward.2} parent=1 // pred_check_branch
      %97 = sbr.rel (0) target = $region77
    $region76: #{forward.2} parent=1 // pred_region
      %98 = dma.done [#allocation3], 16
    $region77: #{forward.2} parent=1 // pred_fallthru
      _
    // Predicated region
    $region78: #{forward.2} parent=1 // pred_check
      _
    $region79: #{forward.2} parent=1 // pred_check_branch
      %100 = sbr.rel (0) target = $region81
    $region80: #{forward.2} parent=1 // pred_region
      %101 = dma.done [#allocation5], 16
    $region81: #{forward.2} parent=1 // pred_fallthru
      _
    // Predicated region
    $region82: #{forward.2} parent=1 // pred_check
      _
    $region83: #{forward.2} parent=1 // pred_check_branch
      %103 = sbr.rel (0) target = $region85
    $region84: #{forward.2} parent=1 // pred_region
      %104 = dma.done [#allocation5], 16
    $region85: #{forward.2} parent=1 // pred_fallthru
      _
    // Predicated region
    $region86: #{forward.2} parent=1 // pred_check
      _
    $region87: #{forward.2} parent=1 // pred_check_branch
      %106 = sbr.rel (0) target = $region89
    $region88: #{forward.2} parent=1 // pred_region
      %107 = dma.done [#allocation8], 16
    $region89: #{forward.2} parent=1 // pred_fallthru
      _
    %v108 = vld [vmem:[%s1] sm:$0xff]
    %v109 = vld [vmem:[%s1 + $0x8] sm:$0xff]
    %v110 = vld [vmem:[%s1 + $0x10] sm:$0xff]
    %v111 = vld [vmem:[%s1 + $0x18] sm:$0xff]
    %v112 = vld [vmem:[%s1 + $0x20] sm:$0xff]
    %v113 = vld [vmem:[%s1 + $0x28] sm:$0xff]
    %v114 = vld [vmem:[%s1 + $0x30] sm:$0xff]
    %v115 = vld [vmem:[%s1 + $0x38] sm:$0xff]
    %v116 = vld [vmem:[%s16] sm:$0xff]
    %s117 = scalar_lea.vmem %s16, 8
    %v118 = vld [vmem:[%s117] sm:$0xff]
    %v119 = vld [vmem:[%s17] sm:$0xff]
    %s120 = scalar_lea.vmem %s17, 8
    %v121 = vld [vmem:[%s120] sm:$0xff]
    loop: start=0, step=1, limit=8
    $region90: #{forward.2} parent=1 // loop_pre_header
      _
    $region91: #{forward.2} parent=1 // loop_header
      %s123 = sphi 0, %s127
      %p124 = scmp.ge.s32.totalorder %s123, 8
      %v128 = vphi %v116, %v2149
      %v129 = vphi %v118, %v2844
      %v130 = vphi %v119, %v2147
      %v131 = vphi %v121, %v2842
    $region92: #{forward.2} parent=1 // loop_header_branch
      %126 = sbr.rel (%p124) target = $region96
    $region93: #{forward.2} parent=1 // loop_body
      %s132 = smul.u32 %s123, 8
      %s133 = scalar_lea.vmem %s0, %s132
      %v134 = vld [vmem:[%s133] sm:$0xff]
      %v135 = vld [vmem:[%s2] sm:$0xff]
      %v136 = vld [vmem:[%s2 + $0x8] sm:$0xff]
      %v137 = vld [vmem:[%s3] sm:$0x1]
      %v139 = vlaneseq
      %v140 = vshrl.u32 %v139, 7
      %v141 = vsub.s32 0, %v140
      %v142 = vrot.slane %v137, %v141
      %vm144 = vcmask 130048
      %v146 = vsel %vm144, %v134, 0
      %148 = vmatprep.subr.mxu0 0.0
      %149 = vmatpush1.msra.mxu0 0.0
      %150 = vmatprep.subr.mxu0 0.0
      %151 = vmatpush1.msra.mxu0 0.0
      %152 = vmatprep.subr.mxu0 0.0
      %153 = vmatpush1.msra.mxu0 0.0
      %154 = vmatprep.subr.mxu0 0.0
      %155 = vmatpush1.msra.mxu0 0.0
      %156 = vmatprep.subr.mxu0 0.0
      %157 = vmatpush1.msra.mxu0 0.0
      %158 = vmatprep.subr.mxu0 0.0
      %159 = vmatpush1.msra.mxu0 0.0
      %160 = vmatprep.subr.mxu0 0.0
      %161 = vmatpush1.msra.mxu0 0.0
      %162 = vmatprep.subr.mxu0 0.0
      %163 = vmatpush1.msra.mxu0 0.0
      %164 = vmatprep.subr.mxu0 0.0
      %165 = vmatpush1.msra.mxu0 0.0
      %166 = vmatprep.subr.mxu0 0.0
      %167 = vmatpush1.msra.mxu0 0.0
      %168 = vmatprep.subr.mxu0 0.0
      %169 = vmatpush1.msra.mxu0 0.0
      %170 = vmatprep.subr.mxu0 0.0
      %171 = vmatpush1.msra.mxu0 0.0
      %172 = vmatprep.subr.mxu0 0.0
      %173 = vmatpush1.msra.mxu0 0.0
      %174 = vmatprep.subr.mxu0 0.0
      %175 = vmatpush1.msra.mxu0 0.0
      %176 = vmatprep.subr.mxu0 0.0
      %177 = vmatpush1.msra.mxu0 %v136
      %178 = vmatprep.subr.mxu0 0.0
      %179 = vmatpush1.msra.mxu0 %v135
      %180 = vmatprep.subr.mxu0 0.0
      %181 = vmatpush2.msra.mxu0 0.0
      %182 = vmatprep.subr.mxu0 0.0
      %183 = vmatpush2.msra.mxu0 0.0
      %184 = vmatprep.subr.mxu0 0.0
      %185 = vmatpush2.msra.mxu0 0.0
      %186 = vmatprep.subr.mxu0 0.0
      %187 = vmatpush2.msra.mxu0 0.0
      %188 = vmatprep.subr.mxu0 0.0
      %189 = vmatpush2.msra.mxu0 0.0
      %190 = vmatprep.subr.mxu0 0.0
      %191 = vmatpush2.msra.mxu0 0.0
      %192 = vmatprep.subr.mxu0 0.0
      %193 = vmatpush2.msra.mxu0 0.0
      %194 = vmatprep.subr.mxu0 0.0
      %195 = vmatpush2.msra.mxu0 0.0
      %196 = vmatprep.subr.mxu0 0.0
      %197 = vmatpush2.msra.mxu0 0.0
      %198 = vmatprep.subr.mxu0 0.0
      %199 = vmatpush2.msra.mxu0 0.0
      %200 = vmatprep.subr.mxu0 0.0
      %201 = vmatpush2.msra.mxu0 0.0
      %202 = vmatprep.subr.mxu0 0.0
      %203 = vmatpush2.msra.mxu0 0.0
      %204 = vmatprep.subr.mxu0 0.0
      %205 = vmatpush2.msra.mxu0 0.0
      %206 = vmatprep.subr.mxu0 0.0
      %207 = vmatpush2.msra.mxu0 0.0
      %208 = vmatprep.subr.mxu0 0.0
      %209 = vmatpush2.msra.mxu0 0.0
      %210 = vmatprep.subr.mxu0 0.0
      %211 = vmatpush2.msra.mxu0 0.0
      %212 = vmatprep.mubr.f32.mxu0 0.0
      %213 = vmatmul.mubr.f32.gmra.mxu0 %v146
      %v214 = vpop.f32.mrf.mxu0
      %v215 = vadd.f32 %v142, %v214
      %v216 = vpop.f32.mrf.mxu0
      %217 = vdwg.mxu0
      %v218 = vmax.f32 %v215, 0.0
      %v219 = vld [vmem:[%s4] sm:$0xff]
      %v220 = vld [vmem:[%s4 + $0x8] sm:$0xff]
      %v221 = vld [vmem:[%s4 + $0x10] sm:$0xff]
      %v222 = vld [vmem:[%s4 + $0x18] sm:$0xff]
      %v223 = vld [vmem:[%s5] sm:$0x1]
      %v225 = vlaneseq
      %v226 = vshrl.u32 %v225, 7
      %v227 = vsub.s32 0, %v226
      %v228 = vrot.slane %v223, %v227
      %vm230 = vcmask 261120
      %v232 = vsel %vm230, %v218, 0
      %234 = vmatprep.subr.mxu0 0.0
      %235 = vmatpush1.msra.mxu0 0.0
      %236 = vmatprep.subr.mxu0 0.0
      %237 = vmatpush1.msra.mxu0 0.0
      %238 = vmatprep.subr.mxu0 0.0
      %239 = vmatpush1.msra.mxu0 0.0
      %240 = vmatprep.subr.mxu0 0.0
      %241 = vmatpush1.msra.mxu0 0.0
      %242 = vmatprep.subr.mxu0 0.0
      %243 = vmatpush1.msra.mxu0 0.0
      %244 = vmatprep.subr.mxu0 0.0
      %245 = vmatpush1.msra.mxu0 0.0
      %246 = vmatprep.subr.mxu0 0.0
      %247 = vmatpush1.msra.mxu0 0.0
      %248 = vmatprep.subr.mxu0 0.0
      %249 = vmatpush1.msra.mxu0 0.0
      %250 = vmatprep.subr.mxu0 0.0
      %251 = vmatpush1.msra.mxu0 0.0
      %252 = vmatprep.subr.mxu0 0.0
      %253 = vmatpush1.msra.mxu0 0.0
      %254 = vmatprep.subr.mxu0 0.0
      %255 = vmatpush1.msra.mxu0 0.0
      %256 = vmatprep.subr.mxu0 0.0
      %257 = vmatpush1.msra.mxu0 0.0
      %258 = vmatprep.subr.mxu0 0.0
      %259 = vmatpush1.msra.mxu0 %v222
      %260 = vmatprep.subr.mxu0 0.0
      %261 = vmatpush1.msra.mxu0 %v221
      %262 = vmatprep.subr.mxu0 0.0
      %263 = vmatpush1.msra.mxu0 %v220
      %264 = vmatprep.subr.mxu0 0.0
      %265 = vmatpush1.msra.mxu0 %v219
      %266 = vmatprep.subr.mxu0 0.0
      %267 = vmatpush2.msra.mxu0 0.0
      %268 = vmatprep.subr.mxu0 0.0
      %269 = vmatpush2.msra.mxu0 0.0
      %270 = vmatprep.subr.mxu0 0.0
      %271 = vmatpush2.msra.mxu0 0.0
      %272 = vmatprep.subr.mxu0 0.0
      %273 = vmatpush2.msra.mxu0 0.0
      %274 = vmatprep.subr.mxu0 0.0
      %275 = vmatpush2.msra.mxu0 0.0
      %276 = vmatprep.subr.mxu0 0.0
      %277 = vmatpush2.msra.mxu0 0.0
      %278 = vmatprep.subr.mxu0 0.0
      %279 = vmatpush2.msra.mxu0 0.0
      %280 = vmatprep.subr.mxu0 0.0
      %281 = vmatpush2.msra.mxu0 0.0
      %282 = vmatprep.subr.mxu0 0.0
      %283 = vmatpush2.msra.mxu0 0.0
      %284 = vmatprep.subr.mxu0 0.0
      %285 = vmatpush2.msra.mxu0 0.0
      %286 = vmatprep.subr.mxu0 0.0
      %287 = vmatpush2.msra.mxu0 0.0
      %288 = vmatprep.subr.mxu0 0.0
      %289 = vmatpush2.msra.mxu0 0.0
      %290 = vmatprep.subr.mxu0 0.0
      %291 = vmatpush2.msra.mxu0 0.0
      %292 = vmatprep.subr.mxu0 0.0
      %293 = vmatpush2.msra.mxu0 0.0
      %294 = vmatprep.subr.mxu0 0.0
      %295 = vmatpush2.msra.mxu0 0.0
      %296 = vmatprep.subr.mxu0 0.0
      %297 = vmatpush2.msra.mxu0 0.0
      %298 = vmatprep.mubr.f32.mxu0 0.0
      %299 = vmatmul.mubr.f32.gmra.mxu0 %v232
      %v300 = vpop.f32.mrf.mxu0
      %v301 = vadd.f32 %v228, %v300
      %v302 = vpop.f32.mrf.mxu0
      %303 = vdwg.mxu0
      %v304 = vmax.f32 %v301, 0.0
      %v305 = vld [vmem:[%s6] sm:$0xff]
      %v306 = vld [vmem:[%s6 + $0x8] sm:$0xff]
      %v307 = vld [vmem:[%s6 + $0x10] sm:$0xff]
      %v308 = vld [vmem:[%s6 + $0x18] sm:$0xff]
      %s309 = scalar_lea.vmem %s6, 32
      %v310 = vld [vmem:[%s309] sm:$0xff]
      %v311 = vld [vmem:[%s309 + $0x8] sm:$0xff]
      %v312 = vld [vmem:[%s309 + $0x10] sm:$0xff]
      %v313 = vld [vmem:[%s309 + $0x18] sm:$0xff]
      %v315 = vsel %vm230, %v129, 0
      %317 = vmatprep.subr.mxu0 0.0
      %318 = vmatpush1.msra.mxu0 0.0
      %319 = vmatprep.subr.mxu0 0.0
      %320 = vmatpush1.msra.mxu0 0.0
      %321 = vmatprep.subr.mxu0 0.0
      %322 = vmatpush1.msra.mxu0 0.0
      %323 = vmatprep.subr.mxu0 0.0
      %324 = vmatpush1.msra.mxu0 0.0
      %325 = vmatprep.subr.mxu0 0.0
      %326 = vmatpush1.msra.mxu0 0.0
      %327 = vmatprep.subr.mxu0 0.0
      %328 = vmatpush1.msra.mxu0 0.0
      %329 = vmatprep.subr.mxu0 0.0
      %330 = vmatpush1.msra.mxu0 0.0
      %331 = vmatprep.subr.mxu0 0.0
      %332 = vmatpush1.msra.mxu0 0.0
      %333 = vmatprep.subr.mxu0 0.0
      %334 = vmatpush1.msra.mxu0 0.0
      %335 = vmatprep.subr.mxu0 0.0
      %336 = vmatpush1.msra.mxu0 0.0
      %337 = vmatprep.subr.mxu0 0.0
      %338 = vmatpush1.msra.mxu0 0.0
      %339 = vmatprep.subr.mxu0 0.0
      %340 = vmatpush1.msra.mxu0 0.0
      %341 = vmatprep.subr.mxu0 0.0
      %342 = vmatpush1.msra.mxu0 %v313
      %343 = vmatprep.subr.mxu0 0.0
      %344 = vmatpush1.msra.mxu0 %v312
      %345 = vmatprep.subr.mxu0 0.0
      %346 = vmatpush1.msra.mxu0 %v311
      %347 = vmatprep.subr.mxu0 0.0
      %348 = vmatpush1.msra.mxu0 %v310
      %349 = vmatprep.subr.mxu0 0.0
      %350 = vmatpush2.msra.mxu0 0.0
      %351 = vmatprep.subr.mxu0 0.0
      %352 = vmatpush2.msra.mxu0 0.0
      %353 = vmatprep.subr.mxu0 0.0
      %354 = vmatpush2.msra.mxu0 0.0
      %355 = vmatprep.subr.mxu0 0.0
      %356 = vmatpush2.msra.mxu0 0.0
      %357 = vmatprep.subr.mxu0 0.0
      %358 = vmatpush2.msra.mxu0 0.0
      %359 = vmatprep.subr.mxu0 0.0
      %360 = vmatpush2.msra.mxu0 0.0
      %361 = vmatprep.subr.mxu0 0.0
      %362 = vmatpush2.msra.mxu0 0.0
      %363 = vmatprep.subr.mxu0 0.0
      %364 = vmatpush2.msra.mxu0 0.0
      %365 = vmatprep.subr.mxu0 0.0
      %366 = vmatpush2.msra.mxu0 0.0
      %367 = vmatprep.subr.mxu0 0.0
      %368 = vmatpush2.msra.mxu0 0.0
      %369 = vmatprep.subr.mxu0 0.0
      %370 = vmatpush2.msra.mxu0 0.0
      %371 = vmatprep.subr.mxu0 0.0
      %372 = vmatpush2.msra.mxu0 0.0
      %373 = vmatprep.subr.mxu0 0.0
      %374 = vmatpush2.msra.mxu0 0.0
      %375 = vmatprep.subr.mxu0 0.0
      %376 = vmatpush2.msra.mxu0 0.0
      %377 = vmatprep.subr.mxu0 0.0
      %378 = vmatpush2.msra.mxu0 0.0
      %379 = vmatprep.subr.mxu0 0.0
      %380 = vmatpush2.msra.mxu0 0.0
      %381 = vmatprep.mubr.f32.mxu0 0.0
      %382 = vmatmul.mubr.f32.gmra.mxu0 %v315
      %v383 = vpop.f32.mrf.mxu0
      %v384 = vadd.f32 0.0, %v383
      %v385 = vpop.f32.mrf.mxu0
      %386 = vdwg.mxu0
      %v388 = vsel %vm230, %v128, 0
      %390 = vmatprep.subr.mxu0 0.0
      %391 = vmatpush1.msra.mxu0 0.0
      %392 = vmatprep.subr.mxu0 0.0
      %393 = vmatpush1.msra.mxu0 0.0
      %394 = vmatprep.subr.mxu0 0.0
      %395 = vmatpush1.msra.mxu0 0.0
      %396 = vmatprep.subr.mxu0 0.0
      %397 = vmatpush1.msra.mxu0 0.0
      %398 = vmatprep.subr.mxu0 0.0
      %399 = vmatpush1.msra.mxu0 0.0
      %400 = vmatprep.subr.mxu0 0.0
      %401 = vmatpush1.msra.mxu0 0.0
      %402 = vmatprep.subr.mxu0 0.0
      %403 = vmatpush1.msra.mxu0 0.0
      %404 = vmatprep.subr.mxu0 0.0
      %405 = vmatpush1.msra.mxu0 0.0
      %406 = vmatprep.subr.mxu0 0.0
      %407 = vmatpush1.msra.mxu0 0.0
      %408 = vmatprep.subr.mxu0 0.0
      %409 = vmatpush1.msra.mxu0 0.0
      %410 = vmatprep.subr.mxu0 0.0
      %411 = vmatpush1.msra.mxu0 0.0
      %412 = vmatprep.subr.mxu0 0.0
      %413 = vmatpush1.msra.mxu0 0.0
      %414 = vmatprep.subr.mxu0 0.0
      %415 = vmatpush1.msra.mxu0 %v308
      %416 = vmatprep.subr.mxu0 0.0
      %417 = vmatpush1.msra.mxu0 %v307
      %418 = vmatprep.subr.mxu0 0.0
      %419 = vmatpush1.msra.mxu0 %v306
      %420 = vmatprep.subr.mxu0 0.0
      %421 = vmatpush1.msra.mxu0 %v305
      %422 = vmatprep.subr.mxu0 0.0
      %423 = vmatpush2.msra.mxu0 0.0
      %424 = vmatprep.subr.mxu0 0.0
      %425 = vmatpush2.msra.mxu0 0.0
      %426 = vmatprep.subr.mxu0 0.0
      %427 = vmatpush2.msra.mxu0 0.0
      %428 = vmatprep.subr.mxu0 0.0
      %429 = vmatpush2.msra.mxu0 0.0
      %430 = vmatprep.subr.mxu0 0.0
      %431 = vmatpush2.msra.mxu0 0.0
      %432 = vmatprep.subr.mxu0 0.0
      %433 = vmatpush2.msra.mxu0 0.0
      %434 = vmatprep.subr.mxu0 0.0
      %435 = vmatpush2.msra.mxu0 0.0
      %436 = vmatprep.subr.mxu0 0.0
      %437 = vmatpush2.msra.mxu0 0.0
      %438 = vmatprep.subr.mxu0 0.0
      %439 = vmatpush2.msra.mxu0 0.0
      %440 = vmatprep.subr.mxu0 0.0
      %441 = vmatpush2.msra.mxu0 0.0
      %442 = vmatprep.subr.mxu0 0.0
      %443 = vmatpush2.msra.mxu0 0.0
      %444 = vmatprep.subr.mxu0 0.0
      %445 = vmatpush2.msra.mxu0 0.0
      %446 = vmatprep.subr.mxu0 0.0
      %447 = vmatpush2.msra.mxu0 0.0
      %448 = vmatprep.subr.mxu0 0.0
      %449 = vmatpush2.msra.mxu0 0.0
      %450 = vmatprep.subr.mxu0 0.0
      %451 = vmatpush2.msra.mxu0 0.0
      %452 = vmatprep.subr.mxu0 0.0
      %453 = vmatpush2.msra.mxu0 0.0
      %454 = vmatprep.mubr.f32.mxu0 0.0
      %455 = vmatmul.mubr.f32.gmra.mxu0 %v388
      %v456 = vpop.f32.mrf.mxu0
      %v457 = vadd.f32 %v384, %v456
      %v458 = vpop.f32.mrf.mxu0
      %459 = vdwg.mxu0
      %s460 = scalar_lea.vmem %s6, 64
      %v461 = vld [vmem:[%s460] sm:$0xff]
      %v462 = vld [vmem:[%s460 + $0x8] sm:$0xff]
      %v463 = vld [vmem:[%s460 + $0x10] sm:$0xff]
      %v464 = vld [vmem:[%s460 + $0x18] sm:$0xff]
      %v466 = vsel %vm230, %v130, 0
      %468 = vmatprep.subr.mxu0 0.0
      %469 = vmatpush1.msra.mxu0 0.0
      %470 = vmatprep.subr.mxu0 0.0
      %471 = vmatpush1.msra.mxu0 0.0
      %472 = vmatprep.subr.mxu0 0.0
      %473 = vmatpush1.msra.mxu0 0.0
      %474 = vmatprep.subr.mxu0 0.0
      %475 = vmatpush1.msra.mxu0 0.0
      %476 = vmatprep.subr.mxu0 0.0
      %477 = vmatpush1.msra.mxu0 0.0
      %478 = vmatprep.subr.mxu0 0.0
      %479 = vmatpush1.msra.mxu0 0.0
      %480 = vmatprep.subr.mxu0 0.0
      %481 = vmatpush1.msra.mxu0 0.0
      %482 = vmatprep.subr.mxu0 0.0
      %483 = vmatpush1.msra.mxu0 0.0
      %484 = vmatprep.subr.mxu0 0.0
      %485 = vmatpush1.msra.mxu0 0.0
      %486 = vmatprep.subr.mxu0 0.0
      %487 = vmatpush1.msra.mxu0 0.0
      %488 = vmatprep.subr.mxu0 0.0
      %489 = vmatpush1.msra.mxu0 0.0
      %490 = vmatprep.subr.mxu0 0.0
      %491 = vmatpush1.msra.mxu0 0.0
      %492 = vmatprep.subr.mxu0 0.0
      %493 = vmatpush1.msra.mxu0 %v464
      %494 = vmatprep.subr.mxu0 0.0
      %495 = vmatpush1.msra.mxu0 %v463
      %496 = vmatprep.subr.mxu0 0.0
      %497 = vmatpush1.msra.mxu0 %v462
      %498 = vmatprep.subr.mxu0 0.0
      %499 = vmatpush1.msra.mxu0 %v461
      %500 = vmatprep.subr.mxu0 0.0
      %501 = vmatpush2.msra.mxu0 0.0
      %502 = vmatprep.subr.mxu0 0.0
      %503 = vmatpush2.msra.mxu0 0.0
      %504 = vmatprep.subr.mxu0 0.0
      %505 = vmatpush2.msra.mxu0 0.0
      %506 = vmatprep.subr.mxu0 0.0
      %507 = vmatpush2.msra.mxu0 0.0
      %508 = vmatprep.subr.mxu0 0.0
      %509 = vmatpush2.msra.mxu0 0.0
      %510 = vmatprep.subr.mxu0 0.0
      %511 = vmatpush2.msra.mxu0 0.0
      %512 = vmatprep.subr.mxu0 0.0
      %513 = vmatpush2.msra.mxu0 0.0
      %514 = vmatprep.subr.mxu0 0.0
      %515 = vmatpush2.msra.mxu0 0.0
      %516 = vmatprep.subr.mxu0 0.0
      %517 = vmatpush2.msra.mxu0 0.0
      %518 = vmatprep.subr.mxu0 0.0
      %519 = vmatpush2.msra.mxu0 0.0
      %520 = vmatprep.subr.mxu0 0.0
      %521 = vmatpush2.msra.mxu0 0.0
      %522 = vmatprep.subr.mxu0 0.0
      %523 = vmatpush2.msra.mxu0 0.0
      %524 = vmatprep.subr.mxu0 0.0
      %525 = vmatpush2.msra.mxu0 0.0
      %526 = vmatprep.subr.mxu0 0.0
      %527 = vmatpush2.msra.mxu0 0.0
      %528 = vmatprep.subr.mxu0 0.0
      %529 = vmatpush2.msra.mxu0 0.0
      %530 = vmatprep.subr.mxu0 0.0
      %531 = vmatpush2.msra.mxu0 0.0
      %532 = vmatprep.mubr.f32.mxu0 0.0
      %533 = vmatmul.mubr.f32.gmra.mxu0 %v466
      %v534 = vpop.f32.mrf.mxu0
      %v535 = vadd.f32 0.0, %v534
      %v536 = vpop.f32.mrf.mxu0
      %537 = vdwg.mxu0
      %v538 = vadd.f32 %v457, %v535
      %s539 = scalar_lea.vmem %s6, 96
      %v540 = vld [vmem:[%s539] sm:$0xff]
      %v541 = vld [vmem:[%s539 + $0x8] sm:$0xff]
      %v542 = vld [vmem:[%s539 + $0x10] sm:$0xff]
      %v543 = vld [vmem:[%s539 + $0x18] sm:$0xff]
      %v545 = vsel %vm230, %v131, 0
      %547 = vmatprep.subr.mxu0 0.0
      %548 = vmatpush1.msra.mxu0 0.0
      %549 = vmatprep.subr.mxu0 0.0
      %550 = vmatpush1.msra.mxu0 0.0
      %551 = vmatprep.subr.mxu0 0.0
      %552 = vmatpush1.msra.mxu0 0.0
      %553 = vmatprep.subr.mxu0 0.0
      %554 = vmatpush1.msra.mxu0 0.0
      %555 = vmatprep.subr.mxu0 0.0
      %556 = vmatpush1.msra.mxu0 0.0
      %557 = vmatprep.subr.mxu0 0.0
      %558 = vmatpush1.msra.mxu0 0.0
      %559 = vmatprep.subr.mxu0 0.0
      %560 = vmatpush1.msra.mxu0 0.0
      %561 = vmatprep.subr.mxu0 0.0
      %562 = vmatpush1.msra.mxu0 0.0
      %563 = vmatprep.subr.mxu0 0.0
      %564 = vmatpush1.msra.mxu0 0.0
      %565 = vmatprep.subr.mxu0 0.0
      %566 = vmatpush1.msra.mxu0 0.0
      %567 = vmatprep.subr.mxu0 0.0
      %568 = vmatpush1.msra.mxu0 0.0
      %569 = vmatprep.subr.mxu0 0.0
      %570 = vmatpush1.msra.mxu0 0.0
      %571 = vmatprep.subr.mxu0 0.0
      %572 = vmatpush1.msra.mxu0 %v543
      %573 = vmatprep.subr.mxu0 0.0
      %574 = vmatpush1.msra.mxu0 %v542
      %575 = vmatprep.subr.mxu0 0.0
      %576 = vmatpush1.msra.mxu0 %v541
      %577 = vmatprep.subr.mxu0 0.0
      %578 = vmatpush1.msra.mxu0 %v540
      %579 = vmatprep.subr.mxu0 0.0
      %580 = vmatpush2.msra.mxu0 0.0
      %581 = vmatprep.subr.mxu0 0.0
      %582 = vmatpush2.msra.mxu0 0.0
      %583 = vmatprep.subr.mxu0 0.0
      %584 = vmatpush2.msra.mxu0 0.0
      %585 = vmatprep.subr.mxu0 0.0
      %586 = vmatpush2.msra.mxu0 0.0
      %587 = vmatprep.subr.mxu0 0.0
      %588 = vmatpush2.msra.mxu0 0.0
      %589 = vmatprep.subr.mxu0 0.0
      %590 = vmatpush2.msra.mxu0 0.0
      %591 = vmatprep.subr.mxu0 0.0
      %592 = vmatpush2.msra.mxu0 0.0
      %593 = vmatprep.subr.mxu0 0.0
      %594 = vmatpush2.msra.mxu0 0.0
      %595 = vmatprep.subr.mxu0 0.0
      %596 = vmatpush2.msra.mxu0 0.0
      %597 = vmatprep.subr.mxu0 0.0
      %598 = vmatpush2.msra.mxu0 0.0
      %599 = vmatprep.subr.mxu0 0.0
      %600 = vmatpush2.msra.mxu0 0.0
      %601 = vmatprep.subr.mxu0 0.0
      %602 = vmatpush2.msra.mxu0 0.0
      %603 = vmatprep.subr.mxu0 0.0
      %604 = vmatpush2.msra.mxu0 0.0
      %605 = vmatprep.subr.mxu0 0.0
      %606 = vmatpush2.msra.mxu0 0.0
      %607 = vmatprep.subr.mxu0 0.0
      %608 = vmatpush2.msra.mxu0 0.0
      %609 = vmatprep.subr.mxu0 0.0
      %610 = vmatpush2.msra.mxu0 0.0
      %611 = vmatprep.mubr.f32.mxu0 0.0
      %612 = vmatmul.mubr.f32.gmra.mxu0 %v545
      %v613 = vpop.f32.mrf.mxu0
      %v614 = vadd.f32 0.0, %v613
      %v615 = vpop.f32.mrf.mxu0
      %616 = vdwg.mxu0
      %v617 = vadd.f32 %v538, %v614
      %v618 = vld [vmem:[#allocation2] sm:$0x1]
      %v620 = vlaneseq
      %v621 = vshrl.u32 %v620, 7
      %v622 = vsub.s32 0, %v621
      %v623 = vrot.slane %v618, %v622
      %v625 = vadd.f32 %v617, %v623
      %v627 = vcombine.high %v625, %v625
      %v629 = vunpack.c.l.s4 1966171168
      %v630 = vunpack.c.0.s8 %v629
      %v631 = vlaneseq
      %v632 = vshrl.u32 %v631, 7
      %v633 = vsub.s32 %v630, %v632
      %v634 = vrot.slane %v625, %v633
      %v636 = vunpack.c.l.s4 1966171168
      %v637 = vunpack.c.0.s8 %v636
      %v638 = vlaneseq
      %v639 = vshrl.u32 %v638, 7
      %v640 = vsub.s32 %v637, %v639
      %v641 = vrot.slane %v627, %v640
      %v642 = vcombine.high %v634, %v634
      %v643 = vcombine.high %v641, %v641
      %v645 = vunpack.c.l.s4 1966171168
      %v646 = vunpack.c.0.s8 %v645
      %v647 = vlaneseq
      %v648 = vshrl.u32 %v647, 7
      %v649 = vsub.s32 %v646, %v648
      %v650 = vrot.slane %v634, %v649
      %v652 = vunpack.c.l.s4 1966171168
      %v653 = vunpack.c.0.s8 %v652
      %v654 = vlaneseq
      %v655 = vshrl.u32 %v654, 7
      %v656 = vsub.s32 %v653, %v655
      %v657 = vrot.slane %v641, %v656
      %v659 = vunpack.c.l.s4 1966171168
      %v660 = vunpack.c.0.s8 %v659
      %v661 = vlaneseq
      %v662 = vshrl.u32 %v661, 7
      %v663 = vsub.s32 %v660, %v662
      %v664 = vrot.slane %v642, %v663
      %v666 = vunpack.c.l.s4 1966171168
      %v667 = vunpack.c.0.s8 %v666
      %v668 = vlaneseq
      %v669 = vshrl.u32 %v668, 7
      %v670 = vsub.s32 %v667, %v669
      %v671 = vrot.slane %v643, %v670
      %v672 = vcombine.high %v650, %v650
      %v673 = vcombine.high %v657, %v657
      %v674 = vcombine.high %v664, %v664
      %v675 = vcombine.high %v671, %v671
      %v676 = vlaneseq
      %v677 = vshrl.u32 %v676, 7
      %v678 = vsub.s32 0, %v677
      %v679 = vrot.slane %v650, %v678
      %v680 = vlaneseq
      %v681 = vshrl.u32 %v680, 7
      %v682 = vsub.s32 0, %v681
      %v683 = vrot.slane %v664, %v682
      %v684 = vlaneseq
      %v685 = vshrl.u32 %v684, 7
      %v686 = vsub.s32 0, %v685
      %v687 = vrot.slane %v672, %v686
      %v688 = vlaneseq
      %v689 = vshrl.u32 %v688, 7
      %v690 = vsub.s32 0, %v689
      %v691 = vrot.slane %v674, %v690
      %v692 = vlaneseq
      %v693 = vshrl.u32 %v692, 7
      %v694 = vsub.s32 0, %v693
      %v695 = vrot.slane %v657, %v694
      %v696 = vlaneseq
      %v697 = vshrl.u32 %v696, 7
      %v698 = vsub.s32 0, %v697
      %v699 = vrot.slane %v671, %v698
      %v700 = vlaneseq
      %v701 = vshrl.u32 %v700, 7
      %v702 = vsub.s32 0, %v701
      %v703 = vrot.slane %v673, %v702
      %v704 = vlaneseq
      %v705 = vshrl.u32 %v704, 7
      %v706 = vsub.s32 0, %v705
      %v707 = vrot.slane %v675, %v706
      %v716 = vmul.f32 %v679, %v108
      %v717 = vmul.f32 %v683, %v109
      %v718 = vmul.f32 %v687, %v110
      %v719 = vmul.f32 %v691, %v111
      %v720 = vmul.f32 %v695, %v112
      %v721 = vmul.f32 %v699, %v113
      %v722 = vmul.f32 %v703, %v114
      %v723 = vmul.f32 %v707, %v115
      %v724 = vsel %vm230, %v716, 0.0
      %725 = vadd.xlane.f32.xlu0 %v724
      %v726 = vpop.xlane.xlu0 %725
      %v727 = vsel %vm230, %v717, 0.0
      %728 = vadd.xlane.f32.xlu0 %v727
      %v729 = vpop.xlane.xlu0 %728
      %v730 = vsel %vm230, %v718, 0.0
      %731 = vadd.xlane.f32.xlu0 %v730
      %v732 = vpop.xlane.xlu0 %731
      %v733 = vsel %vm230, %v719, 0.0
      %734 = vadd.xlane.f32.xlu0 %v733
      %v735 = vpop.xlane.xlu0 %734
      %v736 = vsel %vm230, %v720, 0.0
      %737 = vadd.xlane.f32.xlu0 %v736
      %v738 = vpop.xlane.xlu0 %737
      %v739 = vsel %vm230, %v721, 0.0
      %740 = vadd.xlane.f32.xlu0 %v739
      %v741 = vpop.xlane.xlu0 %740
      %v742 = vsel %vm230, %v722, 0.0
      %743 = vadd.xlane.f32.xlu0 %v742
      %v744 = vpop.xlane.xlu0 %743
      %v745 = vsel %vm230, %v723, 0.0
      %746 = vadd.xlane.f32.xlu0 %v745
      %v747 = vpop.xlane.xlu0 %746
      %v756 = vlaneseq
      %v757 = vand.u32 %v756, 127
      %v758 = vlaneseq
      %v759 = vshrl.u32 %v758, 7
      %v760 = vsub.s32 %v757, %v759
      %v761 = vrot.slane %v726, %v760
      %v762 = vlaneseq
      %v763 = vshrl.u32 %v762, 7
      %v764 = vsub.s32 %v757, %v763
      %v765 = vrot.slane %v729, %v764
      %v766 = vlaneseq
      %v767 = vshrl.u32 %v766, 7
      %v768 = vsub.s32 %v757, %v767
      %v769 = vrot.slane %v732, %v768
      %v770 = vlaneseq
      %v771 = vshrl.u32 %v770, 7
      %v772 = vsub.s32 %v757, %v771
      %v773 = vrot.slane %v735, %v772
      %v774 = vlaneseq
      %v775 = vshrl.u32 %v774, 7
      %v776 = vsub.s32 %v757, %v775
      %v777 = vrot.slane %v738, %v776
      %v778 = vlaneseq
      %v779 = vshrl.u32 %v778, 7
      %v780 = vsub.s32 %v757, %v779
      %v781 = vrot.slane %v741, %v780
      %v782 = vlaneseq
      %v783 = vshrl.u32 %v782, 7
      %v784 = vsub.s32 %v757, %v783
      %v785 = vrot.slane %v744, %v784
      %v786 = vlaneseq
      %v787 = vshrl.u32 %v786, 7
      %v788 = vsub.s32 %v757, %v787
      %v789 = vrot.slane %v747, %v788
      %vm790 = vcmask 1041409
      %v791 = vsel %vm790, %v765, %v761
      %vm792 = vcmask 1042434
      %v793 = vsel %vm792, %v769, %v791
      %vm794 = vcmask 1043459
      %v795 = vsel %vm794, %v773, %v793
      %vm796 = vcmask 1044484
      %v797 = vsel %vm796, %v777, %v795
      %vm798 = vcmask 1045509
      %v799 = vsel %vm798, %v781, %v797
      %vm800 = vcmask 1046534
      %v801 = vsel %vm800, %v785, %v799
      %vm802 = vcmask 1047559
      %v803 = vsel %vm802, %v789, %v801
      %vm805 = vcmask 64512
      %v806 = vsel %vm805, %v803, -inf
      %807 = vmax.xlane.f32.xlu0 %v806
      %v808 = vpop.xlane.xlu0 %807
      %v810 = vlaneseq
      %v811 = vshrl.u32 %v810, 7
      %v812 = vsub.s32 0, %v811
      %v813 = vrot.slane %v808, %v812
      %v814 = vlaneseq
      %v815 = vshrl.u32 %v814, 7
      %v816 = vsub.s32 1, %v815
      %v817 = vrot.slane %v808, %v816
      %v818 = vlaneseq
      %v819 = vshrl.u32 %v818, 7
      %v820 = vsub.s32 2, %v819
      %v821 = vrot.slane %v808, %v820
      %v822 = vlaneseq
      %v823 = vshrl.u32 %v822, 7
      %v824 = vsub.s32 3, %v823
      %v825 = vrot.slane %v808, %v824
      %v826 = vlaneseq
      %v827 = vshrl.u32 %v826, 7
      %v828 = vsub.s32 4, %v827
      %v829 = vrot.slane %v808, %v828
      %v830 = vlaneseq
      %v831 = vshrl.u32 %v830, 7
      %v832 = vsub.s32 5, %v831
      %v833 = vrot.slane %v808, %v832
      %v834 = vlaneseq
      %v835 = vshrl.u32 %v834, 7
      %v836 = vsub.s32 6, %v835
      %v837 = vrot.slane %v808, %v836
      %v838 = vlaneseq
      %v839 = vshrl.u32 %v838, 7
      %v840 = vsub.s32 7, %v839
      %v841 = vrot.slane %v808, %v840
      %v850 = vsub.f32 %v726, %v813
      %v851 = vsub.f32 %v729, %v817
      %v852 = vsub.f32 %v732, %v821
      %v853 = vsub.f32 %v735, %v825
      %v854 = vsub.f32 %v738, %v829
      %v855 = vsub.f32 %v741, %v833
      %v856 = vsub.f32 %v744, %v837
      %v857 = vsub.f32 %v747, %v841
      %v858 = vmul.f32 %v850, 1.442695
      %v859 = vpow.pop %v858
      %v860 = vmul.f32 %v851, 1.442695
      %v861 = vpow.pop %v860
      %v862 = vmul.f32 %v852, 1.442695
      %v863 = vpow.pop %v862
      %v864 = vmul.f32 %v853, 1.442695
      %v865 = vpow.pop %v864
      %v866 = vmul.f32 %v854, 1.442695
      %v867 = vpow.pop %v866
      %v868 = vmul.f32 %v855, 1.442695
      %v869 = vpow.pop %v868
      %v870 = vmul.f32 %v856, 1.442695
      %v871 = vpow.pop %v870
      %v872 = vmul.f32 %v857, 1.442695
      %v873 = vpow.pop %v872
      %882 = vset.pattern.permute.xlu0 0
      %883 = vperm.xlu0 %882, %v859
      %v884 = vpop.permute.xlu0 %883
      %885 = vset.pattern.permute.xlu0 0
      %886 = vperm.xlu0 %885, %v861
      %v887 = vpop.permute.xlu0 %886
      %888 = vset.pattern.permute.xlu0 0
      %889 = vperm.xlu0 %888, %v863
      %v890 = vpop.permute.xlu0 %889
      %891 = vset.pattern.permute.xlu0 0
      %892 = vperm.xlu0 %891, %v865
      %v893 = vpop.permute.xlu0 %892
      %894 = vset.pattern.permute.xlu0 0
      %895 = vperm.xlu0 %894, %v867
      %v896 = vpop.permute.xlu0 %895
      %897 = vset.pattern.permute.xlu0 0
      %898 = vperm.xlu0 %897, %v869
      %v899 = vpop.permute.xlu0 %898
      %900 = vset.pattern.permute.xlu0 0
      %901 = vperm.xlu0 %900, %v871
      %v902 = vpop.permute.xlu0 %901
      %903 = vset.pattern.permute.xlu0 0
      %904 = vperm.xlu0 %903, %v873
      %v905 = vpop.permute.xlu0 %904
      %v906 = vlaneseq
      %v907 = vshrl.u32 %v906, 7
      %v908 = vsub.s32 %v757, %v907
      %v909 = vrot.slane %v884, %v908
      %v910 = vlaneseq
      %v911 = vshrl.u32 %v910, 7
      %v912 = vsub.s32 %v757, %v911
      %v913 = vrot.slane %v887, %v912
      %v914 = vlaneseq
      %v915 = vshrl.u32 %v914, 7
      %v916 = vsub.s32 %v757, %v915
      %v917 = vrot.slane %v890, %v916
      %v918 = vlaneseq
      %v919 = vshrl.u32 %v918, 7
      %v920 = vsub.s32 %v757, %v919
      %v921 = vrot.slane %v893, %v920
      %v922 = vlaneseq
      %v923 = vshrl.u32 %v922, 7
      %v924 = vsub.s32 %v757, %v923
      %v925 = vrot.slane %v896, %v924
      %v926 = vlaneseq
      %v927 = vshrl.u32 %v926, 7
      %v928 = vsub.s32 %v757, %v927
      %v929 = vrot.slane %v899, %v928
      %v930 = vlaneseq
      %v931 = vshrl.u32 %v930, 7
      %v932 = vsub.s32 %v757, %v931
      %v933 = vrot.slane %v902, %v932
      %v934 = vlaneseq
      %v935 = vshrl.u32 %v934, 7
      %v936 = vsub.s32 %v757, %v935
      %v937 = vrot.slane %v905, %v936
      %v938 = vsel %vm790, %v913, %v909
      %v939 = vsel %vm792, %v917, %v938
      %v940 = vsel %vm794, %v921, %v939
      %v941 = vsel %vm796, %v925, %v940
      %v942 = vsel %vm798, %v929, %v941
      %v943 = vsel %vm800, %v933, %v942
      %v944 = vsel %vm802, %v937, %v943
      %v946 = vsel %vm805, %v944, 0.0
      %947 = vadd.xlane.f32.xlu0 %v946
      %v948 = vpop.xlane.xlu0 %947
      %v950 = vlaneseq
      %v951 = vshrl.u32 %v950, 7
      %v952 = vsub.s32 0, %v951
      %v953 = vrot.slane %v948, %v952
      %v954 = vlaneseq
      %v955 = vshrl.u32 %v954, 7
      %v956 = vsub.s32 1, %v955
      %v957 = vrot.slane %v948, %v956
      %v958 = vlaneseq
      %v959 = vshrl.u32 %v958, 7
      %v960 = vsub.s32 2, %v959
      %v961 = vrot.slane %v948, %v960
      %v962 = vlaneseq
      %v963 = vshrl.u32 %v962, 7
      %v964 = vsub.s32 3, %v963
      %v965 = vrot.slane %v948, %v964
      %v966 = vlaneseq
      %v967 = vshrl.u32 %v966, 7
      %v968 = vsub.s32 4, %v967
      %v969 = vrot.slane %v948, %v968
      %v970 = vlaneseq
      %v971 = vshrl.u32 %v970, 7
      %v972 = vsub.s32 5, %v971
      %v973 = vrot.slane %v948, %v972
      %v974 = vlaneseq
      %v975 = vshrl.u32 %v974, 7
      %v976 = vsub.s32 6, %v975
      %v977 = vrot.slane %v948, %v976
      %v978 = vlaneseq
      %v979 = vshrl.u32 %v978, 7
      %v980 = vsub.s32 7, %v979
      %v981 = vrot.slane %v948, %v980
      %v990 = vrcp.pop %v953
      %v991 = vmul.f32 %v859, %v990
      %v992 = vrcp.pop %v957
      %v993 = vmul.f32 %v861, %v992
      %v994 = vrcp.pop %v961
      %v995 = vmul.f32 %v863, %v994
      %v996 = vrcp.pop %v965
      %v997 = vmul.f32 %v865, %v996
      %v998 = vrcp.pop %v969
      %v999 = vmul.f32 %v867, %v998
      %v1000 = vrcp.pop %v973
      %v1001 = vmul.f32 %v869, %v1000
      %v1002 = vrcp.pop %v977
      %v1003 = vmul.f32 %v871, %v1002
      %v1004 = vrcp.pop %v981
      %v1005 = vmul.f32 %v873, %v1004
      %1007 = vset.pattern.permute.xlu0 0
      %1008 = vperm.xlu0 %1007, %v991
      %v1009 = vpop.permute.xlu0 %1008
      %1012 = vset.pattern.permute.xlu0 0
      %1013 = vperm.xlu0 %1012, %v993
      %v1014 = vpop.permute.xlu0 %1013
      %1017 = vset.pattern.permute.xlu0 0
      %1018 = vperm.xlu0 %1017, %v995
      %v1019 = vpop.permute.xlu0 %1018
      %1022 = vset.pattern.permute.xlu0 0
      %1023 = vperm.xlu0 %1022, %v997
      %v1024 = vpop.permute.xlu0 %1023
      %1027 = vset.pattern.permute.xlu0 0
      %1028 = vperm.xlu0 %1027, %v999
      %v1029 = vpop.permute.xlu0 %1028
      %1032 = vset.pattern.permute.xlu0 0
      %1033 = vperm.xlu0 %1032, %v1001
      %v1034 = vpop.permute.xlu0 %1033
      %1037 = vset.pattern.permute.xlu0 0
      %1038 = vperm.xlu0 %1037, %v1003
      %v1039 = vpop.permute.xlu0 %1038
      %1042 = vset.pattern.permute.xlu0 0
      %1043 = vperm.xlu0 %1042, %v1005
      %v1044 = vpop.permute.xlu0 %1043
      %v1046 = vmul.f32 %v1009, %v108
      %v1047 = vmul.f32 %v1014, %v109
      %v1048 = vmul.f32 %v1019, %v110
      %v1049 = vmul.f32 %v1024, %v111
      %v1050 = vmul.f32 %v1029, %v112
      %v1051 = vmul.f32 %v1034, %v113
      %v1052 = vmul.f32 %v1039, %v114
      %v1053 = vmul.f32 %v1044, %v115
      %v1054 = vsel %vm230, %v1046, 0.0
      %v1055 = vrot.slane %v1054, 4
      %v1056 = vadd.f32 %v1054, %v1055
      %v1057 = vrot.slane %v1056, 2
      %v1058 = vadd.f32 %v1056, %v1057
      %v1059 = vrot.slane %v1058, 1
      %v1060 = vadd.f32 %v1058, %v1059
      %v1061 = vsel %vm230, %v1047, 0.0
      %v1062 = vrot.slane %v1061, 4
      %v1063 = vadd.f32 %v1061, %v1062
      %v1064 = vrot.slane %v1063, 2
      %v1065 = vadd.f32 %v1063, %v1064
      %v1066 = vrot.slane %v1065, 1
      %v1067 = vadd.f32 %v1065, %v1066
      %v1068 = vsel %vm230, %v1048, 0.0
      %v1069 = vrot.slane %v1068, 4
      %v1070 = vadd.f32 %v1068, %v1069
      %v1071 = vrot.slane %v1070, 2
      %v1072 = vadd.f32 %v1070, %v1071
      %v1073 = vrot.slane %v1072, 1
      %v1074 = vadd.f32 %v1072, %v1073
      %v1075 = vsel %vm230, %v1049, 0.0
      %v1076 = vrot.slane %v1075, 4
      %v1077 = vadd.f32 %v1075, %v1076
      %v1078 = vrot.slane %v1077, 2
      %v1079 = vadd.f32 %v1077, %v1078
      %v1080 = vrot.slane %v1079, 1
      %v1081 = vadd.f32 %v1079, %v1080
      %v1082 = vsel %vm230, %v1050, 0.0
      %v1083 = vrot.slane %v1082, 4
      %v1084 = vadd.f32 %v1082, %v1083
      %v1085 = vrot.slane %v1084, 2
      %v1086 = vadd.f32 %v1084, %v1085
      %v1087 = vrot.slane %v1086, 1
      %v1088 = vadd.f32 %v1086, %v1087
      %v1089 = vsel %vm230, %v1051, 0.0
      %v1090 = vrot.slane %v1089, 4
      %v1091 = vadd.f32 %v1089, %v1090
      %v1092 = vrot.slane %v1091, 2
      %v1093 = vadd.f32 %v1091, %v1092
      %v1094 = vrot.slane %v1093, 1
      %v1095 = vadd.f32 %v1093, %v1094
      %v1096 = vsel %vm230, %v1052, 0.0
      %v1097 = vrot.slane %v1096, 4
      %v1098 = vadd.f32 %v1096, %v1097
      %v1099 = vrot.slane %v1098, 2
      %v1100 = vadd.f32 %v1098, %v1099
      %v1101 = vrot.slane %v1100, 1
      %v1102 = vadd.f32 %v1100, %v1101
      %v1103 = vsel %vm230, %v1053, 0.0
      %v1104 = vrot.slane %v1103, 4
      %v1105 = vadd.f32 %v1103, %v1104
      %v1106 = vrot.slane %v1105, 2
      %v1107 = vadd.f32 %v1105, %v1106
      %v1108 = vrot.slane %v1107, 1
      %v1109 = vadd.f32 %v1107, %v1108
      %v1110 = vld [vmem:[%s9] sm:$0xff]
      %v1111 = vld [vmem:[%s9 + $0x8] sm:$0xff]
      %v1112 = vld [vmem:[%s9 + $0x10] sm:$0xff]
      %v1113 = vld [vmem:[%s9 + $0x18] sm:$0xff]
      %v1114 = vld [vmem:[#allocation4] sm:$0x1]
      %v1116 = vlaneseq
      %v1117 = vshrl.u32 %v1116, 7
      %v1118 = vsub.s32 0, %v1117
      %v1119 = vrot.slane %v1114, %v1118
      %1121 = vmatprep.subr.mxu0 0.0
      %1122 = vmatpush1.msra.mxu0 0.0
      %1123 = vmatprep.subr.mxu0 0.0
      %1124 = vmatpush1.msra.mxu0 0.0
      %1125 = vmatprep.subr.mxu0 0.0
      %1126 = vmatpush1.msra.mxu0 0.0
      %1127 = vmatprep.subr.mxu0 0.0
      %1128 = vmatpush1.msra.mxu0 0.0
      %1129 = vmatprep.subr.mxu0 0.0
      %1130 = vmatpush1.msra.mxu0 0.0
      %1131 = vmatprep.subr.mxu0 0.0
      %1132 = vmatpush1.msra.mxu0 0.0
      %1133 = vmatprep.subr.mxu0 0.0
      %1134 = vmatpush1.msra.mxu0 0.0
      %1135 = vmatprep.subr.mxu0 0.0
      %1136 = vmatpush1.msra.mxu0 0.0
      %1137 = vmatprep.subr.mxu0 0.0
      %1138 = vmatpush1.msra.mxu0 0.0
      %1139 = vmatprep.subr.mxu0 0.0
      %1140 = vmatpush1.msra.mxu0 0.0
      %1141 = vmatprep.subr.mxu0 0.0
      %1142 = vmatpush1.msra.mxu0 0.0
      %1143 = vmatprep.subr.mxu0 0.0
      %1144 = vmatpush1.msra.mxu0 0.0
      %1145 = vmatprep.subr.mxu0 0.0
      %1146 = vmatpush1.msra.mxu0 %v1113
      %1147 = vmatprep.subr.mxu0 0.0
      %1148 = vmatpush1.msra.mxu0 %v1112
      %1149 = vmatprep.subr.mxu0 0.0
      %1150 = vmatpush1.msra.mxu0 %v1111
      %1151 = vmatprep.subr.mxu0 0.0
      %1152 = vmatpush1.msra.mxu0 %v1110
      %1153 = vmatprep.subr.mxu0 0.0
      %1154 = vmatpush2.msra.mxu0 0.0
      %1155 = vmatprep.subr.mxu0 0.0
      %1156 = vmatpush2.msra.mxu0 0.0
      %1157 = vmatprep.subr.mxu0 0.0
      %1158 = vmatpush2.msra.mxu0 0.0
      %1159 = vmatprep.subr.mxu0 0.0
      %1160 = vmatpush2.msra.mxu0 0.0
      %1161 = vmatprep.subr.mxu0 0.0
      %1162 = vmatpush2.msra.mxu0 0.0
      %1163 = vmatprep.subr.mxu0 0.0
      %1164 = vmatpush2.msra.mxu0 0.0
      %1165 = vmatprep.subr.mxu0 0.0
      %1166 = vmatpush2.msra.mxu0 0.0
      %1167 = vmatprep.subr.mxu0 0.0
      %1168 = vmatpush2.msra.mxu0 0.0
      %1169 = vmatprep.subr.mxu0 0.0
      %1170 = vmatpush2.msra.mxu0 0.0
      %1171 = vmatprep.subr.mxu0 0.0
      %1172 = vmatpush2.msra.mxu0 0.0
      %1173 = vmatprep.subr.mxu0 0.0
      %1174 = vmatpush2.msra.mxu0 0.0
      %1175 = vmatprep.subr.mxu0 0.0
      %1176 = vmatpush2.msra.mxu0 0.0
      %1177 = vmatprep.subr.mxu0 0.0
      %1178 = vmatpush2.msra.mxu0 0.0
      %1179 = vmatprep.subr.mxu0 0.0
      %1180 = vmatpush2.msra.mxu0 0.0
      %1181 = vmatprep.subr.mxu0 0.0
      %1182 = vmatpush2.msra.mxu0 0.0
      %1183 = vmatprep.subr.mxu0 0.0
      %1184 = vmatpush2.msra.mxu0 0.0
      %1185 = vmatprep.mubr.f32.mxu0 0.0
      %1186 = vmatmul.mubr.f32.gmra.mxu0 %v388
      %v1187 = vpop.f32.mrf.mxu0
      %v1188 = vadd.f32 %v1119, %v1187
      %v1189 = vpop.f32.mrf.mxu0
      %1190 = vdwg.mxu0
      %v1191 = vld [vmem:[%s8] sm:$0xff]
      %v1192 = vld [vmem:[%s8 + $0x8] sm:$0xff]
      %v1193 = vld [vmem:[%s8 + $0x10] sm:$0xff]
      %v1194 = vld [vmem:[%s8 + $0x18] sm:$0xff]
      %v1196 = vsel %vm230, %v304, 0
      %1198 = vmatprep.subr.mxu0 0.0
      %1199 = vmatpush1.msra.mxu0 0.0
      %1200 = vmatprep.subr.mxu0 0.0
      %1201 = vmatpush1.msra.mxu0 0.0
      %1202 = vmatprep.subr.mxu0 0.0
      %1203 = vmatpush1.msra.mxu0 0.0
      %1204 = vmatprep.subr.mxu0 0.0
      %1205 = vmatpush1.msra.mxu0 0.0
      %1206 = vmatprep.subr.mxu0 0.0
      %1207 = vmatpush1.msra.mxu0 0.0
      %1208 = vmatprep.subr.mxu0 0.0
      %1209 = vmatpush1.msra.mxu0 0.0
      %1210 = vmatprep.subr.mxu0 0.0
      %1211 = vmatpush1.msra.mxu0 0.0
      %1212 = vmatprep.subr.mxu0 0.0
      %1213 = vmatpush1.msra.mxu0 0.0
      %1214 = vmatprep.subr.mxu0 0.0
      %1215 = vmatpush1.msra.mxu0 0.0
      %1216 = vmatprep.subr.mxu0 0.0
      %1217 = vmatpush1.msra.mxu0 0.0
      %1218 = vmatprep.subr.mxu0 0.0
      %1219 = vmatpush1.msra.mxu0 0.0
      %1220 = vmatprep.subr.mxu0 0.0
      %1221 = vmatpush1.msra.mxu0 0.0
      %1222 = vmatprep.subr.mxu0 0.0
      %1223 = vmatpush1.msra.mxu0 %v1194
      %1224 = vmatprep.subr.mxu0 0.0
      %1225 = vmatpush1.msra.mxu0 %v1193
      %1226 = vmatprep.subr.mxu0 0.0
      %1227 = vmatpush1.msra.mxu0 %v1192
      %1228 = vmatprep.subr.mxu0 0.0
      %1229 = vmatpush1.msra.mxu0 %v1191
      %1230 = vmatprep.subr.mxu0 0.0
      %1231 = vmatpush2.msra.mxu0 0.0
      %1232 = vmatprep.subr.mxu0 0.0
      %1233 = vmatpush2.msra.mxu0 0.0
      %1234 = vmatprep.subr.mxu0 0.0
      %1235 = vmatpush2.msra.mxu0 0.0
      %1236 = vmatprep.subr.mxu0 0.0
      %1237 = vmatpush2.msra.mxu0 0.0
      %1238 = vmatprep.subr.mxu0 0.0
      %1239 = vmatpush2.msra.mxu0 0.0
      %1240 = vmatprep.subr.mxu0 0.0
      %1241 = vmatpush2.msra.mxu0 0.0
      %1242 = vmatprep.subr.mxu0 0.0
      %1243 = vmatpush2.msra.mxu0 0.0
      %1244 = vmatprep.subr.mxu0 0.0
      %1245 = vmatpush2.msra.mxu0 0.0
      %1246 = vmatprep.subr.mxu0 0.0
      %1247 = vmatpush2.msra.mxu0 0.0
      %1248 = vmatprep.subr.mxu0 0.0
      %1249 = vmatpush2.msra.mxu0 0.0
      %1250 = vmatprep.subr.mxu0 0.0
      %1251 = vmatpush2.msra.mxu0 0.0
      %1252 = vmatprep.subr.mxu0 0.0
      %1253 = vmatpush2.msra.mxu0 0.0
      %1254 = vmatprep.subr.mxu0 0.0
      %1255 = vmatpush2.msra.mxu0 0.0
      %1256 = vmatprep.subr.mxu0 0.0
      %1257 = vmatpush2.msra.mxu0 0.0
      %1258 = vmatprep.subr.mxu0 0.0
      %1259 = vmatpush2.msra.mxu0 0.0
      %1260 = vmatprep.subr.mxu0 0.0
      %1261 = vmatpush2.msra.mxu0 0.0
      %1262 = vmatprep.mubr.f32.mxu0 0.0
      %1263 = vmatmul.mubr.f32.gmra.mxu0 %v1196
      %v1264 = vpop.f32.mrf.mxu0
      %v1265 = vadd.f32 0.0, %v1264
      %v1266 = vpop.f32.mrf.mxu0
      %1267 = vdwg.mxu0
      %v1268 = vadd.f32 %v1188, %v1265
      %v1269 = vld [vmem:[%s8 + $0x20] sm:$0xff]
      %v1270 = vld [vmem:[%s8 + $0x28] sm:$0xff]
      %v1271 = vld [vmem:[%s8 + $0x30] sm:$0xff]
      %v1272 = vld [vmem:[%s8 + $0x38] sm:$0xff]
      %v1281 = vsel %vm790, %v1067, %v1060
      %v1282 = vsel %vm792, %v1074, %v1281
      %v1283 = vsel %vm794, %v1081, %v1282
      %v1284 = vsel %vm796, %v1088, %v1283
      %v1285 = vsel %vm798, %v1095, %v1284
      %v1286 = vsel %vm800, %v1102, %v1285
      %v1287 = vsel %vm802, %v1109, %v1286
      %v1288 = vsel %vm230, %v1287, 0
      %1290 = vmatprep.subr.mxu0 0.0
      %1291 = vmatpush1.msra.mxu0 0.0
      %1292 = vmatprep.subr.mxu0 0.0
      %1293 = vmatpush1.msra.mxu0 0.0
      %1294 = vmatprep.subr.mxu0 0.0
      %1295 = vmatpush1.msra.mxu0 0.0
      %1296 = vmatprep.subr.mxu0 0.0
      %1297 = vmatpush1.msra.mxu0 0.0
      %1298 = vmatprep.subr.mxu0 0.0
      %1299 = vmatpush1.msra.mxu0 0.0
      %1300 = vmatprep.subr.mxu0 0.0
      %1301 = vmatpush1.msra.mxu0 0.0
      %1302 = vmatprep.subr.mxu0 0.0
      %1303 = vmatpush1.msra.mxu0 0.0
      %1304 = vmatprep.subr.mxu0 0.0
      %1305 = vmatpush1.msra.mxu0 0.0
      %1306 = vmatprep.subr.mxu0 0.0
      %1307 = vmatpush1.msra.mxu0 0.0
      %1308 = vmatprep.subr.mxu0 0.0
      %1309 = vmatpush1.msra.mxu0 0.0
      %1310 = vmatprep.subr.mxu0 0.0
      %1311 = vmatpush1.msra.mxu0 0.0
      %1312 = vmatprep.subr.mxu0 0.0
      %1313 = vmatpush1.msra.mxu0 0.0
      %1314 = vmatprep.subr.mxu0 0.0
      %1315 = vmatpush1.msra.mxu0 %v1272
      %1316 = vmatprep.subr.mxu0 0.0
      %1317 = vmatpush1.msra.mxu0 %v1271
      %1318 = vmatprep.subr.mxu0 0.0
      %1319 = vmatpush1.msra.mxu0 %v1270
      %1320 = vmatprep.subr.mxu0 0.0
      %1321 = vmatpush1.msra.mxu0 %v1269
      %1322 = vmatprep.subr.mxu0 0.0
      %1323 = vmatpush2.msra.mxu0 0.0
      %1324 = vmatprep.subr.mxu0 0.0
      %1325 = vmatpush2.msra.mxu0 0.0
      %1326 = vmatprep.subr.mxu0 0.0
      %1327 = vmatpush2.msra.mxu0 0.0
      %1328 = vmatprep.subr.mxu0 0.0
      %1329 = vmatpush2.msra.mxu0 0.0
      %1330 = vmatprep.subr.mxu0 0.0
      %1331 = vmatpush2.msra.mxu0 0.0
      %1332 = vmatprep.subr.mxu0 0.0
      %1333 = vmatpush2.msra.mxu0 0.0
      %1334 = vmatprep.subr.mxu0 0.0
      %1335 = vmatpush2.msra.mxu0 0.0
      %1336 = vmatprep.subr.mxu0 0.0
      %1337 = vmatpush2.msra.mxu0 0.0
      %1338 = vmatprep.subr.mxu0 0.0
      %1339 = vmatpush2.msra.mxu0 0.0
      %1340 = vmatprep.subr.mxu0 0.0
      %1341 = vmatpush2.msra.mxu0 0.0
      %1342 = vmatprep.subr.mxu0 0.0
      %1343 = vmatpush2.msra.mxu0 0.0
      %1344 = vmatprep.subr.mxu0 0.0
      %1345 = vmatpush2.msra.mxu0 0.0
      %1346 = vmatprep.subr.mxu0 0.0
      %1347 = vmatpush2.msra.mxu0 0.0
      %1348 = vmatprep.subr.mxu0 0.0
      %1349 = vmatpush2.msra.mxu0 0.0
      %1350 = vmatprep.subr.mxu0 0.0
      %1351 = vmatpush2.msra.mxu0 0.0
      %1352 = vmatprep.subr.mxu0 0.0
      %1353 = vmatpush2.msra.mxu0 0.0
      %1354 = vmatprep.mubr.f32.mxu0 0.0
      %1355 = vmatmul.mubr.f32.gmra.mxu0 %v1288
      %v1356 = vpop.f32.mrf.mxu0
      %v1357 = vadd.f32 0.0, %v1356
      %v1358 = vpop.f32.mrf.mxu0
      %1359 = vdwg.mxu0
      %v1360 = vadd.f32 %v1268, %v1357
      %v1361 = vxor.u32 %v1360, 2147483648
      %v1362 = vmul.f32 %v1361, 1.442695
      %v1363 = vpow.pop %v1362
      %v1364 = vadd.f32 %v1363, 1.0
      %v1365 = vrcp.pop %v1364
      %v1366 = vmul.f32 1.0, %v1365
      %1371 = vrot.lane.b32.xlu0 %v1110, 96
      %v1372 = vpop.permute.xlu0 %1371
      %1373 = vrot.lane.b32.xlu0 %v1111, 96
      %v1374 = vpop.permute.xlu0 %1373
      %1375 = vrot.lane.b32.xlu0 %v1112, 96
      %v1376 = vpop.permute.xlu0 %1375
      %1377 = vrot.lane.b32.xlu0 %v1113, 96
      %v1378 = vpop.permute.xlu0 %1377
      %1383 = vrot.lane.b32.xlu0 %v1119, 96
      %v1384 = vpop.permute.xlu0 %1383
      %1386 = vmatprep.subr.mxu0 0.0
      %1387 = vmatpush1.msra.mxu0 0.0
      %1388 = vmatprep.subr.mxu0 0.0
      %1389 = vmatpush1.msra.mxu0 0.0
      %1390 = vmatprep.subr.mxu0 0.0
      %1391 = vmatpush1.msra.mxu0 0.0
      %1392 = vmatprep.subr.mxu0 0.0
      %1393 = vmatpush1.msra.mxu0 0.0
      %1394 = vmatprep.subr.mxu0 0.0
      %1395 = vmatpush1.msra.mxu0 0.0
      %1396 = vmatprep.subr.mxu0 0.0
      %1397 = vmatpush1.msra.mxu0 0.0
      %1398 = vmatprep.subr.mxu0 0.0
      %1399 = vmatpush1.msra.mxu0 0.0
      %1400 = vmatprep.subr.mxu0 0.0
      %1401 = vmatpush1.msra.mxu0 0.0
      %1402 = vmatprep.subr.mxu0 0.0
      %1403 = vmatpush1.msra.mxu0 0.0
      %1404 = vmatprep.subr.mxu0 0.0
      %1405 = vmatpush1.msra.mxu0 0.0
      %1406 = vmatprep.subr.mxu0 0.0
      %1407 = vmatpush1.msra.mxu0 0.0
      %1408 = vmatprep.subr.mxu0 0.0
      %1409 = vmatpush1.msra.mxu0 0.0
      %1410 = vmatprep.subr.mxu0 0.0
      %1411 = vmatpush1.msra.mxu0 %v1378
      %1412 = vmatprep.subr.mxu0 0.0
      %1413 = vmatpush1.msra.mxu0 %v1376
      %1414 = vmatprep.subr.mxu0 0.0
      %1415 = vmatpush1.msra.mxu0 %v1374
      %1416 = vmatprep.subr.mxu0 0.0
      %1417 = vmatpush1.msra.mxu0 %v1372
      %1418 = vmatprep.subr.mxu0 0.0
      %1419 = vmatpush2.msra.mxu0 0.0
      %1420 = vmatprep.subr.mxu0 0.0
      %1421 = vmatpush2.msra.mxu0 0.0
      %1422 = vmatprep.subr.mxu0 0.0
      %1423 = vmatpush2.msra.mxu0 0.0
      %1424 = vmatprep.subr.mxu0 0.0
      %1425 = vmatpush2.msra.mxu0 0.0
      %1426 = vmatprep.subr.mxu0 0.0
      %1427 = vmatpush2.msra.mxu0 0.0
      %1428 = vmatprep.subr.mxu0 0.0
      %1429 = vmatpush2.msra.mxu0 0.0
      %1430 = vmatprep.subr.mxu0 0.0
      %1431 = vmatpush2.msra.mxu0 0.0
      %1432 = vmatprep.subr.mxu0 0.0
      %1433 = vmatpush2.msra.mxu0 0.0
      %1434 = vmatprep.subr.mxu0 0.0
      %1435 = vmatpush2.msra.mxu0 0.0
      %1436 = vmatprep.subr.mxu0 0.0
      %1437 = vmatpush2.msra.mxu0 0.0
      %1438 = vmatprep.subr.mxu0 0.0
      %1439 = vmatpush2.msra.mxu0 0.0
      %1440 = vmatprep.subr.mxu0 0.0
      %1441 = vmatpush2.msra.mxu0 0.0
      %1442 = vmatprep.subr.mxu0 0.0
      %1443 = vmatpush2.msra.mxu0 0.0
      %1444 = vmatprep.subr.mxu0 0.0
      %1445 = vmatpush2.msra.mxu0 0.0
      %1446 = vmatprep.subr.mxu0 0.0
      %1447 = vmatpush2.msra.mxu0 0.0
      %1448 = vmatprep.subr.mxu0 0.0
      %1449 = vmatpush2.msra.mxu0 0.0
      %1450 = vmatprep.mubr.f32.mxu0 0.0
      %1451 = vmatmul.mubr.f32.gmra.mxu0 %v388
      %v1452 = vpop.f32.mrf.mxu0
      %v1453 = vadd.f32 %v1384, %v1452
      %v1454 = vpop.f32.mrf.mxu0
      %1455 = vdwg.mxu0
      %1460 = vrot.lane.b32.xlu0 %v1191, 96
      %v1461 = vpop.permute.xlu0 %1460
      %1462 = vrot.lane.b32.xlu0 %v1192, 96
      %v1463 = vpop.permute.xlu0 %1462
      %1464 = vrot.lane.b32.xlu0 %v1193, 96
      %v1465 = vpop.permute.xlu0 %1464
      %1466 = vrot.lane.b32.xlu0 %v1194, 96
      %v1467 = vpop.permute.xlu0 %1466
      %1472 = vmatprep.subr.mxu0 0.0
      %1473 = vmatpush1.msra.mxu0 0.0
      %1474 = vmatprep.subr.mxu0 0.0
      %1475 = vmatpush1.msra.mxu0 0.0
      %1476 = vmatprep.subr.mxu0 0.0
      %1477 = vmatpush1.msra.mxu0 0.0
      %1478 = vmatprep.subr.mxu0 0.0
      %1479 = vmatpush1.msra.mxu0 0.0
      %1480 = vmatprep.subr.mxu0 0.0
      %1481 = vmatpush1.msra.mxu0 0.0
      %1482 = vmatprep.subr.mxu0 0.0
      %1483 = vmatpush1.msra.mxu0 0.0
      %1484 = vmatprep.subr.mxu0 0.0
      %1485 = vmatpush1.msra.mxu0 0.0
      %1486 = vmatprep.subr.mxu0 0.0
      %1487 = vmatpush1.msra.mxu0 0.0
      %1488 = vmatprep.subr.mxu0 0.0
      %1489 = vmatpush1.msra.mxu0 0.0
      %1490 = vmatprep.subr.mxu0 0.0
      %1491 = vmatpush1.msra.mxu0 0.0
      %1492 = vmatprep.subr.mxu0 0.0
      %1493 = vmatpush1.msra.mxu0 0.0
      %1494 = vmatprep.subr.mxu0 0.0
      %1495 = vmatpush1.msra.mxu0 0.0
      %1496 = vmatprep.subr.mxu0 0.0
      %1497 = vmatpush1.msra.mxu0 %v1467
      %1498 = vmatprep.subr.mxu0 0.0
      %1499 = vmatpush1.msra.mxu0 %v1465
      %1500 = vmatprep.subr.mxu0 0.0
      %1501 = vmatpush1.msra.mxu0 %v1463
      %1502 = vmatprep.subr.mxu0 0.0
      %1503 = vmatpush1.msra.mxu0 %v1461
      %1504 = vmatprep.subr.mxu0 0.0
      %1505 = vmatpush2.msra.mxu0 0.0
      %1506 = vmatprep.subr.mxu0 0.0
      %1507 = vmatpush2.msra.mxu0 0.0
      %1508 = vmatprep.subr.mxu0 0.0
      %1509 = vmatpush2.msra.mxu0 0.0
      %1510 = vmatprep.subr.mxu0 0.0
      %1511 = vmatpush2.msra.mxu0 0.0
      %1512 = vmatprep.subr.mxu0 0.0
      %1513 = vmatpush2.msra.mxu0 0.0
      %1514 = vmatprep.subr.mxu0 0.0
      %1515 = vmatpush2.msra.mxu0 0.0
      %1516 = vmatprep.subr.mxu0 0.0
      %1517 = vmatpush2.msra.mxu0 0.0
      %1518 = vmatprep.subr.mxu0 0.0
      %1519 = vmatpush2.msra.mxu0 0.0
      %1520 = vmatprep.subr.mxu0 0.0
      %1521 = vmatpush2.msra.mxu0 0.0
      %1522 = vmatprep.subr.mxu0 0.0
      %1523 = vmatpush2.msra.mxu0 0.0
      %1524 = vmatprep.subr.mxu0 0.0
      %1525 = vmatpush2.msra.mxu0 0.0
      %1526 = vmatprep.subr.mxu0 0.0
      %1527 = vmatpush2.msra.mxu0 0.0
      %1528 = vmatprep.subr.mxu0 0.0
      %1529 = vmatpush2.msra.mxu0 0.0
      %1530 = vmatprep.subr.mxu0 0.0
      %1531 = vmatpush2.msra.mxu0 0.0
      %1532 = vmatprep.subr.mxu0 0.0
      %1533 = vmatpush2.msra.mxu0 0.0
      %1534 = vmatprep.subr.mxu0 0.0
      %1535 = vmatpush2.msra.mxu0 0.0
      %1536 = vmatprep.mubr.f32.mxu0 0.0
      %1537 = vmatmul.mubr.f32.gmra.mxu0 %v1196
      %v1538 = vpop.f32.mrf.mxu0
      %v1539 = vadd.f32 0.0, %v1538
      %v1540 = vpop.f32.mrf.mxu0
      %1541 = vdwg.mxu0
      %v1542 = vadd.f32 %v1453, %v1539
      %1547 = vrot.lane.b32.xlu0 %v1269, 96
      %v1548 = vpop.permute.xlu0 %1547
      %1549 = vrot.lane.b32.xlu0 %v1270, 96
      %v1550 = vpop.permute.xlu0 %1549
      %1551 = vrot.lane.b32.xlu0 %v1271, 96
      %v1552 = vpop.permute.xlu0 %1551
      %1553 = vrot.lane.b32.xlu0 %v1272, 96
      %v1554 = vpop.permute.xlu0 %1553
      %1559 = vmatprep.subr.mxu0 0.0
      %1560 = vmatpush1.msra.mxu0 0.0
      %1561 = vmatprep.subr.mxu0 0.0
      %1562 = vmatpush1.msra.mxu0 0.0
      %1563 = vmatprep.subr.mxu0 0.0
      %1564 = vmatpush1.msra.mxu0 0.0
      %1565 = vmatprep.subr.mxu0 0.0
      %1566 = vmatpush1.msra.mxu0 0.0
      %1567 = vmatprep.subr.mxu0 0.0
      %1568 = vmatpush1.msra.mxu0 0.0
      %1569 = vmatprep.subr.mxu0 0.0
      %1570 = vmatpush1.msra.mxu0 0.0
      %1571 = vmatprep.subr.mxu0 0.0
      %1572 = vmatpush1.msra.mxu0 0.0
      %1573 = vmatprep.subr.mxu0 0.0
      %1574 = vmatpush1.msra.mxu0 0.0
      %1575 = vmatprep.subr.mxu0 0.0
      %1576 = vmatpush1.msra.mxu0 0.0
      %1577 = vmatprep.subr.mxu0 0.0
      %1578 = vmatpush1.msra.mxu0 0.0
      %1579 = vmatprep.subr.mxu0 0.0
      %1580 = vmatpush1.msra.mxu0 0.0
      %1581 = vmatprep.subr.mxu0 0.0
      %1582 = vmatpush1.msra.mxu0 0.0
      %1583 = vmatprep.subr.mxu0 0.0
      %1584 = vmatpush1.msra.mxu0 %v1554
      %1585 = vmatprep.subr.mxu0 0.0
      %1586 = vmatpush1.msra.mxu0 %v1552
      %1587 = vmatprep.subr.mxu0 0.0
      %1588 = vmatpush1.msra.mxu0 %v1550
      %1589 = vmatprep.subr.mxu0 0.0
      %1590 = vmatpush1.msra.mxu0 %v1548
      %1591 = vmatprep.subr.mxu0 0.0
      %1592 = vmatpush2.msra.mxu0 0.0
      %1593 = vmatprep.subr.mxu0 0.0
      %1594 = vmatpush2.msra.mxu0 0.0
      %1595 = vmatprep.subr.mxu0 0.0
      %1596 = vmatpush2.msra.mxu0 0.0
      %1597 = vmatprep.subr.mxu0 0.0
      %1598 = vmatpush2.msra.mxu0 0.0
      %1599 = vmatprep.subr.mxu0 0.0
      %1600 = vmatpush2.msra.mxu0 0.0
      %1601 = vmatprep.subr.mxu0 0.0
      %1602 = vmatpush2.msra.mxu0 0.0
      %1603 = vmatprep.subr.mxu0 0.0
      %1604 = vmatpush2.msra.mxu0 0.0
      %1605 = vmatprep.subr.mxu0 0.0
      %1606 = vmatpush2.msra.mxu0 0.0
      %1607 = vmatprep.subr.mxu0 0.0
      %1608 = vmatpush2.msra.mxu0 0.0
      %1609 = vmatprep.subr.mxu0 0.0
      %1610 = vmatpush2.msra.mxu0 0.0
      %1611 = vmatprep.subr.mxu0 0.0
      %1612 = vmatpush2.msra.mxu0 0.0
      %1613 = vmatprep.subr.mxu0 0.0
      %1614 = vmatpush2.msra.mxu0 0.0
      %1615 = vmatprep.subr.mxu0 0.0
      %1616 = vmatpush2.msra.mxu0 0.0
      %1617 = vmatprep.subr.mxu0 0.0
      %1618 = vmatpush2.msra.mxu0 0.0
      %1619 = vmatprep.subr.mxu0 0.0
      %1620 = vmatpush2.msra.mxu0 0.0
      %1621 = vmatprep.subr.mxu0 0.0
      %1622 = vmatpush2.msra.mxu0 0.0
      %1623 = vmatprep.mubr.f32.mxu0 0.0
      %1624 = vmatmul.mubr.f32.gmra.mxu0 %v1288
      %v1625 = vpop.f32.mrf.mxu0
      %v1626 = vadd.f32 0.0, %v1625
      %v1627 = vpop.f32.mrf.mxu0
      %1628 = vdwg.mxu0
      %v1629 = vadd.f32 %v1542, %v1626
      %v1630 = vxor.u32 %v1629, 2147483648
      %v1631 = vmul.f32 %v1630, 1.442695
      %v1632 = vpow.pop %v1631
      %v1633 = vadd.f32 %v1632, 1.0
      %v1634 = vrcp.pop %v1633
      %v1635 = vmul.f32 1.0, %v1634
      %1636 = vrot.lane.b32.xlu0 %v1110, 64
      %v1637 = vpop.permute.xlu0 %1636
      %1638 = vrot.lane.b32.xlu0 %v1111, 64
      %v1639 = vpop.permute.xlu0 %1638
      %1640 = vrot.lane.b32.xlu0 %v1112, 64
      %v1641 = vpop.permute.xlu0 %1640
      %1642 = vrot.lane.b32.xlu0 %v1113, 64
      %v1643 = vpop.permute.xlu0 %1642
      %1648 = vrot.lane.b32.xlu0 %v1119, 64
      %v1649 = vpop.permute.xlu0 %1648
      %1651 = vmatprep.subr.mxu0 0.0
      %1652 = vmatpush1.msra.mxu0 0.0
      %1653 = vmatprep.subr.mxu0 0.0
      %1654 = vmatpush1.msra.mxu0 0.0
      %1655 = vmatprep.subr.mxu0 0.0
      %1656 = vmatpush1.msra.mxu0 0.0
      %1657 = vmatprep.subr.mxu0 0.0
      %1658 = vmatpush1.msra.mxu0 0.0
      %1659 = vmatprep.subr.mxu0 0.0
      %1660 = vmatpush1.msra.mxu0 0.0
      %1661 = vmatprep.subr.mxu0 0.0
      %1662 = vmatpush1.msra.mxu0 0.0
      %1663 = vmatprep.subr.mxu0 0.0
      %1664 = vmatpush1.msra.mxu0 0.0
      %1665 = vmatprep.subr.mxu0 0.0
      %1666 = vmatpush1.msra.mxu0 0.0
      %1667 = vmatprep.subr.mxu0 0.0
      %1668 = vmatpush1.msra.mxu0 0.0
      %1669 = vmatprep.subr.mxu0 0.0
      %1670 = vmatpush1.msra.mxu0 0.0
      %1671 = vmatprep.subr.mxu0 0.0
      %1672 = vmatpush1.msra.mxu0 0.0
      %1673 = vmatprep.subr.mxu0 0.0
      %1674 = vmatpush1.msra.mxu0 0.0
      %1675 = vmatprep.subr.mxu0 0.0
      %1676 = vmatpush1.msra.mxu0 %v1643
      %1677 = vmatprep.subr.mxu0 0.0
      %1678 = vmatpush1.msra.mxu0 %v1641
      %1679 = vmatprep.subr.mxu0 0.0
      %1680 = vmatpush1.msra.mxu0 %v1639
      %1681 = vmatprep.subr.mxu0 0.0
      %1682 = vmatpush1.msra.mxu0 %v1637
      %1683 = vmatprep.subr.mxu0 0.0
      %1684 = vmatpush2.msra.mxu0 0.0
      %1685 = vmatprep.subr.mxu0 0.0
      %1686 = vmatpush2.msra.mxu0 0.0
      %1687 = vmatprep.subr.mxu0 0.0
      %1688 = vmatpush2.msra.mxu0 0.0
      %1689 = vmatprep.subr.mxu0 0.0
      %1690 = vmatpush2.msra.mxu0 0.0
      %1691 = vmatprep.subr.mxu0 0.0
      %1692 = vmatpush2.msra.mxu0 0.0
      %1693 = vmatprep.subr.mxu0 0.0
      %1694 = vmatpush2.msra.mxu0 0.0
      %1695 = vmatprep.subr.mxu0 0.0
      %1696 = vmatpush2.msra.mxu0 0.0
      %1697 = vmatprep.subr.mxu0 0.0
      %1698 = vmatpush2.msra.mxu0 0.0
      %1699 = vmatprep.subr.mxu0 0.0
      %1700 = vmatpush2.msra.mxu0 0.0
      %1701 = vmatprep.subr.mxu0 0.0
      %1702 = vmatpush2.msra.mxu0 0.0
      %1703 = vmatprep.subr.mxu0 0.0
      %1704 = vmatpush2.msra.mxu0 0.0
      %1705 = vmatprep.subr.mxu0 0.0
      %1706 = vmatpush2.msra.mxu0 0.0
      %1707 = vmatprep.subr.mxu0 0.0
      %1708 = vmatpush2.msra.mxu0 0.0
      %1709 = vmatprep.subr.mxu0 0.0
      %1710 = vmatpush2.msra.mxu0 0.0
      %1711 = vmatprep.subr.mxu0 0.0
      %1712 = vmatpush2.msra.mxu0 0.0
      %1713 = vmatprep.subr.mxu0 0.0
      %1714 = vmatpush2.msra.mxu0 0.0
      %1715 = vmatprep.mubr.f32.mxu0 0.0
      %1716 = vmatmul.mubr.f32.gmra.mxu0 %v388
      %v1717 = vpop.f32.mrf.mxu0
      %v1718 = vadd.f32 %v1649, %v1717
      %v1719 = vpop.f32.mrf.mxu0
      %1720 = vdwg.mxu0
      %1721 = vrot.lane.b32.xlu0 %v1191, 64
      %v1722 = vpop.permute.xlu0 %1721
      %1723 = vrot.lane.b32.xlu0 %v1192, 64
      %v1724 = vpop.permute.xlu0 %1723
      %1725 = vrot.lane.b32.xlu0 %v1193, 64
      %v1726 = vpop.permute.xlu0 %1725
      %1727 = vrot.lane.b32.xlu0 %v1194, 64
      %v1728 = vpop.permute.xlu0 %1727
      %1733 = vmatprep.subr.mxu0 0.0
      %1734 = vmatpush1.msra.mxu0 0.0
      %1735 = vmatprep.subr.mxu0 0.0
      %1736 = vmatpush1.msra.mxu0 0.0
      %1737 = vmatprep.subr.mxu0 0.0
      %1738 = vmatpush1.msra.mxu0 0.0
      %1739 = vmatprep.subr.mxu0 0.0
      %1740 = vmatpush1.msra.mxu0 0.0
      %1741 = vmatprep.subr.mxu0 0.0
      %1742 = vmatpush1.msra.mxu0 0.0
      %1743 = vmatprep.subr.mxu0 0.0
      %1744 = vmatpush1.msra.mxu0 0.0
      %1745 = vmatprep.subr.mxu0 0.0
      %1746 = vmatpush1.msra.mxu0 0.0
      %1747 = vmatprep.subr.mxu0 0.0
      %1748 = vmatpush1.msra.mxu0 0.0
      %1749 = vmatprep.subr.mxu0 0.0
      %1750 = vmatpush1.msra.mxu0 0.0
      %1751 = vmatprep.subr.mxu0 0.0
      %1752 = vmatpush1.msra.mxu0 0.0
      %1753 = vmatprep.subr.mxu0 0.0
      %1754 = vmatpush1.msra.mxu0 0.0
      %1755 = vmatprep.subr.mxu0 0.0
      %1756 = vmatpush1.msra.mxu0 0.0
      %1757 = vmatprep.subr.mxu0 0.0
      %1758 = vmatpush1.msra.mxu0 %v1728
      %1759 = vmatprep.subr.mxu0 0.0
      %1760 = vmatpush1.msra.mxu0 %v1726
      %1761 = vmatprep.subr.mxu0 0.0
      %1762 = vmatpush1.msra.mxu0 %v1724
      %1763 = vmatprep.subr.mxu0 0.0
      %1764 = vmatpush1.msra.mxu0 %v1722
      %1765 = vmatprep.subr.mxu0 0.0
      %1766 = vmatpush2.msra.mxu0 0.0
      %1767 = vmatprep.subr.mxu0 0.0
      %1768 = vmatpush2.msra.mxu0 0.0
      %1769 = vmatprep.subr.mxu0 0.0
      %1770 = vmatpush2.msra.mxu0 0.0
      %1771 = vmatprep.subr.mxu0 0.0
      %1772 = vmatpush2.msra.mxu0 0.0
      %1773 = vmatprep.subr.mxu0 0.0
      %1774 = vmatpush2.msra.mxu0 0.0
      %1775 = vmatprep.subr.mxu0 0.0
      %1776 = vmatpush2.msra.mxu0 0.0
      %1777 = vmatprep.subr.mxu0 0.0
      %1778 = vmatpush2.msra.mxu0 0.0
      %1779 = vmatprep.subr.mxu0 0.0
      %1780 = vmatpush2.msra.mxu0 0.0
      %1781 = vmatprep.subr.mxu0 0.0
      %1782 = vmatpush2.msra.mxu0 0.0
      %1783 = vmatprep.subr.mxu0 0.0
      %1784 = vmatpush2.msra.mxu0 0.0
      %1785 = vmatprep.subr.mxu0 0.0
      %1786 = vmatpush2.msra.mxu0 0.0
      %1787 = vmatprep.subr.mxu0 0.0
      %1788 = vmatpush2.msra.mxu0 0.0
      %1789 = vmatprep.subr.mxu0 0.0
      %1790 = vmatpush2.msra.mxu0 0.0
      %1791 = vmatprep.subr.mxu0 0.0
      %1792 = vmatpush2.msra.mxu0 0.0
      %1793 = vmatprep.subr.mxu0 0.0
      %1794 = vmatpush2.msra.mxu0 0.0
      %1795 = vmatprep.subr.mxu0 0.0
      %1796 = vmatpush2.msra.mxu0 0.0
      %1797 = vmatprep.mubr.f32.mxu0 0.0
      %1798 = vmatmul.mubr.f32.gmra.mxu0 %v1196
      %v1799 = vpop.f32.mrf.mxu0
      %v1800 = vadd.f32 0.0, %v1799
      %v1801 = vpop.f32.mrf.mxu0
      %1802 = vdwg.mxu0
      %v1803 = vadd.f32 %v1718, %v1800
      %1804 = vrot.lane.b32.xlu0 %v1269, 64
      %v1805 = vpop.permute.xlu0 %1804
      %1806 = vrot.lane.b32.xlu0 %v1270, 64
      %v1807 = vpop.permute.xlu0 %1806
      %1808 = vrot.lane.b32.xlu0 %v1271, 64
      %v1809 = vpop.permute.xlu0 %1808
      %1810 = vrot.lane.b32.xlu0 %v1272, 64
      %v1811 = vpop.permute.xlu0 %1810
      %1816 = vmatprep.subr.mxu0 0.0
      %1817 = vmatpush1.msra.mxu0 0.0
      %1818 = vmatprep.subr.mxu0 0.0
      %1819 = vmatpush1.msra.mxu0 0.0
      %1820 = vmatprep.subr.mxu0 0.0
      %1821 = vmatpush1.msra.mxu0 0.0
      %1822 = vmatprep.subr.mxu0 0.0
      %1823 = vmatpush1.msra.mxu0 0.0
      %1824 = vmatprep.subr.mxu0 0.0
      %1825 = vmatpush1.msra.mxu0 0.0
      %1826 = vmatprep.subr.mxu0 0.0
      %1827 = vmatpush1.msra.mxu0 0.0
      %1828 = vmatprep.subr.mxu0 0.0
      %1829 = vmatpush1.msra.mxu0 0.0
      %1830 = vmatprep.subr.mxu0 0.0
      %1831 = vmatpush1.msra.mxu0 0.0
      %1832 = vmatprep.subr.mxu0 0.0
      %1833 = vmatpush1.msra.mxu0 0.0
      %1834 = vmatprep.subr.mxu0 0.0
      %1835 = vmatpush1.msra.mxu0 0.0
      %1836 = vmatprep.subr.mxu0 0.0
      %1837 = vmatpush1.msra.mxu0 0.0
      %1838 = vmatprep.subr.mxu0 0.0
      %1839 = vmatpush1.msra.mxu0 0.0
      %1840 = vmatprep.subr.mxu0 0.0
      %1841 = vmatpush1.msra.mxu0 %v1811
      %1842 = vmatprep.subr.mxu0 0.0
      %1843 = vmatpush1.msra.mxu0 %v1809
      %1844 = vmatprep.subr.mxu0 0.0
      %1845 = vmatpush1.msra.mxu0 %v1807
      %1846 = vmatprep.subr.mxu0 0.0
      %1847 = vmatpush1.msra.mxu0 %v1805
      %1848 = vmatprep.subr.mxu0 0.0
      %1849 = vmatpush2.msra.mxu0 0.0
      %1850 = vmatprep.subr.mxu0 0.0
      %1851 = vmatpush2.msra.mxu0 0.0
      %1852 = vmatprep.subr.mxu0 0.0
      %1853 = vmatpush2.msra.mxu0 0.0
      %1854 = vmatprep.subr.mxu0 0.0
      %1855 = vmatpush2.msra.mxu0 0.0
      %1856 = vmatprep.subr.mxu0 0.0
      %1857 = vmatpush2.msra.mxu0 0.0
      %1858 = vmatprep.subr.mxu0 0.0
      %1859 = vmatpush2.msra.mxu0 0.0
      %1860 = vmatprep.subr.mxu0 0.0
      %1861 = vmatpush2.msra.mxu0 0.0
      %1862 = vmatprep.subr.mxu0 0.0
      %1863 = vmatpush2.msra.mxu0 0.0
      %1864 = vmatprep.subr.mxu0 0.0
      %1865 = vmatpush2.msra.mxu0 0.0
      %1866 = vmatprep.subr.mxu0 0.0
      %1867 = vmatpush2.msra.mxu0 0.0
      %1868 = vmatprep.subr.mxu0 0.0
      %1869 = vmatpush2.msra.mxu0 0.0
      %1870 = vmatprep.subr.mxu0 0.0
      %1871 = vmatpush2.msra.mxu0 0.0
      %1872 = vmatprep.subr.mxu0 0.0
      %1873 = vmatpush2.msra.mxu0 0.0
      %1874 = vmatprep.subr.mxu0 0.0
      %1875 = vmatpush2.msra.mxu0 0.0
      %1876 = vmatprep.subr.mxu0 0.0
      %1877 = vmatpush2.msra.mxu0 0.0
      %1878 = vmatprep.subr.mxu0 0.0
      %1879 = vmatpush2.msra.mxu0 0.0
      %1880 = vmatprep.mubr.f32.mxu0 0.0
      %1881 = vmatmul.mubr.f32.gmra.mxu0 %v1288
      %v1882 = vpop.f32.mrf.mxu0
      %v1883 = vadd.f32 0.0, %v1882
      %v1884 = vpop.f32.mrf.mxu0
      %1885 = vdwg.mxu0
      %v1886 = vadd.f32 %v1803, %v1883
      %v1887 = vtanh.pop %v1886
      %1888 = vrot.lane.b32.xlu0 %v1110, 32
      %v1889 = vpop.permute.xlu0 %1888
      %1890 = vrot.lane.b32.xlu0 %v1111, 32
      %v1891 = vpop.permute.xlu0 %1890
      %1892 = vrot.lane.b32.xlu0 %v1112, 32
      %v1893 = vpop.permute.xlu0 %1892
      %1894 = vrot.lane.b32.xlu0 %v1113, 32
      %v1895 = vpop.permute.xlu0 %1894
      %1900 = vrot.lane.b32.xlu0 %v1119, 32
      %v1901 = vpop.permute.xlu0 %1900
      %1903 = vmatprep.subr.mxu0 0.0
      %1904 = vmatpush1.msra.mxu0 0.0
      %1905 = vmatprep.subr.mxu0 0.0
      %1906 = vmatpush1.msra.mxu0 0.0
      %1907 = vmatprep.subr.mxu0 0.0
      %1908 = vmatpush1.msra.mxu0 0.0
      %1909 = vmatprep.subr.mxu0 0.0
      %1910 = vmatpush1.msra.mxu0 0.0
      %1911 = vmatprep.subr.mxu0 0.0
      %1912 = vmatpush1.msra.mxu0 0.0
      %1913 = vmatprep.subr.mxu0 0.0
      %1914 = vmatpush1.msra.mxu0 0.0
      %1915 = vmatprep.subr.mxu0 0.0
      %1916 = vmatpush1.msra.mxu0 0.0
      %1917 = vmatprep.subr.mxu0 0.0
      %1918 = vmatpush1.msra.mxu0 0.0
      %1919 = vmatprep.subr.mxu0 0.0
      %1920 = vmatpush1.msra.mxu0 0.0
      %1921 = vmatprep.subr.mxu0 0.0
      %1922 = vmatpush1.msra.mxu0 0.0
      %1923 = vmatprep.subr.mxu0 0.0
      %1924 = vmatpush1.msra.mxu0 0.0
      %1925 = vmatprep.subr.mxu0 0.0
      %1926 = vmatpush1.msra.mxu0 0.0
      %1927 = vmatprep.subr.mxu0 0.0
      %1928 = vmatpush1.msra.mxu0 %v1895
      %1929 = vmatprep.subr.mxu0 0.0
      %1930 = vmatpush1.msra.mxu0 %v1893
      %1931 = vmatprep.subr.mxu0 0.0
      %1932 = vmatpush1.msra.mxu0 %v1891
      %1933 = vmatprep.subr.mxu0 0.0
      %1934 = vmatpush1.msra.mxu0 %v1889
      %1935 = vmatprep.subr.mxu0 0.0
      %1936 = vmatpush2.msra.mxu0 0.0
      %1937 = vmatprep.subr.mxu0 0.0
      %1938 = vmatpush2.msra.mxu0 0.0
      %1939 = vmatprep.subr.mxu0 0.0
      %1940 = vmatpush2.msra.mxu0 0.0
      %1941 = vmatprep.subr.mxu0 0.0
      %1942 = vmatpush2.msra.mxu0 0.0
      %1943 = vmatprep.subr.mxu0 0.0
      %1944 = vmatpush2.msra.mxu0 0.0
      %1945 = vmatprep.subr.mxu0 0.0
      %1946 = vmatpush2.msra.mxu0 0.0
      %1947 = vmatprep.subr.mxu0 0.0
      %1948 = vmatpush2.msra.mxu0 0.0
      %1949 = vmatprep.subr.mxu0 0.0
      %1950 = vmatpush2.msra.mxu0 0.0
      %1951 = vmatprep.subr.mxu0 0.0
      %1952 = vmatpush2.msra.mxu0 0.0
      %1953 = vmatprep.subr.mxu0 0.0
      %1954 = vmatpush2.msra.mxu0 0.0
      %1955 = vmatprep.subr.mxu0 0.0
      %1956 = vmatpush2.msra.mxu0 0.0
      %1957 = vmatprep.subr.mxu0 0.0
      %1958 = vmatpush2.msra.mxu0 0.0
      %1959 = vmatprep.subr.mxu0 0.0
      %1960 = vmatpush2.msra.mxu0 0.0
      %1961 = vmatprep.subr.mxu0 0.0
      %1962 = vmatpush2.msra.mxu0 0.0
      %1963 = vmatprep.subr.mxu0 0.0
      %1964 = vmatpush2.msra.mxu0 0.0
      %1965 = vmatprep.subr.mxu0 0.0
      %1966 = vmatpush2.msra.mxu0 0.0
      %1967 = vmatprep.mubr.f32.mxu0 0.0
      %1968 = vmatmul.mubr.f32.gmra.mxu0 %v388
      %v1969 = vpop.f32.mrf.mxu0
      %v1970 = vadd.f32 %v1901, %v1969
      %v1971 = vpop.f32.mrf.mxu0
      %1972 = vdwg.mxu0
      %1973 = vrot.lane.b32.xlu0 %v1191, 32
      %v1974 = vpop.permute.xlu0 %1973
      %1975 = vrot.lane.b32.xlu0 %v1192, 32
      %v1976 = vpop.permute.xlu0 %1975
      %1977 = vrot.lane.b32.xlu0 %v1193, 32
      %v1978 = vpop.permute.xlu0 %1977
      %1979 = vrot.lane.b32.xlu0 %v1194, 32
      %v1980 = vpop.permute.xlu0 %1979
      %1985 = vmatprep.subr.mxu0 0.0
      %1986 = vmatpush1.msra.mxu0 0.0
      %1987 = vmatprep.subr.mxu0 0.0
      %1988 = vmatpush1.msra.mxu0 0.0
      %1989 = vmatprep.subr.mxu0 0.0
      %1990 = vmatpush1.msra.mxu0 0.0
      %1991 = vmatprep.subr.mxu0 0.0
      %1992 = vmatpush1.msra.mxu0 0.0
      %1993 = vmatprep.subr.mxu0 0.0
      %1994 = vmatpush1.msra.mxu0 0.0
      %1995 = vmatprep.subr.mxu0 0.0
      %1996 = vmatpush1.msra.mxu0 0.0
      %1997 = vmatprep.subr.mxu0 0.0
      %1998 = vmatpush1.msra.mxu0 0.0
      %1999 = vmatprep.subr.mxu0 0.0
      %2000 = vmatpush1.msra.mxu0 0.0
      %2001 = vmatprep.subr.mxu0 0.0
      %2002 = vmatpush1.msra.mxu0 0.0
      %2003 = vmatprep.subr.mxu0 0.0
      %2004 = vmatpush1.msra.mxu0 0.0
      %2005 = vmatprep.subr.mxu0 0.0
      %2006 = vmatpush1.msra.mxu0 0.0
      %2007 = vmatprep.subr.mxu0 0.0
      %2008 = vmatpush1.msra.mxu0 0.0
      %2009 = vmatprep.subr.mxu0 0.0
      %2010 = vmatpush1.msra.mxu0 %v1980
      %2011 = vmatprep.subr.mxu0 0.0
      %2012 = vmatpush1.msra.mxu0 %v1978
      %2013 = vmatprep.subr.mxu0 0.0
      %2014 = vmatpush1.msra.mxu0 %v1976
      %2015 = vmatprep.subr.mxu0 0.0
      %2016 = vmatpush1.msra.mxu0 %v1974
      %2017 = vmatprep.subr.mxu0 0.0
      %2018 = vmatpush2.msra.mxu0 0.0
      %2019 = vmatprep.subr.mxu0 0.0
      %2020 = vmatpush2.msra.mxu0 0.0
      %2021 = vmatprep.subr.mxu0 0.0
      %2022 = vmatpush2.msra.mxu0 0.0
      %2023 = vmatprep.subr.mxu0 0.0
      %2024 = vmatpush2.msra.mxu0 0.0
      %2025 = vmatprep.subr.mxu0 0.0
      %2026 = vmatpush2.msra.mxu0 0.0
      %2027 = vmatprep.subr.mxu0 0.0
      %2028 = vmatpush2.msra.mxu0 0.0
      %2029 = vmatprep.subr.mxu0 0.0
      %2030 = vmatpush2.msra.mxu0 0.0
      %2031 = vmatprep.subr.mxu0 0.0
      %2032 = vmatpush2.msra.mxu0 0.0
      %2033 = vmatprep.subr.mxu0 0.0
      %2034 = vmatpush2.msra.mxu0 0.0
      %2035 = vmatprep.subr.mxu0 0.0
      %2036 = vmatpush2.msra.mxu0 0.0
      %2037 = vmatprep.subr.mxu0 0.0
      %2038 = vmatpush2.msra.mxu0 0.0
      %2039 = vmatprep.subr.mxu0 0.0
      %2040 = vmatpush2.msra.mxu0 0.0
      %2041 = vmatprep.subr.mxu0 0.0
      %2042 = vmatpush2.msra.mxu0 0.0
      %2043 = vmatprep.subr.mxu0 0.0
      %2044 = vmatpush2.msra.mxu0 0.0
      %2045 = vmatprep.subr.mxu0 0.0
      %2046 = vmatpush2.msra.mxu0 0.0
      %2047 = vmatprep.subr.mxu0 0.0
      %2048 = vmatpush2.msra.mxu0 0.0
      %2049 = vmatprep.mubr.f32.mxu0 0.0
      %2050 = vmatmul.mubr.f32.gmra.mxu0 %v1196
      %v2051 = vpop.f32.mrf.mxu0
      %v2052 = vadd.f32 0.0, %v2051
      %v2053 = vpop.f32.mrf.mxu0
      %2054 = vdwg.mxu0
      %v2055 = vadd.f32 %v1970, %v2052
      %2056 = vrot.lane.b32.xlu0 %v1269, 32
      %v2057 = vpop.permute.xlu0 %2056
      %2058 = vrot.lane.b32.xlu0 %v1270, 32
      %v2059 = vpop.permute.xlu0 %2058
      %2060 = vrot.lane.b32.xlu0 %v1271, 32
      %v2061 = vpop.permute.xlu0 %2060
      %2062 = vrot.lane.b32.xlu0 %v1272, 32
      %v2063 = vpop.permute.xlu0 %2062
      %2068 = vmatprep.subr.mxu0 0.0
      %2069 = vmatpush1.msra.mxu0 0.0
      %2070 = vmatprep.subr.mxu0 0.0
      %2071 = vmatpush1.msra.mxu0 0.0
      %2072 = vmatprep.subr.mxu0 0.0
      %2073 = vmatpush1.msra.mxu0 0.0
      %2074 = vmatprep.subr.mxu0 0.0
      %2075 = vmatpush1.msra.mxu0 0.0
      %2076 = vmatprep.subr.mxu0 0.0
      %2077 = vmatpush1.msra.mxu0 0.0
      %2078 = vmatprep.subr.mxu0 0.0
      %2079 = vmatpush1.msra.mxu0 0.0
      %2080 = vmatprep.subr.mxu0 0.0
      %2081 = vmatpush1.msra.mxu0 0.0
      %2082 = vmatprep.subr.mxu0 0.0
      %2083 = vmatpush1.msra.mxu0 0.0
      %2084 = vmatprep.subr.mxu0 0.0
      %2085 = vmatpush1.msra.mxu0 0.0
      %2086 = vmatprep.subr.mxu0 0.0
      %2087 = vmatpush1.msra.mxu0 0.0
      %2088 = vmatprep.subr.mxu0 0.0
      %2089 = vmatpush1.msra.mxu0 0.0
      %2090 = vmatprep.subr.mxu0 0.0
      %2091 = vmatpush1.msra.mxu0 0.0
      %2092 = vmatprep.subr.mxu0 0.0
      %2093 = vmatpush1.msra.mxu0 %v2063
      %2094 = vmatprep.subr.mxu0 0.0
      %2095 = vmatpush1.msra.mxu0 %v2061
      %2096 = vmatprep.subr.mxu0 0.0
      %2097 = vmatpush1.msra.mxu0 %v2059
      %2098 = vmatprep.subr.mxu0 0.0
      %2099 = vmatpush1.msra.mxu0 %v2057
      %2100 = vmatprep.subr.mxu0 0.0
      %2101 = vmatpush2.msra.mxu0 0.0
      %2102 = vmatprep.subr.mxu0 0.0
      %2103 = vmatpush2.msra.mxu0 0.0
      %2104 = vmatprep.subr.mxu0 0.0
      %2105 = vmatpush2.msra.mxu0 0.0
      %2106 = vmatprep.subr.mxu0 0.0
      %2107 = vmatpush2.msra.mxu0 0.0
      %2108 = vmatprep.subr.mxu0 0.0
      %2109 = vmatpush2.msra.mxu0 0.0
      %2110 = vmatprep.subr.mxu0 0.0
      %2111 = vmatpush2.msra.mxu0 0.0
      %2112 = vmatprep.subr.mxu0 0.0
      %2113 = vmatpush2.msra.mxu0 0.0
      %2114 = vmatprep.subr.mxu0 0.0
      %2115 = vmatpush2.msra.mxu0 0.0
      %2116 = vmatprep.subr.mxu0 0.0
      %2117 = vmatpush2.msra.mxu0 0.0
      %2118 = vmatprep.subr.mxu0 0.0
      %2119 = vmatpush2.msra.mxu0 0.0
      %2120 = vmatprep.subr.mxu0 0.0
      %2121 = vmatpush2.msra.mxu0 0.0
      %2122 = vmatprep.subr.mxu0 0.0
      %2123 = vmatpush2.msra.mxu0 0.0
      %2124 = vmatprep.subr.mxu0 0.0
      %2125 = vmatpush2.msra.mxu0 0.0
      %2126 = vmatprep.subr.mxu0 0.0
      %2127 = vmatpush2.msra.mxu0 0.0
      %2128 = vmatprep.subr.mxu0 0.0
      %2129 = vmatpush2.msra.mxu0 0.0
      %2130 = vmatprep.subr.mxu0 0.0
      %2131 = vmatpush2.msra.mxu0 0.0
      %2132 = vmatprep.mubr.f32.mxu0 0.0
      %2133 = vmatmul.mubr.f32.gmra.mxu0 %v1288
      %v2134 = vpop.f32.mrf.mxu0
      %v2135 = vadd.f32 0.0, %v2134
      %v2136 = vpop.f32.mrf.mxu0
      %2137 = vdwg.mxu0
      %v2138 = vadd.f32 %v2055, %v2135
      %v2139 = vxor.u32 %v2138, 2147483648
      %v2140 = vmul.f32 %v2139, 1.442695
      %v2141 = vpow.pop %v2140
      %v2142 = vadd.f32 %v2141, 1.0
      %v2143 = vrcp.pop %v2142
      %v2144 = vmul.f32 1.0, %v2143
      %v2145 = vmul.f32 %v1635, %v130
      %v2146 = vmul.f32 %v1366, %v1887
      %v2147 = vadd.f32 %v2145, %v2146
      %v2148 = vtanh.pop %v2147
      %v2149 = vmul.f32 %v2144, %v2148
      %v2150 = vld [vmem:[%s12] sm:$0xff]
      %v2151 = vld [vmem:[%s12 + $0x8] sm:$0xff]
      %v2152 = vld [vmem:[%s12 + $0x10] sm:$0xff]
      %v2153 = vld [vmem:[%s12 + $0x18] sm:$0xff]
      %v2154 = vld [vmem:[#allocation6] sm:$0x1]
      %v2156 = vlaneseq
      %v2157 = vshrl.u32 %v2156, 7
      %v2158 = vsub.s32 0, %v2157
      %v2159 = vrot.slane %v2154, %v2158
      %2161 = vmatprep.subr.mxu0 0.0
      %2162 = vmatpush1.msra.mxu0 0.0
      %2163 = vmatprep.subr.mxu0 0.0
      %2164 = vmatpush1.msra.mxu0 0.0
      %2165 = vmatprep.subr.mxu0 0.0
      %2166 = vmatpush1.msra.mxu0 0.0
      %2167 = vmatprep.subr.mxu0 0.0
      %2168 = vmatpush1.msra.mxu0 0.0
      %2169 = vmatprep.subr.mxu0 0.0
      %2170 = vmatpush1.msra.mxu0 0.0
      %2171 = vmatprep.subr.mxu0 0.0
      %2172 = vmatpush1.msra.mxu0 0.0
      %2173 = vmatprep.subr.mxu0 0.0
      %2174 = vmatpush1.msra.mxu0 0.0
      %2175 = vmatprep.subr.mxu0 0.0
      %2176 = vmatpush1.msra.mxu0 0.0
      %2177 = vmatprep.subr.mxu0 0.0
      %2178 = vmatpush1.msra.mxu0 0.0
      %2179 = vmatprep.subr.mxu0 0.0
      %2180 = vmatpush1.msra.mxu0 0.0
      %2181 = vmatprep.subr.mxu0 0.0
      %2182 = vmatpush1.msra.mxu0 0.0
      %2183 = vmatprep.subr.mxu0 0.0
      %2184 = vmatpush1.msra.mxu0 0.0
      %2185 = vmatprep.subr.mxu0 0.0
      %2186 = vmatpush1.msra.mxu0 %v2153
      %2187 = vmatprep.subr.mxu0 0.0
      %2188 = vmatpush1.msra.mxu0 %v2152
      %2189 = vmatprep.subr.mxu0 0.0
      %2190 = vmatpush1.msra.mxu0 %v2151
      %2191 = vmatprep.subr.mxu0 0.0
      %2192 = vmatpush1.msra.mxu0 %v2150
      %2193 = vmatprep.subr.mxu0 0.0
      %2194 = vmatpush2.msra.mxu0 0.0
      %2195 = vmatprep.subr.mxu0 0.0
      %2196 = vmatpush2.msra.mxu0 0.0
      %2197 = vmatprep.subr.mxu0 0.0
      %2198 = vmatpush2.msra.mxu0 0.0
      %2199 = vmatprep.subr.mxu0 0.0
      %2200 = vmatpush2.msra.mxu0 0.0
      %2201 = vmatprep.subr.mxu0 0.0
      %2202 = vmatpush2.msra.mxu0 0.0
      %2203 = vmatprep.subr.mxu0 0.0
      %2204 = vmatpush2.msra.mxu0 0.0
      %2205 = vmatprep.subr.mxu0 0.0
      %2206 = vmatpush2.msra.mxu0 0.0
      %2207 = vmatprep.subr.mxu0 0.0
      %2208 = vmatpush2.msra.mxu0 0.0
      %2209 = vmatprep.subr.mxu0 0.0
      %2210 = vmatpush2.msra.mxu0 0.0
      %2211 = vmatprep.subr.mxu0 0.0
      %2212 = vmatpush2.msra.mxu0 0.0
      %2213 = vmatprep.subr.mxu0 0.0
      %2214 = vmatpush2.msra.mxu0 0.0
      %2215 = vmatprep.subr.mxu0 0.0
      %2216 = vmatpush2.msra.mxu0 0.0
      %2217 = vmatprep.subr.mxu0 0.0
      %2218 = vmatpush2.msra.mxu0 0.0
      %2219 = vmatprep.subr.mxu0 0.0
      %2220 = vmatpush2.msra.mxu0 0.0
      %2221 = vmatprep.subr.mxu0 0.0
      %2222 = vmatpush2.msra.mxu0 0.0
      %2223 = vmatprep.subr.mxu0 0.0
      %2224 = vmatpush2.msra.mxu0 0.0
      %2225 = vmatprep.mubr.f32.mxu0 0.0
      %2226 = vmatmul.mubr.f32.gmra.mxu0 %v315
      %v2227 = vpop.f32.mrf.mxu0
      %v2228 = vadd.f32 %v2159, %v2227
      %v2229 = vpop.f32.mrf.mxu0
      %2230 = vdwg.mxu0
      %v2231 = vld [vmem:[%s11] sm:$0xff]
      %v2232 = vld [vmem:[%s11 + $0x8] sm:$0xff]
      %v2233 = vld [vmem:[%s11 + $0x10] sm:$0xff]
      %v2234 = vld [vmem:[%s11 + $0x18] sm:$0xff]
      %v2236 = vsel %vm230, %v2149, 0
      %2238 = vmatprep.subr.mxu0 0.0
      %2239 = vmatpush1.msra.mxu0 0.0
      %2240 = vmatprep.subr.mxu0 0.0
      %2241 = vmatpush1.msra.mxu0 0.0
      %2242 = vmatprep.subr.mxu0 0.0
      %2243 = vmatpush1.msra.mxu0 0.0
      %2244 = vmatprep.subr.mxu0 0.0
      %2245 = vmatpush1.msra.mxu0 0.0
      %2246 = vmatprep.subr.mxu0 0.0
      %2247 = vmatpush1.msra.mxu0 0.0
      %2248 = vmatprep.subr.mxu0 0.0
      %2249 = vmatpush1.msra.mxu0 0.0
      %2250 = vmatprep.subr.mxu0 0.0
      %2251 = vmatpush1.msra.mxu0 0.0
      %2252 = vmatprep.subr.mxu0 0.0
      %2253 = vmatpush1.msra.mxu0 0.0
      %2254 = vmatprep.subr.mxu0 0.0
      %2255 = vmatpush1.msra.mxu0 0.0
      %2256 = vmatprep.subr.mxu0 0.0
      %2257 = vmatpush1.msra.mxu0 0.0
      %2258 = vmatprep.subr.mxu0 0.0
      %2259 = vmatpush1.msra.mxu0 0.0
      %2260 = vmatprep.subr.mxu0 0.0
      %2261 = vmatpush1.msra.mxu0 0.0
      %2262 = vmatprep.subr.mxu0 0.0
      %2263 = vmatpush1.msra.mxu0 %v2234
      %2264 = vmatprep.subr.mxu0 0.0
      %2265 = vmatpush1.msra.mxu0 %v2233
      %2266 = vmatprep.subr.mxu0 0.0
      %2267 = vmatpush1.msra.mxu0 %v2232
      %2268 = vmatprep.subr.mxu0 0.0
      %2269 = vmatpush1.msra.mxu0 %v2231
      %2270 = vmatprep.subr.mxu0 0.0
      %2271 = vmatpush2.msra.mxu0 0.0
      %2272 = vmatprep.subr.mxu0 0.0
      %2273 = vmatpush2.msra.mxu0 0.0
      %2274 = vmatprep.subr.mxu0 0.0
      %2275 = vmatpush2.msra.mxu0 0.0
      %2276 = vmatprep.subr.mxu0 0.0
      %2277 = vmatpush2.msra.mxu0 0.0
      %2278 = vmatprep.subr.mxu0 0.0
      %2279 = vmatpush2.msra.mxu0 0.0
      %2280 = vmatprep.subr.mxu0 0.0
      %2281 = vmatpush2.msra.mxu0 0.0
      %2282 = vmatprep.subr.mxu0 0.0
      %2283 = vmatpush2.msra.mxu0 0.0
      %2284 = vmatprep.subr.mxu0 0.0
      %2285 = vmatpush2.msra.mxu0 0.0
      %2286 = vmatprep.subr.mxu0 0.0
      %2287 = vmatpush2.msra.mxu0 0.0
      %2288 = vmatprep.subr.mxu0 0.0
      %2289 = vmatpush2.msra.mxu0 0.0
      %2290 = vmatprep.subr.mxu0 0.0
      %2291 = vmatpush2.msra.mxu0 0.0
      %2292 = vmatprep.subr.mxu0 0.0
      %2293 = vmatpush2.msra.mxu0 0.0
      %2294 = vmatprep.subr.mxu0 0.0
      %2295 = vmatpush2.msra.mxu0 0.0
      %2296 = vmatprep.subr.mxu0 0.0
      %2297 = vmatpush2.msra.mxu0 0.0
      %2298 = vmatprep.subr.mxu0 0.0
      %2299 = vmatpush2.msra.mxu0 0.0
      %2300 = vmatprep.subr.mxu0 0.0
      %2301 = vmatpush2.msra.mxu0 0.0
      %2302 = vmatprep.mubr.f32.mxu0 0.0
      %2303 = vmatmul.mubr.f32.gmra.mxu0 %v2236
      %v2304 = vpop.f32.mrf.mxu0
      %v2305 = vadd.f32 0.0, %v2304
      %v2306 = vpop.f32.mrf.mxu0
      %2307 = vdwg.mxu0
      %v2308 = vadd.f32 %v2228, %v2305
      %v2309 = vxor.u32 %v2308, 2147483648
      %v2310 = vmul.f32 %v2309, 1.442695
      %v2311 = vpow.pop %v2310
      %v2312 = vadd.f32 %v2311, 1.0
      %v2313 = vrcp.pop %v2312
      %v2314 = vmul.f32 1.0, %v2313
      %2319 = vrot.lane.b32.xlu0 %v2150, 96
      %v2320 = vpop.permute.xlu0 %2319
      %2321 = vrot.lane.b32.xlu0 %v2151, 96
      %v2322 = vpop.permute.xlu0 %2321
      %2323 = vrot.lane.b32.xlu0 %v2152, 96
      %v2324 = vpop.permute.xlu0 %2323
      %2325 = vrot.lane.b32.xlu0 %v2153, 96
      %v2326 = vpop.permute.xlu0 %2325
      %2331 = vrot.lane.b32.xlu0 %v2159, 96
      %v2332 = vpop.permute.xlu0 %2331
      %2334 = vmatprep.subr.mxu0 0.0
      %2335 = vmatpush1.msra.mxu0 0.0
      %2336 = vmatprep.subr.mxu0 0.0
      %2337 = vmatpush1.msra.mxu0 0.0
      %2338 = vmatprep.subr.mxu0 0.0
      %2339 = vmatpush1.msra.mxu0 0.0
      %2340 = vmatprep.subr.mxu0 0.0
      %2341 = vmatpush1.msra.mxu0 0.0
      %2342 = vmatprep.subr.mxu0 0.0
      %2343 = vmatpush1.msra.mxu0 0.0
      %2344 = vmatprep.subr.mxu0 0.0
      %2345 = vmatpush1.msra.mxu0 0.0
      %2346 = vmatprep.subr.mxu0 0.0
      %2347 = vmatpush1.msra.mxu0 0.0
      %2348 = vmatprep.subr.mxu0 0.0
      %2349 = vmatpush1.msra.mxu0 0.0
      %2350 = vmatprep.subr.mxu0 0.0
      %2351 = vmatpush1.msra.mxu0 0.0
      %2352 = vmatprep.subr.mxu0 0.0
      %2353 = vmatpush1.msra.mxu0 0.0
      %2354 = vmatprep.subr.mxu0 0.0
      %2355 = vmatpush1.msra.mxu0 0.0
      %2356 = vmatprep.subr.mxu0 0.0
      %2357 = vmatpush1.msra.mxu0 0.0
      %2358 = vmatprep.subr.mxu0 0.0
      %2359 = vmatpush1.msra.mxu0 %v2326
      %2360 = vmatprep.subr.mxu0 0.0
      %2361 = vmatpush1.msra.mxu0 %v2324
      %2362 = vmatprep.subr.mxu0 0.0
      %2363 = vmatpush1.msra.mxu0 %v2322
      %2364 = vmatprep.subr.mxu0 0.0
      %2365 = vmatpush1.msra.mxu0 %v2320
      %2366 = vmatprep.subr.mxu0 0.0
      %2367 = vmatpush2.msra.mxu0 0.0
      %2368 = vmatprep.subr.mxu0 0.0
      %2369 = vmatpush2.msra.mxu0 0.0
      %2370 = vmatprep.subr.mxu0 0.0
      %2371 = vmatpush2.msra.mxu0 0.0
      %2372 = vmatprep.subr.mxu0 0.0
      %2373 = vmatpush2.msra.mxu0 0.0
      %2374 = vmatprep.subr.mxu0 0.0
      %2375 = vmatpush2.msra.mxu0 0.0
      %2376 = vmatprep.subr.mxu0 0.0
      %2377 = vmatpush2.msra.mxu0 0.0
      %2378 = vmatprep.subr.mxu0 0.0
      %2379 = vmatpush2.msra.mxu0 0.0
      %2380 = vmatprep.subr.mxu0 0.0
      %2381 = vmatpush2.msra.mxu0 0.0
      %2382 = vmatprep.subr.mxu0 0.0
      %2383 = vmatpush2.msra.mxu0 0.0
      %2384 = vmatprep.subr.mxu0 0.0
      %2385 = vmatpush2.msra.mxu0 0.0
      %2386 = vmatprep.subr.mxu0 0.0
      %2387 = vmatpush2.msra.mxu0 0.0
      %2388 = vmatprep.subr.mxu0 0.0
      %2389 = vmatpush2.msra.mxu0 0.0
      %2390 = vmatprep.subr.mxu0 0.0
      %2391 = vmatpush2.msra.mxu0 0.0
      %2392 = vmatprep.subr.mxu0 0.0
      %2393 = vmatpush2.msra.mxu0 0.0
      %2394 = vmatprep.subr.mxu0 0.0
      %2395 = vmatpush2.msra.mxu0 0.0
      %2396 = vmatprep.subr.mxu0 0.0
      %2397 = vmatpush2.msra.mxu0 0.0
      %2398 = vmatprep.mubr.f32.mxu0 0.0
      %2399 = vmatmul.mubr.f32.gmra.mxu0 %v315
      %v2400 = vpop.f32.mrf.mxu0
      %v2401 = vadd.f32 %v2332, %v2400
      %v2402 = vpop.f32.mrf.mxu0
      %2403 = vdwg.mxu0
      %2408 = vrot.lane.b32.xlu0 %v2231, 96
      %v2409 = vpop.permute.xlu0 %2408
      %2410 = vrot.lane.b32.xlu0 %v2232, 96
      %v2411 = vpop.permute.xlu0 %2410
      %2412 = vrot.lane.b32.xlu0 %v2233, 96
      %v2413 = vpop.permute.xlu0 %2412
      %2414 = vrot.lane.b32.xlu0 %v2234, 96
      %v2415 = vpop.permute.xlu0 %2414
      %2420 = vmatprep.subr.mxu0 0.0
      %2421 = vmatpush1.msra.mxu0 0.0
      %2422 = vmatprep.subr.mxu0 0.0
      %2423 = vmatpush1.msra.mxu0 0.0
      %2424 = vmatprep.subr.mxu0 0.0
      %2425 = vmatpush1.msra.mxu0 0.0
      %2426 = vmatprep.subr.mxu0 0.0
      %2427 = vmatpush1.msra.mxu0 0.0
      %2428 = vmatprep.subr.mxu0 0.0
      %2429 = vmatpush1.msra.mxu0 0.0
      %2430 = vmatprep.subr.mxu0 0.0
      %2431 = vmatpush1.msra.mxu0 0.0
      %2432 = vmatprep.subr.mxu0 0.0
      %2433 = vmatpush1.msra.mxu0 0.0
      %2434 = vmatprep.subr.mxu0 0.0
      %2435 = vmatpush1.msra.mxu0 0.0
      %2436 = vmatprep.subr.mxu0 0.0
      %2437 = vmatpush1.msra.mxu0 0.0
      %2438 = vmatprep.subr.mxu0 0.0
      %2439 = vmatpush1.msra.mxu0 0.0
      %2440 = vmatprep.subr.mxu0 0.0
      %2441 = vmatpush1.msra.mxu0 0.0
      %2442 = vmatprep.subr.mxu0 0.0
      %2443 = vmatpush1.msra.mxu0 0.0
      %2444 = vmatprep.subr.mxu0 0.0
      %2445 = vmatpush1.msra.mxu0 %v2415
      %2446 = vmatprep.subr.mxu0 0.0
      %2447 = vmatpush1.msra.mxu0 %v2413
      %2448 = vmatprep.subr.mxu0 0.0
      %2449 = vmatpush1.msra.mxu0 %v2411
      %2450 = vmatprep.subr.mxu0 0.0
      %2451 = vmatpush1.msra.mxu0 %v2409
      %2452 = vmatprep.subr.mxu0 0.0
      %2453 = vmatpush2.msra.mxu0 0.0
      %2454 = vmatprep.subr.mxu0 0.0
      %2455 = vmatpush2.msra.mxu0 0.0
      %2456 = vmatprep.subr.mxu0 0.0
      %2457 = vmatpush2.msra.mxu0 0.0
      %2458 = vmatprep.subr.mxu0 0.0
      %2459 = vmatpush2.msra.mxu0 0.0
      %2460 = vmatprep.subr.mxu0 0.0
      %2461 = vmatpush2.msra.mxu0 0.0
      %2462 = vmatprep.subr.mxu0 0.0
      %2463 = vmatpush2.msra.mxu0 0.0
      %2464 = vmatprep.subr.mxu0 0.0
      %2465 = vmatpush2.msra.mxu0 0.0
      %2466 = vmatprep.subr.mxu0 0.0
      %2467 = vmatpush2.msra.mxu0 0.0
      %2468 = vmatprep.subr.mxu0 0.0
      %2469 = vmatpush2.msra.mxu0 0.0
      %2470 = vmatprep.subr.mxu0 0.0
      %2471 = vmatpush2.msra.mxu0 0.0
      %2472 = vmatprep.subr.mxu0 0.0
      %2473 = vmatpush2.msra.mxu0 0.0
      %2474 = vmatprep.subr.mxu0 0.0
      %2475 = vmatpush2.msra.mxu0 0.0
      %2476 = vmatprep.subr.mxu0 0.0
      %2477 = vmatpush2.msra.mxu0 0.0
      %2478 = vmatprep.subr.mxu0 0.0
      %2479 = vmatpush2.msra.mxu0 0.0
      %2480 = vmatprep.subr.mxu0 0.0
      %2481 = vmatpush2.msra.mxu0 0.0
      %2482 = vmatprep.subr.mxu0 0.0
      %2483 = vmatpush2.msra.mxu0 0.0
      %2484 = vmatprep.mubr.f32.mxu0 0.0
      %2485 = vmatmul.mubr.f32.gmra.mxu0 %v2236
      %v2486 = vpop.f32.mrf.mxu0
      %v2487 = vadd.f32 0.0, %v2486
      %v2488 = vpop.f32.mrf.mxu0
      %2489 = vdwg.mxu0
      %v2490 = vadd.f32 %v2401, %v2487
      %v2491 = vxor.u32 %v2490, 2147483648
      %v2492 = vmul.f32 %v2491, 1.442695
      %v2493 = vpow.pop %v2492
      %v2494 = vadd.f32 %v2493, 1.0
      %v2495 = vrcp.pop %v2494
      %v2496 = vmul.f32 1.0, %v2495
      %2497 = vrot.lane.b32.xlu0 %v2150, 64
      %v2498 = vpop.permute.xlu0 %2497
      %2499 = vrot.lane.b32.xlu0 %v2151, 64
      %v2500 = vpop.permute.xlu0 %2499
      %2501 = vrot.lane.b32.xlu0 %v2152, 64
      %v2502 = vpop.permute.xlu0 %2501
      %2503 = vrot.lane.b32.xlu0 %v2153, 64
      %v2504 = vpop.permute.xlu0 %2503
      %2509 = vrot.lane.b32.xlu0 %v2159, 64
      %v2510 = vpop.permute.xlu0 %2509
      %2512 = vmatprep.subr.mxu0 0.0
      %2513 = vmatpush1.msra.mxu0 0.0
      %2514 = vmatprep.subr.mxu0 0.0
      %2515 = vmatpush1.msra.mxu0 0.0
      %2516 = vmatprep.subr.mxu0 0.0
      %2517 = vmatpush1.msra.mxu0 0.0
      %2518 = vmatprep.subr.mxu0 0.0
      %2519 = vmatpush1.msra.mxu0 0.0
      %2520 = vmatprep.subr.mxu0 0.0
      %2521 = vmatpush1.msra.mxu0 0.0
      %2522 = vmatprep.subr.mxu0 0.0
      %2523 = vmatpush1.msra.mxu0 0.0
      %2524 = vmatprep.subr.mxu0 0.0
      %2525 = vmatpush1.msra.mxu0 0.0
      %2526 = vmatprep.subr.mxu0 0.0
      %2527 = vmatpush1.msra.mxu0 0.0
      %2528 = vmatprep.subr.mxu0 0.0
      %2529 = vmatpush1.msra.mxu0 0.0
      %2530 = vmatprep.subr.mxu0 0.0
      %2531 = vmatpush1.msra.mxu0 0.0
      %2532 = vmatprep.subr.mxu0 0.0
      %2533 = vmatpush1.msra.mxu0 0.0
      %2534 = vmatprep.subr.mxu0 0.0
      %2535 = vmatpush1.msra.mxu0 0.0
      %2536 = vmatprep.subr.mxu0 0.0
      %2537 = vmatpush1.msra.mxu0 %v2504
      %2538 = vmatprep.subr.mxu0 0.0
      %2539 = vmatpush1.msra.mxu0 %v2502
      %2540 = vmatprep.subr.mxu0 0.0
      %2541 = vmatpush1.msra.mxu0 %v2500
      %2542 = vmatprep.subr.mxu0 0.0
      %2543 = vmatpush1.msra.mxu0 %v2498
      %2544 = vmatprep.subr.mxu0 0.0
      %2545 = vmatpush2.msra.mxu0 0.0
      %2546 = vmatprep.subr.mxu0 0.0
      %2547 = vmatpush2.msra.mxu0 0.0
      %2548 = vmatprep.subr.mxu0 0.0
      %2549 = vmatpush2.msra.mxu0 0.0
      %2550 = vmatprep.subr.mxu0 0.0
      %2551 = vmatpush2.msra.mxu0 0.0
      %2552 = vmatprep.subr.mxu0 0.0
      %2553 = vmatpush2.msra.mxu0 0.0
      %2554 = vmatprep.subr.mxu0 0.0
      %2555 = vmatpush2.msra.mxu0 0.0
      %2556 = vmatprep.subr.mxu0 0.0
      %2557 = vmatpush2.msra.mxu0 0.0
      %2558 = vmatprep.subr.mxu0 0.0
      %2559 = vmatpush2.msra.mxu0 0.0
      %2560 = vmatprep.subr.mxu0 0.0
      %2561 = vmatpush2.msra.mxu0 0.0
      %2562 = vmatprep.subr.mxu0 0.0
      %2563 = vmatpush2.msra.mxu0 0.0
      %2564 = vmatprep.subr.mxu0 0.0
      %2565 = vmatpush2.msra.mxu0 0.0
      %2566 = vmatprep.subr.mxu0 0.0
      %2567 = vmatpush2.msra.mxu0 0.0
      %2568 = vmatprep.subr.mxu0 0.0
      %2569 = vmatpush2.msra.mxu0 0.0
      %2570 = vmatprep.subr.mxu0 0.0
      %2571 = vmatpush2.msra.mxu0 0.0
      %2572 = vmatprep.subr.mxu0 0.0
      %2573 = vmatpush2.msra.mxu0 0.0
      %2574 = vmatprep.subr.mxu0 0.0
      %2575 = vmatpush2.msra.mxu0 0.0
      %2576 = vmatprep.mubr.f32.mxu0 0.0
      %2577 = vmatmul.mubr.f32.gmra.mxu0 %v315
      %v2578 = vpop.f32.mrf.mxu0
      %v2579 = vadd.f32 %v2510, %v2578
      %v2580 = vpop.f32.mrf.mxu0
      %2581 = vdwg.mxu0
      %2582 = vrot.lane.b32.xlu0 %v2231, 64
      %v2583 = vpop.permute.xlu0 %2582
      %2584 = vrot.lane.b32.xlu0 %v2232, 64
      %v2585 = vpop.permute.xlu0 %2584
      %2586 = vrot.lane.b32.xlu0 %v2233, 64
      %v2587 = vpop.permute.xlu0 %2586
      %2588 = vrot.lane.b32.xlu0 %v2234, 64
      %v2589 = vpop.permute.xlu0 %2588
      %2594 = vmatprep.subr.mxu0 0.0
      %2595 = vmatpush1.msra.mxu0 0.0
      %2596 = vmatprep.subr.mxu0 0.0
      %2597 = vmatpush1.msra.mxu0 0.0
      %2598 = vmatprep.subr.mxu0 0.0
      %2599 = vmatpush1.msra.mxu0 0.0
      %2600 = vmatprep.subr.mxu0 0.0
      %2601 = vmatpush1.msra.mxu0 0.0
      %2602 = vmatprep.subr.mxu0 0.0
      %2603 = vmatpush1.msra.mxu0 0.0
      %2604 = vmatprep.subr.mxu0 0.0
      %2605 = vmatpush1.msra.mxu0 0.0
      %2606 = vmatprep.subr.mxu0 0.0
      %2607 = vmatpush1.msra.mxu0 0.0
      %2608 = vmatprep.subr.mxu0 0.0
      %2609 = vmatpush1.msra.mxu0 0.0
      %2610 = vmatprep.subr.mxu0 0.0
      %2611 = vmatpush1.msra.mxu0 0.0
      %2612 = vmatprep.subr.mxu0 0.0
      %2613 = vmatpush1.msra.mxu0 0.0
      %2614 = vmatprep.subr.mxu0 0.0
      %2615 = vmatpush1.msra.mxu0 0.0
      %2616 = vmatprep.subr.mxu0 0.0
      %2617 = vmatpush1.msra.mxu0 0.0
      %2618 = vmatprep.subr.mxu0 0.0
      %2619 = vmatpush1.msra.mxu0 %v2589
      %2620 = vmatprep.subr.mxu0 0.0
      %2621 = vmatpush1.msra.mxu0 %v2587
      %2622 = vmatprep.subr.mxu0 0.0
      %2623 = vmatpush1.msra.mxu0 %v2585
      %2624 = vmatprep.subr.mxu0 0.0
      %2625 = vmatpush1.msra.mxu0 %v2583
      %2626 = vmatprep.subr.mxu0 0.0
      %2627 = vmatpush2.msra.mxu0 0.0
      %2628 = vmatprep.subr.mxu0 0.0
      %2629 = vmatpush2.msra.mxu0 0.0
      %2630 = vmatprep.subr.mxu0 0.0
      %2631 = vmatpush2.msra.mxu0 0.0
      %2632 = vmatprep.subr.mxu0 0.0
      %2633 = vmatpush2.msra.mxu0 0.0
      %2634 = vmatprep.subr.mxu0 0.0
      %2635 = vmatpush2.msra.mxu0 0.0
      %2636 = vmatprep.subr.mxu0 0.0
      %2637 = vmatpush2.msra.mxu0 0.0
      %2638 = vmatprep.subr.mxu0 0.0
      %2639 = vmatpush2.msra.mxu0 0.0
      %2640 = vmatprep.subr.mxu0 0.0
      %2641 = vmatpush2.msra.mxu0 0.0
      %2642 = vmatprep.subr.mxu0 0.0
      %2643 = vmatpush2.msra.mxu0 0.0
      %2644 = vmatprep.subr.mxu0 0.0
      %2645 = vmatpush2.msra.mxu0 0.0
      %2646 = vmatprep.subr.mxu0 0.0
      %2647 = vmatpush2.msra.mxu0 0.0
      %2648 = vmatprep.subr.mxu0 0.0
      %2649 = vmatpush2.msra.mxu0 0.0
      %2650 = vmatprep.subr.mxu0 0.0
      %2651 = vmatpush2.msra.mxu0 0.0
      %2652 = vmatprep.subr.mxu0 0.0
      %2653 = vmatpush2.msra.mxu0 0.0
      %2654 = vmatprep.subr.mxu0 0.0
      %2655 = vmatpush2.msra.mxu0 0.0
      %2656 = vmatprep.subr.mxu0 0.0
      %2657 = vmatpush2.msra.mxu0 0.0
      %2658 = vmatprep.mubr.f32.mxu0 0.0
      %2659 = vmatmul.mubr.f32.gmra.mxu0 %v2236
      %v2660 = vpop.f32.mrf.mxu0
      %v2661 = vadd.f32 0.0, %v2660
      %v2662 = vpop.f32.mrf.mxu0
      %2663 = vdwg.mxu0
      %v2664 = vadd.f32 %v2579, %v2661
      %v2665 = vtanh.pop %v2664
      %2666 = vrot.lane.b32.xlu0 %v2150, 32
      %v2667 = vpop.permute.xlu0 %2666
      %2668 = vrot.lane.b32.xlu0 %v2151, 32
      %v2669 = vpop.permute.xlu0 %2668
      %2670 = vrot.lane.b32.xlu0 %v2152, 32
      %v2671 = vpop.permute.xlu0 %2670
      %2672 = vrot.lane.b32.xlu0 %v2153, 32
      %v2673 = vpop.permute.xlu0 %2672
      %2678 = vrot.lane.b32.xlu0 %v2159, 32
      %v2679 = vpop.permute.xlu0 %2678
      %2681 = vmatprep.subr.mxu0 0.0
      %2682 = vmatpush1.msra.mxu0 0.0
      %2683 = vmatprep.subr.mxu0 0.0
      %2684 = vmatpush1.msra.mxu0 0.0
      %2685 = vmatprep.subr.mxu0 0.0
      %2686 = vmatpush1.msra.mxu0 0.0
      %2687 = vmatprep.subr.mxu0 0.0
      %2688 = vmatpush1.msra.mxu0 0.0
      %2689 = vmatprep.subr.mxu0 0.0
      %2690 = vmatpush1.msra.mxu0 0.0
      %2691 = vmatprep.subr.mxu0 0.0
      %2692 = vmatpush1.msra.mxu0 0.0
      %2693 = vmatprep.subr.mxu0 0.0
      %2694 = vmatpush1.msra.mxu0 0.0
      %2695 = vmatprep.subr.mxu0 0.0
      %2696 = vmatpush1.msra.mxu0 0.0
      %2697 = vmatprep.subr.mxu0 0.0
      %2698 = vmatpush1.msra.mxu0 0.0
      %2699 = vmatprep.subr.mxu0 0.0
      %2700 = vmatpush1.msra.mxu0 0.0
      %2701 = vmatprep.subr.mxu0 0.0
      %2702 = vmatpush1.msra.mxu0 0.0
      %2703 = vmatprep.subr.mxu0 0.0
      %2704 = vmatpush1.msra.mxu0 0.0
      %2705 = vmatprep.subr.mxu0 0.0
      %2706 = vmatpush1.msra.mxu0 %v2673
      %2707 = vmatprep.subr.mxu0 0.0
      %2708 = vmatpush1.msra.mxu0 %v2671
      %2709 = vmatprep.subr.mxu0 0.0
      %2710 = vmatpush1.msra.mxu0 %v2669
      %2711 = vmatprep.subr.mxu0 0.0
      %2712 = vmatpush1.msra.mxu0 %v2667
      %2713 = vmatprep.subr.mxu0 0.0
      %2714 = vmatpush2.msra.mxu0 0.0
      %2715 = vmatprep.subr.mxu0 0.0
      %2716 = vmatpush2.msra.mxu0 0.0
      %2717 = vmatprep.subr.mxu0 0.0
      %2718 = vmatpush2.msra.mxu0 0.0
      %2719 = vmatprep.subr.mxu0 0.0
      %2720 = vmatpush2.msra.mxu0 0.0
      %2721 = vmatprep.subr.mxu0 0.0
      %2722 = vmatpush2.msra.mxu0 0.0
      %2723 = vmatprep.subr.mxu0 0.0
      %2724 = vmatpush2.msra.mxu0 0.0
      %2725 = vmatprep.subr.mxu0 0.0
      %2726 = vmatpush2.msra.mxu0 0.0
      %2727 = vmatprep.subr.mxu0 0.0
      %2728 = vmatpush2.msra.mxu0 0.0
      %2729 = vmatprep.subr.mxu0 0.0
      %2730 = vmatpush2.msra.mxu0 0.0
      %2731 = vmatprep.subr.mxu0 0.0
      %2732 = vmatpush2.msra.mxu0 0.0
      %2733 = vmatprep.subr.mxu0 0.0
      %2734 = vmatpush2.msra.mxu0 0.0
      %2735 = vmatprep.subr.mxu0 0.0
      %2736 = vmatpush2.msra.mxu0 0.0
      %2737 = vmatprep.subr.mxu0 0.0
      %2738 = vmatpush2.msra.mxu0 0.0
      %2739 = vmatprep.subr.mxu0 0.0
      %2740 = vmatpush2.msra.mxu0 0.0
      %2741 = vmatprep.subr.mxu0 0.0
      %2742 = vmatpush2.msra.mxu0 0.0
      %2743 = vmatprep.subr.mxu0 0.0
      %2744 = vmatpush2.msra.mxu0 0.0
      %2745 = vmatprep.mubr.f32.mxu0 0.0
      %2746 = vmatmul.mubr.f32.gmra.mxu0 %v315
      %v2747 = vpop.f32.mrf.mxu0
      %v2748 = vadd.f32 %v2679, %v2747
      %v2749 = vpop.f32.mrf.mxu0
      %2750 = vdwg.mxu0
      %2751 = vrot.lane.b32.xlu0 %v2231, 32
      %v2752 = vpop.permute.xlu0 %2751
      %2753 = vrot.lane.b32.xlu0 %v2232, 32
      %v2754 = vpop.permute.xlu0 %2753
      %2755 = vrot.lane.b32.xlu0 %v2233, 32
      %v2756 = vpop.permute.xlu0 %2755
      %2757 = vrot.lane.b32.xlu0 %v2234, 32
      %v2758 = vpop.permute.xlu0 %2757
      %2763 = vmatprep.subr.mxu0 0.0
      %2764 = vmatpush1.msra.mxu0 0.0
      %2765 = vmatprep.subr.mxu0 0.0
      %2766 = vmatpush1.msra.mxu0 0.0
      %2767 = vmatprep.subr.mxu0 0.0
      %2768 = vmatpush1.msra.mxu0 0.0
      %2769 = vmatprep.subr.mxu0 0.0
      %2770 = vmatpush1.msra.mxu0 0.0
      %2771 = vmatprep.subr.mxu0 0.0
      %2772 = vmatpush1.msra.mxu0 0.0
      %2773 = vmatprep.subr.mxu0 0.0
      %2774 = vmatpush1.msra.mxu0 0.0
      %2775 = vmatprep.subr.mxu0 0.0
      %2776 = vmatpush1.msra.mxu0 0.0
      %2777 = vmatprep.subr.mxu0 0.0
      %2778 = vmatpush1.msra.mxu0 0.0
      %2779 = vmatprep.subr.mxu0 0.0
      %2780 = vmatpush1.msra.mxu0 0.0
      %2781 = vmatprep.subr.mxu0 0.0
      %2782 = vmatpush1.msra.mxu0 0.0
      %2783 = vmatprep.subr.mxu0 0.0
      %2784 = vmatpush1.msra.mxu0 0.0
      %2785 = vmatprep.subr.mxu0 0.0
      %2786 = vmatpush1.msra.mxu0 0.0
      %2787 = vmatprep.subr.mxu0 0.0
      %2788 = vmatpush1.msra.mxu0 %v2758
      %2789 = vmatprep.subr.mxu0 0.0
      %2790 = vmatpush1.msra.mxu0 %v2756
      %2791 = vmatprep.subr.mxu0 0.0
      %2792 = vmatpush1.msra.mxu0 %v2754
      %2793 = vmatprep.subr.mxu0 0.0
      %2794 = vmatpush1.msra.mxu0 %v2752
      %2795 = vmatprep.subr.mxu0 0.0
      %2796 = vmatpush2.msra.mxu0 0.0
      %2797 = vmatprep.subr.mxu0 0.0
      %2798 = vmatpush2.msra.mxu0 0.0
      %2799 = vmatprep.subr.mxu0 0.0
      %2800 = vmatpush2.msra.mxu0 0.0
      %2801 = vmatprep.subr.mxu0 0.0
      %2802 = vmatpush2.msra.mxu0 0.0
      %2803 = vmatprep.subr.mxu0 0.0
      %2804 = vmatpush2.msra.mxu0 0.0
      %2805 = vmatprep.subr.mxu0 0.0
      %2806 = vmatpush2.msra.mxu0 0.0
      %2807 = vmatprep.subr.mxu0 0.0
      %2808 = vmatpush2.msra.mxu0 0.0
      %2809 = vmatprep.subr.mxu0 0.0
      %2810 = vmatpush2.msra.mxu0 0.0
      %2811 = vmatprep.subr.mxu0 0.0
      %2812 = vmatpush2.msra.mxu0 0.0
      %2813 = vmatprep.subr.mxu0 0.0
      %2814 = vmatpush2.msra.mxu0 0.0
      %2815 = vmatprep.subr.mxu0 0.0
      %2816 = vmatpush2.msra.mxu0 0.0
      %2817 = vmatprep.subr.mxu0 0.0
      %2818 = vmatpush2.msra.mxu0 0.0
      %2819 = vmatprep.subr.mxu0 0.0
      %2820 = vmatpush2.msra.mxu0 0.0
      %2821 = vmatprep.subr.mxu0 0.0
      %2822 = vmatpush2.msra.mxu0 0.0
      %2823 = vmatprep.subr.mxu0 0.0
      %2824 = vmatpush2.msra.mxu0 0.0
      %2825 = vmatprep.subr.mxu0 0.0
      %2826 = vmatpush2.msra.mxu0 0.0
      %2827 = vmatprep.mubr.f32.mxu0 0.0
      %2828 = vmatmul.mubr.f32.gmra.mxu0 %v2236
      %v2829 = vpop.f32.mrf.mxu0
      %v2830 = vadd.f32 0.0, %v2829
      %v2831 = vpop.f32.mrf.mxu0
      %2832 = vdwg.mxu0
      %v2833 = vadd.f32 %v2748, %v2830
      %v2834 = vxor.u32 %v2833, 2147483648
      %v2835 = vmul.f32 %v2834, 1.442695
      %v2836 = vpow.pop %v2835
      %v2837 = vadd.f32 %v2836, 1.0
      %v2838 = vrcp.pop %v2837
      %v2839 = vmul.f32 1.0, %v2838
      %v2840 = vmul.f32 %v2496, %v131
      %v2841 = vmul.f32 %v2314, %v2665
      %v2842 = vadd.f32 %v2840, %v2841
      %v2843 = vtanh.pop %v2842
      %v2844 = vmul.f32 %v2839, %v2843
      %v2845 = vld [vmem:[%s14] sm:$0xff]
      %v2846 = vld [vmem:[%s14 + $0x8] sm:$0xff]
      %v2847 = vld [vmem:[%s14 + $0x10] sm:$0xff]
      %v2848 = vld [vmem:[%s14 + $0x18] sm:$0xff]
      %v2849 = vld [vmem:[%s14 + $0x20] sm:$0xff]
      %v2850 = vld [vmem:[%s14 + $0x28] sm:$0xff]
      %v2851 = vld [vmem:[%s14 + $0x30] sm:$0xff]
      %v2852 = vld [vmem:[%s14 + $0x38] sm:$0xff]
      %2853 = vmatprep.subr.mxu0 0.0
      %2854 = vmatpush1.msra.mxu0 0.0
      %2855 = vmatprep.subr.mxu0 0.0
      %2856 = vmatpush1.msra.mxu0 0.0
      %2857 = vmatprep.subr.mxu0 0.0
      %2858 = vmatpush1.msra.mxu0 0.0
      %2859 = vmatprep.subr.mxu0 0.0
      %2860 = vmatpush1.msra.mxu0 0.0
      %2861 = vmatprep.subr.mxu0 0.0
      %2862 = vmatpush1.msra.mxu0 0.0
      %2863 = vmatprep.subr.mxu0 0.0
      %2864 = vmatpush1.msra.mxu0 0.0
      %2865 = vmatprep.subr.mxu0 0.0
      %2866 = vmatpush1.msra.mxu0 0.0
      %2867 = vmatprep.subr.mxu0 0.0
      %2868 = vmatpush1.msra.mxu0 0.0
      %2869 = vmatprep.subr.mxu0 0.0
      %2870 = vmatpush1.msra.mxu0 0.0
      %2871 = vmatprep.subr.mxu0 0.0
      %2872 = vmatpush1.msra.mxu0 0.0
      %2873 = vmatprep.subr.mxu0 0.0
      %2874 = vmatpush1.msra.mxu0 0.0
      %2875 = vmatprep.subr.mxu0 0.0
      %2876 = vmatpush1.msra.mxu0 0.0
      %2877 = vmatprep.subr.mxu0 0.0
      %2878 = vmatpush1.msra.mxu0 %v2852
      %2879 = vmatprep.subr.mxu0 0.0
      %2880 = vmatpush1.msra.mxu0 %v2851
      %2881 = vmatprep.subr.mxu0 0.0
      %2882 = vmatpush1.msra.mxu0 %v2850
      %2883 = vmatprep.subr.mxu0 0.0
      %2884 = vmatpush1.msra.mxu0 %v2849
      %2885 = vmatprep.subr.mxu0 0.0
      %2886 = vmatpush2.msra.mxu0 0.0
      %2887 = vmatprep.subr.mxu0 0.0
      %2888 = vmatpush2.msra.mxu0 0.0
      %2889 = vmatprep.subr.mxu0 0.0
      %2890 = vmatpush2.msra.mxu0 0.0
      %2891 = vmatprep.subr.mxu0 0.0
      %2892 = vmatpush2.msra.mxu0 0.0
      %2893 = vmatprep.subr.mxu0 0.0
      %2894 = vmatpush2.msra.mxu0 0.0
      %2895 = vmatprep.subr.mxu0 0.0
      %2896 = vmatpush2.msra.mxu0 0.0
      %2897 = vmatprep.subr.mxu0 0.0
      %2898 = vmatpush2.msra.mxu0 0.0
      %2899 = vmatprep.subr.mxu0 0.0
      %2900 = vmatpush2.msra.mxu0 0.0
      %2901 = vmatprep.subr.mxu0 0.0
      %2902 = vmatpush2.msra.mxu0 0.0
      %2903 = vmatprep.subr.mxu0 0.0
      %2904 = vmatpush2.msra.mxu0 0.0
      %2905 = vmatprep.subr.mxu0 0.0
      %2906 = vmatpush2.msra.mxu0 0.0
      %2907 = vmatprep.subr.mxu0 0.0
      %2908 = vmatpush2.msra.mxu0 0.0
      %2909 = vmatprep.subr.mxu0 0.0
      %2910 = vmatpush2.msra.mxu0 0.0
      %2911 = vmatprep.subr.mxu0 0.0
      %2912 = vmatpush2.msra.mxu0 0.0
      %2913 = vmatprep.subr.mxu0 0.0
      %2914 = vmatpush2.msra.mxu0 0.0
      %2915 = vmatprep.subr.mxu0 0.0
      %2916 = vmatpush2.msra.mxu0 0.0
      %2917 = vmatprep.mubr.f32.mxu0 0.0
      %2918 = vmatmul.mubr.f32.gmra.mxu0 %v1288
      %v2919 = vpop.f32.mrf.mxu0
      %v2920 = vadd.f32 0.0, %v2919
      %v2921 = vpop.f32.mrf.mxu0
      %2922 = vdwg.mxu0
      %v2924 = vsel %vm230, %v2844, 0
      %2926 = vmatprep.subr.mxu0 0.0
      %2927 = vmatpush1.msra.mxu0 0.0
      %2928 = vmatprep.subr.mxu0 0.0
      %2929 = vmatpush1.msra.mxu0 0.0
      %2930 = vmatprep.subr.mxu0 0.0
      %2931 = vmatpush1.msra.mxu0 0.0
      %2932 = vmatprep.subr.mxu0 0.0
      %2933 = vmatpush1.msra.mxu0 0.0
      %2934 = vmatprep.subr.mxu0 0.0
      %2935 = vmatpush1.msra.mxu0 0.0
      %2936 = vmatprep.subr.mxu0 0.0
      %2937 = vmatpush1.msra.mxu0 0.0
      %2938 = vmatprep.subr.mxu0 0.0
      %2939 = vmatpush1.msra.mxu0 0.0
      %2940 = vmatprep.subr.mxu0 0.0
      %2941 = vmatpush1.msra.mxu0 0.0
      %2942 = vmatprep.subr.mxu0 0.0
      %2943 = vmatpush1.msra.mxu0 0.0
      %2944 = vmatprep.subr.mxu0 0.0
      %2945 = vmatpush1.msra.mxu0 0.0
      %2946 = vmatprep.subr.mxu0 0.0
      %2947 = vmatpush1.msra.mxu0 0.0
      %2948 = vmatprep.subr.mxu0 0.0
      %2949 = vmatpush1.msra.mxu0 0.0
      %2950 = vmatprep.subr.mxu0 0.0
      %2951 = vmatpush1.msra.mxu0 %v2848
      %2952 = vmatprep.subr.mxu0 0.0
      %2953 = vmatpush1.msra.mxu0 %v2847
      %2954 = vmatprep.subr.mxu0 0.0
      %2955 = vmatpush1.msra.mxu0 %v2846
      %2956 = vmatprep.subr.mxu0 0.0
      %2957 = vmatpush1.msra.mxu0 %v2845
      %2958 = vmatprep.subr.mxu0 0.0
      %2959 = vmatpush2.msra.mxu0 0.0
      %2960 = vmatprep.subr.mxu0 0.0
      %2961 = vmatpush2.msra.mxu0 0.0
      %2962 = vmatprep.subr.mxu0 0.0
      %2963 = vmatpush2.msra.mxu0 0.0
      %2964 = vmatprep.subr.mxu0 0.0
      %2965 = vmatpush2.msra.mxu0 0.0
      %2966 = vmatprep.subr.mxu0 0.0
      %2967 = vmatpush2.msra.mxu0 0.0
      %2968 = vmatprep.subr.mxu0 0.0
      %2969 = vmatpush2.msra.mxu0 0.0
      %2970 = vmatprep.subr.mxu0 0.0
      %2971 = vmatpush2.msra.mxu0 0.0
      %2972 = vmatprep.subr.mxu0 0.0
      %2973 = vmatpush2.msra.mxu0 0.0
      %2974 = vmatprep.subr.mxu0 0.0
      %2975 = vmatpush2.msra.mxu0 0.0
      %2976 = vmatprep.subr.mxu0 0.0
      %2977 = vmatpush2.msra.mxu0 0.0
      %2978 = vmatprep.subr.mxu0 0.0
      %2979 = vmatpush2.msra.mxu0 0.0
      %2980 = vmatprep.subr.mxu0 0.0
      %2981 = vmatpush2.msra.mxu0 0.0
      %2982 = vmatprep.subr.mxu0 0.0
      %2983 = vmatpush2.msra.mxu0 0.0
      %2984 = vmatprep.subr.mxu0 0.0
      %2985 = vmatpush2.msra.mxu0 0.0
      %2986 = vmatprep.subr.mxu0 0.0
      %2987 = vmatpush2.msra.mxu0 0.0
      %2988 = vmatprep.subr.mxu0 0.0
      %2989 = vmatpush2.msra.mxu0 0.0
      %2990 = vmatprep.mubr.f32.mxu0 0.0
      %2991 = vmatmul.mubr.f32.gmra.mxu0 %v2924
      %v2992 = vpop.f32.mrf.mxu0
      %v2993 = vadd.f32 %v2920, %v2992
      %v2994 = vpop.f32.mrf.mxu0
      %2995 = vdwg.mxu0
      %v2996 = vld [vmem:[#allocation7] sm:$0x1]
      %v2998 = vlaneseq
      %v2999 = vshrl.u32 %v2998, 7
      %v3000 = vsub.s32 0, %v2999
      %v3001 = vrot.slane %v2996, %v3000
      %v3003 = vadd.f32 %v2993, %v3001
      %s3004 = scalar_lea.vmem %s18, %s132
      %vm3005 = vcmask 138240
      %3006 = vst.msk [vmem:[%s3004] sm:$0xff] %vm3005, %v3003
      %v3007 = vlaneseq
      %v3008 = vshrl.u32 %v3007, 7
      %v3009 = vsub.s32 %v757, %v3008
      %v3010 = vrot.slane %v1009, %v3009
      %v3011 = vlaneseq
      %v3012 = vshrl.u32 %v3011, 7
      %v3013 = vsub.s32 %v757, %v3012
      %v3014 = vrot.slane %v1014, %v3013
      %v3015 = vlaneseq
      %v3016 = vshrl.u32 %v3015, 7
      %v3017 = vsub.s32 %v757, %v3016
      %v3018 = vrot.slane %v1019, %v3017
      %v3019 = vlaneseq
      %v3020 = vshrl.u32 %v3019, 7
      %v3021 = vsub.s32 %v757, %v3020
      %v3022 = vrot.slane %v1024, %v3021
      %v3023 = vlaneseq
      %v3024 = vshrl.u32 %v3023, 7
      %v3025 = vsub.s32 %v757, %v3024
      %v3026 = vrot.slane %v1029, %v3025
      %v3027 = vlaneseq
      %v3028 = vshrl.u32 %v3027, 7
      %v3029 = vsub.s32 %v757, %v3028
      %v3030 = vrot.slane %v1034, %v3029
      %v3031 = vlaneseq
      %v3032 = vshrl.u32 %v3031, 7
      %v3033 = vsub.s32 %v757, %v3032
      %v3034 = vrot.slane %v1039, %v3033
      %v3035 = vlaneseq
      %v3036 = vshrl.u32 %v3035, 7
      %v3037 = vsub.s32 %v757, %v3036
      %v3038 = vrot.slane %v1044, %v3037
      %v3039 = vsel %vm790, %v3014, %v3010
      %v3040 = vsel %vm792, %v3018, %v3039
      %v3041 = vsel %vm794, %v3022, %v3040
      %v3042 = vsel %vm796, %v3026, %v3041
      %v3043 = vsel %vm798, %v3030, %v3042
      %v3044 = vsel %vm800, %v3034, %v3043
      %v3045 = vsel %vm802, %v3038, %v3044
      %s3047 = scalar_lea.vmem %s19, %s132
      %3048 = vst.msk [vmem:[%s3047] sm:$0xff] %vm805, %v3045
    $region94: #{forward.2} parent=1 // loop_footer
      %s127 = sadd.s32 1, %s123
    $region95: #{forward.2} parent=1 // loop_footer_branch
      %122 = sbr.rel target = $region91
    $region96: #{forward.2} parent=1 // loop_exit
      _
    // Predicated region
    $region97: #{forward.2} parent=1 // pred_check
      _
    $region98: #{forward.2} parent=1 // pred_check_branch
      %3050 = sbr.rel (0) target = $region100
    $region99: #{forward.2} parent=1 // pred_region
      _
    $region100: #{forward.2} parent=1 // pred_fallthru
      _
    // Predicated region
    $region101: #{forward.2} parent=1 // pred_check
      _
    $region102: #{forward.2} parent=1 // pred_check_branch
      %3052 = sbr.rel (0) target = $region104
    $region103: #{forward.2} parent=1 // pred_region
      _
    $region104: #{forward.2} parent=1 // pred_fallthru
      _
    // Predicated region
    $region105: #{forward.2} parent=1 // pred_check
      _
    $region106: #{forward.2} parent=1 // pred_check_branch
      %3054 = sbr.rel (0) target = $region108
    $region107: #{forward.2} parent=1 // pred_region
      _
    $region108: #{forward.2} parent=1 // pred_fallthru
      _
    // Predicated region
    $region109: #{forward.2} parent=1 // pred_check
      _
    $region110: #{forward.2} parent=1 // pred_check_branch
      %3056 = sbr.rel (0) target = $region112
    $region111: #{forward.2} parent=1 // pred_region
      _
    $region112: #{forward.2} parent=1 // pred_fallthru
      _
    %3057 = vsyncpa [#allocation3], 1
    %3058 = vsyncpa [#allocation5], 1
    %3059 = vsyncpa [#allocation8], 1

</llo_original>
